<compile_context>
chip_gen: v5e
topology: v5e:2x2
jax: 0.10.0
libtpu: 0.0.40
codegen_flags: <defaults>
</compile_context>

<pallas_src>
import functools

import jax
import jax.numpy as jnp
from jax.experimental import pallas as pl
from jax.experimental.pallas import tpu as pltpu


def _round_up(n, m):
    return ((n + m - 1) // m) * m


def _pad_geom(H, W, dil):
    """Flat, sublane-aligned padded-image geometry for the shifted-window conv2."""
    Wp = _round_up(W + 2 * dil, 8)            # aligned padded row stride
    pad_top = _round_up(dil * Wp + dil, 8)    # top halo (flat rows), 8-aligned
    pad_bot = dil * Wp                        # bottom halo (Wp is a multiple of 8)
    total = pad_top + H * Wp + pad_bot        # full padded-buffer length (mult of 8)
    L = (H - 1) * Wp + W                      # flat span covering all valid outputs
    return Wp, pad_top, pad_bot, total, L


def _vmem_limit_bytes():
    """~3/4 of physical VMEM: ~48 MiB on v7x (64 MiB), ~96 MiB on v5e/v6e (128 MiB)."""
    cap = 64 * 1024 * 1024
    try:
        info = pltpu.get_tpu_info()
        c = getattr(info, "vmem_capacity_bytes", None)
        if c:
            cap = int(c)
    except Exception:
        pass
    return int(max(32 * 1024 * 1024, min(cap * 3 // 4, 112 * 1024 * 1024)))


# ------------------------------ Pallas kernel ------------------------------- #

def _bottleneck_kernel(x_ref, w1_ref, b1_ref, w2_ref, b2_ref, w3_ref, b3_ref,
                       o_ref, apad_ref, *, H, W, dil, compute_dtype):
    """Fused Bottleneck forward for one image (stride=1, identity skip).

    x_ref   : (1, H*W, Cin)   input rows (NHWC flattened)
    w1_ref  : (Cin, P)        BN1-folded 1x1 weights
    w2_ref  : (P, 9P)         BN2-folded 3x3 weights, taps concatenated along N
    w3_ref  : (P, 4P)         BN3-folded 1x1 weights
    b*_ref  : (1, C) f32      folded BN biases
    o_ref   : (1, H*W, 4P)    output rows
    apad_ref: (total, P) cd   zero-padded, row-flattened conv1 activation (scratch)
    """
    f32 = jnp.float32
    cd = compute_dtype
    P = w1_ref.shape[1]
    Wp, pad_top, pad_bot, total, L = _pad_geom(H, W, dil)

    # ---- conv1 (1x1) + bn1 + relu ------------------------------------------ #
    c1 = jnp.dot(x_ref[0].astype(cd), w1_ref[...], preferred_element_type=f32)
    c1 = jnp.maximum(c1 + b1_ref[...], 0.0).astype(cd)          # cast once (-> bf16)

    # ---- scatter rows into the padded flat image ---------------------------- #
    # Data of image row h starts at the 8-aligned offset pad_top + h*Wp; only the
    # halo / inter-row gap regions are zeroed (they are never written with data).
    apad_ref[pl.ds(0, pad_top), :] = jnp.zeros((pad_top, P), cd)
    apad_ref[pl.ds(pad_top + H * Wp, pad_bot), :] = jnp.zeros((pad_bot, P), cd)
    gap_zero = jnp.zeros((Wp - W, P), cd)                        # hoisted out of loop
    for h in range(H):
        row_start = pad_top + h * Wp                             # multiple of 8
        apad_ref[pl.ds(row_start, W), :] = c1[h * W:(h + 1) * W, :]
        apad_ref[pl.ds(row_start + W, Wp - W), :] = gap_zero

    # ---- conv2 (3x3, dilation) + bn2 + relu --------------------------------- #
    # One wide-N matmul fills the MXU; tap (kh, kw) of the 3x3 is recovered as a
    # row-shifted slice of column block t = kh*3+kw of Z.  The zero gaps between
    # rows / the zero halos make every shift exact for all valid output pixels.
    Z = jnp.dot(apad_ref[...], w2_ref[...], preferred_element_type=f32)  # (total, 9P)
    acc = None
    for kh in range(3):
        for kw in range(3):
            t = kh * 3 + kw
            off = pad_top + (kh - 1) * dil * Wp + (kw - 1) * dil
            sl = Z[off:off + L, t * P:(t + 1) * P]
            acc = sl if acc is None else acc + sl
    a2 = jnp.maximum(acc + b2_ref[...], 0.0).astype(cd)          # (L, P), padded grid

    # ---- conv3 (1x1) + bn3 + identity residual + relu ------------------------ #
    # conv3 runs on the padded grid (a few discarded gap rows of extra MXU work);
    # only the valid W-wide segment of each row is written to the compact output.
    c3 = jnp.dot(a2, w3_ref[...], preferred_element_type=f32)    # (L, 4P)
    b3 = b3_ref[...]
    for h in range(H):
        res = x_ref[0, pl.ds(h * W, W), :].astype(f32)
        row = c3[h * Wp:h * Wp + W, :] + b3 + res
        o_ref[0, pl.ds(h * W, W), :] = jnp.maximum(row, 0.0).astype(o_ref.dtype)


# ------------------------------ JAX wrappers --------------------------------- #

def fold_bottleneck_params(tp, *, eps=1e-5, compute_dtype=jnp.bfloat16):
    """Fold eval-mode BatchNorm into the conv weights; lay out for the kernel."""
    def fold(g, b, m, v):
        s = g / jnp.sqrt(v + eps)
        return s, b - m * s

    s1, b1 = fold(tp["bn1_g"], tp["bn1_b"], tp["bn1_m"], tp["bn1_v"])
    s2, b2 = fold(tp["bn2_g"], tp["bn2_b"], tp["bn2_m"], tp["bn2_v"])
    s3, b3 = fold(tp["bn3_g"], tp["bn3_b"], tp["bn3_m"], tp["bn3_v"])

    planes = tp["w1_oihw"].shape[0]
    w1 = tp["w1_oihw"][:, :, 0, 0].T * s1[None, :]                       # (Cin, P)
    w2 = jnp.transpose(tp["w2_oihw"], (2, 3, 1, 0)) * s2[None, None, None, :]
    w2 = w2.reshape(9, planes, planes)                                   # (t, in, out)
    w2cat = jnp.transpose(w2, (1, 0, 2)).reshape(planes, 9 * planes)     # (in, 9*out)
    w3 = tp["w3_oihw"][:, :, 0, 0].T * s3[None, :]                       # (P, 4P)

    cd = compute_dtype
    return {
        "w1": w1.astype(cd), "w2": w2cat.astype(cd), "w3": w3.astype(cd),
        "b1": b1.reshape(1, -1).astype(jnp.float32),
        "b2": b2.reshape(1, -1).astype(jnp.float32),
        "b3": b3.reshape(1, -1).astype(jnp.float32),
        "compute_dtype": cd,
    }


def bottleneck_forward_nhwc(x_rows, kparams, *, H, W, stride=1, dilation=1,
                            style="pytorch"):
    """Pallas Bottleneck forward on NHWC rows (N, H*W, C).  Chain these to avoid
    per-block NCHW transposes; pass bf16 activations for bf16 HBM I/O."""
    assert style in ("pytorch", "caffe")
    N, HW, Cin = x_rows.shape
    assert HW == H * W
    planes = kparams["w1"].shape[1]
    cout = kparams["w3"].shape[1]
    # With downsample=None the module is only well-formed when the skip is a true
    # identity: stride 1 and inplanes == planes*expansion.
    assert stride == 1 and Cin == cout, (
        "identity residual requires stride==1 and inplanes == planes*expansion; "
        "the optional downsample nn.Module / stride>1 path is not implemented")

    cd = kparams["compute_dtype"]
    _, _, _, total, _ = _pad_geom(H, W, dilation)

    kernel = functools.partial(_bottleneck_kernel, H=H, W=W, dil=dilation,
                               compute_dtype=cd)

    return pl.pallas_call(
        kernel,
        out_shape=jax.ShapeDtypeStruct((N, HW, cout), x_rows.dtype),
        grid=(N,),
        in_specs=[
            pl.BlockSpec((1, HW, Cin), lambda n: (n, 0, 0)),
            pl.BlockSpec(kparams["w1"].shape, lambda n: (0, 0)),
            pl.BlockSpec(kparams["b1"].shape, lambda n: (0, 0)),
            pl.BlockSpec(kparams["w2"].shape, lambda n: (0, 0)),
            pl.BlockSpec(kparams["b2"].shape, lambda n: (0, 0)),
            pl.BlockSpec(kparams["w3"].shape, lambda n: (0, 0)),
            pl.BlockSpec(kparams["b3"].shape, lambda n: (0, 0)),
        ],
        out_specs=pl.BlockSpec((1, HW, cout), lambda n: (n, 0, 0)),
        scratch_shapes=[pltpu.VMEM((total, planes), cd)],
        compiler_params=pltpu.CompilerParams(
            dimension_semantics=("parallel",),
            vmem_limit_bytes=_vmem_limit_bytes(),
        ),
    )(x_rows, kparams["w1"], kparams["b1"], kparams["w2"], kparams["b2"],
      kparams["w3"], kparams["b3"])


def bottleneck_forward(x_nchw, kparams, *, stride=1, dilation=1, style="pytorch"):
    """PyTorch-interface (NCHW) wrapper around the NHWC kernel."""
    N, Cin, H, W = x_nchw.shape
    x_rows = jnp.transpose(x_nchw, (0, 2, 3, 1)).reshape(N, H * W, Cin)
    out = bottleneck_forward_nhwc(x_rows, kparams, H=H, W=W, stride=stride,
                                  dilation=dilation, style=style)
    return jnp.transpose(out.reshape(N, H, W, -1), (0, 3, 1, 2))


# --------------------------- reference (pure JAX) ---------------------------- #

def _conv_ref(x, w, stride, padding, dilation):
    return jax.lax.conv_general_dilated(
        x, w, window_strides=(stride, stride),
        padding=((padding, padding), (padding, padding)),
        rhs_dilation=(dilation, dilation),
        dimension_numbers=("NCHW", "OIHW", "NCHW"),
        precision=jax.lax.Precision.HIGHEST)


def _bn_ref(x, g, b, m, v, eps=1e-5):
    s = g / jnp.sqrt(v + eps)
    return x * s[None, :, None, None] + (b - m * s)[None, :, None, None]


def bottleneck_ref(x, tp, *, stride=1, dilation=1, style="pytorch"):
    c1s, c2s = (1, stride) if style == "pytorch" else (stride, 1)
    out = _conv_ref(x, tp["w1_oihw"], c1s, 0, 1)
    out = jnp.maximum(_bn_ref(out, tp["bn1_g"], tp["bn1_b"], tp["bn1_m"], tp["bn1_v"]), 0.0)
    out = _conv_ref(out, tp["w2_oihw"], c2s, dilation, dilation)
    out = jnp.maximum(_bn_ref(out, tp["bn2_g"], tp["bn2_b"], tp["bn2_m"], tp["bn2_v"]), 0.0)
    out = _conv_ref(out, tp["w3_oihw"], 1, 0, 1)
    out = _bn_ref(out, tp["bn3_g"], tp["bn3_b"], tp["bn3_m"], tp["bn3_v"])
    return jnp.maximum(out + x, 0.0)                 # downsample is None


# ---------------------------------- main ------------------------------------- #

def make_params(key, inplanes, planes):
    expansion = 4
    ks = jax.random.split(key, 15)

    def conv_w(k, cout, cin, kh, kw):
        fan_in = cin * kh * kw
        return (jax.random.normal(k, (cout, cin, kh, kw), jnp.float32)
                * (2.0 / fan_in) ** 0.5)

    def bn(kg, kb, km, kv, c):
        return (1.0 + 0.1 * jax.random.normal(kg, (c,), jnp.float32),   # gamma
                0.1 * jax.random.normal(kb, (c,), jnp.float32),          # beta
                0.1 * jax.random.normal(km, (c,), jnp.float32),          # running_mean
                0.5 + jax.random.uniform(kv, (c,), jnp.float32))         # running_var

    bn1 = bn(ks[3], ks[4], ks[5], ks[6], planes)
    bn2 = bn(ks[7], ks[8], ks[9], ks[10], planes)
    bn3 = bn(ks[11], ks[12], ks[13], ks[14], planes * expansion)

    return {
        "w1_oihw": conv_w(ks[0], planes, inplanes, 1, 1),
        "w2_oihw": conv_w(ks[1], planes, planes, 3, 3),
        "w3_oihw": conv_w(ks[2], planes * expansion, planes, 1, 1),
        "bn1_g": bn1[0], "bn1_b": bn1[1], "bn1_m": bn1[2], "bn1_v": bn1[3],
        "bn2_g": bn2[0], "bn2_b": bn2[1], "bn2_m": bn2[2], "bn2_v": bn2[3],
        "bn3_g": bn3[0], "bn3_b": bn3[1], "bn3_m": bn3[2], "bn3_v": bn3[3],
    }


if __name__ == "__main__":
    key = jax.random.PRNGKey(0)
    k_x, k_p = jax.random.split(key)

    # inplanes == planes * expansion so the identity skip (downsample=None) is valid.
    planes, inplanes = 4, 16
    N, H, W = 2, 16, 16
    x = jax.random.normal(k_x, (N, inplanes, H, W), jnp.float32)   # NCHW, like PyTorch
    tparams = make_params(k_p, inplanes, planes)

    # 1) f32 operands, dilation 1 and 2: structural check of the fused-kernel logic.
    #    (Tolerance leaves room for TPU matmul precision; indexing bugs give O(1) errors.)
    kp32 = fold_bottleneck_params(tparams, compute_dtype=jnp.float32)
    for dil in (1, 2):
        ref = jax.block_until_ready(bottleneck_ref(x, tparams, stride=1, dilation=dil))
        out32 = jax.block_until_ready(bottleneck_forward(x, kp32, stride=1, dilation=dil))
        assert out32.shape == (N, planes * 4, H, W), out32.shape
        err = float(jnp.max(jnp.abs(out32 - ref)))
        assert err <= 3e-2, (dil, err)

    # 2) bf16 MXU operands (the performance configuration), f32 accumulate.
    ref = jax.block_until_ready(bottleneck_ref(x, tparams, stride=1, dilation=1))
    kp16 = fold_bottleneck_params(tparams, compute_dtype=jnp.bfloat16)
    out16 = jax.block_until_ready(bottleneck_forward(x, kp16, stride=1, dilation=1))
    assert out16.shape == (N, planes * 4, H, W), out16.shape
    max_err = float(jnp.max(jnp.abs(out16 - ref)))
    assert max_err <= 0.05 * float(jnp.max(jnp.abs(ref))) + 1e-3, max_err

    print("KERNEL_OK")
</pallas_src>

<mosaic_0001>
module attributes {stable_mosaic.version = 11 : i64} {
  func.func @_bottleneck_kernel(%arg0: i32, %arg1: memref<1x256x16xf32, #tpu.memory_space<vmem>>, %arg2: memref<16x4xf32, #tpu.memory_space<vmem>>, %arg3: memref<1x4xf32, #tpu.memory_space<vmem>>, %arg4: memref<4x36xf32, #tpu.memory_space<vmem>>, %arg5: memref<1x4xf32, #tpu.memory_space<vmem>>, %arg6: memref<4x16xf32, #tpu.memory_space<vmem>>, %arg7: memref<1x16xf32, #tpu.memory_space<vmem>>, %arg8: memref<1x256x16xf32, #tpu.memory_space<vmem>>, %arg9: memref<440x4xf32, #tpu.memory_space<vmem>>) attributes {dimension_semantics = [#tpu.dimension_semantics<parallel>], iteration_bounds = array<i64: 2>, scalar_prefetch = 0 : i64, scratch_operands = 1 : i64, tpu.core_type = #tpu.core_type<tc>, window_params = [{transform_indices = @transform_0, window_bounds = array<i64: 1, 256, 16>}, {pipeline_mode = #tpu.pipeline_mode<synchronous>, transform_indices = @transform_1, window_bounds = array<i64: 16, 4>}, {pipeline_mode = #tpu.pipeline_mode<synchronous>, transform_indices = @transform_2, window_bounds = array<i64: 1, 4>}, {pipeline_mode = #tpu.pipeline_mode<synchronous>, transform_indices = @transform_3, window_bounds = array<i64: 4, 36>}, {pipeline_mode = #tpu.pipeline_mode<synchronous>, transform_indices = @transform_4, window_bounds = array<i64: 1, 4>}, {pipeline_mode = #tpu.pipeline_mode<synchronous>, transform_indices = @transform_5, window_bounds = array<i64: 4, 16>}, {pipeline_mode = #tpu.pipeline_mode<synchronous>, transform_indices = @transform_6, window_bounds = array<i64: 1, 16>}, {transform_indices = @transform_7, window_bounds = array<i64: 1, 256, 16>}]} {
    %c0 = arith.constant 0 : index
    %c0_0 = arith.constant 0 : index
    %c0_1 = arith.constant 0 : index
    %0 = vector.load %arg1[%c0, %c0_0, %c0_1] : memref<1x256x16xf32, #tpu.memory_space<vmem>>, vector<1x256x16xf32>
    %1 = vector.shape_cast %0 : vector<1x256x16xf32> to vector<256x16xf32>
    %c0_2 = arith.constant 0 : index
    %c0_3 = arith.constant 0 : index
    %2 = vector.load %arg2[%c0_2, %c0_3] : memref<16x4xf32, #tpu.memory_space<vmem>>, vector<16x4xf32>
    %cst = arith.constant dense<0.000000e+00> : vector<256x4xf32>
    %3 = tpu.matmul %1, %2, %cst {dimension_numbers = #tpu.dot_dimension_numbers<[1], [0], [0], [1], [0, 0, 1, 1], [], []>} : vector<256x16xf32>, vector<16x4xf32>, vector<256x4xf32> -> vector<256x4xf32>
    %c0_4 = arith.constant 0 : index
    %c0_5 = arith.constant 0 : index
    %4 = vector.load %arg3[%c0_4, %c0_5] : memref<1x4xf32, #tpu.memory_space<vmem>>, vector<1x4xf32>
    %5 = vector.broadcast %4 : vector<1x4xf32> to vector<256x4xf32>
    %6 = arith.addf %3, %5 : vector<256x4xf32>
    %cst_6 = arith.constant 0.000000e+00 : f32
    %7 = vector.broadcast %cst_6 : f32 to vector<256x4xf32>
    %8 = arith.maximumf %6, %7 : vector<256x4xf32>
    %cst_7 = arith.constant 0.000000e+00 : f32
    %9 = vector.broadcast %cst_7 : f32 to vector<32x4xf32>
    %c0_8 = arith.constant 0 : index
    %c0_9 = arith.constant 0 : index
    %10 = vector.load %arg9[%c0_8, %c0_9] : memref<440x4xf32, #tpu.memory_space<vmem>>, vector<32x4xf32>
    tpu.vector_store %arg9[%c0_8, %c0_9], %9 {strides = array<i32>} : memref<440x4xf32, #tpu.memory_space<vmem>>, vector<32x4xf32>,
    %cst_10 = arith.constant 0.000000e+00 : f32
    %11 = vector.broadcast %cst_10 : f32 to vector<24x4xf32>
    %c416 = arith.constant 416 : index
    %c0_11 = arith.constant 0 : index
    %12 = vector.load %arg9[%c416, %c0_11] : memref<440x4xf32, #tpu.memory_space<vmem>>, vector<24x4xf32>
    tpu.vector_store %arg9[%c416, %c0_11], %11 {strides = array<i32>} : memref<440x4xf32, #tpu.memory_space<vmem>>, vector<24x4xf32>,
    %cst_12 = arith.constant 0.000000e+00 : f32
    %13 = vector.broadcast %cst_12 : f32 to vector<8x4xf32>
    %14 = vector.extract_strided_slice %8 {offsets = [0, 0], sizes = [16, 4], strides = [1, 1]} : vector<256x4xf32> to vector<16x4xf32>
    %c32 = arith.constant 32 : index
    %c0_13 = arith.constant 0 : index
    %15 = vector.load %arg9[%c32, %c0_13] : memref<440x4xf32, #tpu.memory_space<vmem>>, vector<16x4xf32>
    tpu.vector_store %arg9[%c32, %c0_13], %14 {strides = array<i32>} : memref<440x4xf32, #tpu.memory_space<vmem>>, vector<16x4xf32>,
    %c48 = arith.constant 48 : index
    %c0_14 = arith.constant 0 : index
    %16 = vector.load %arg9[%c48, %c0_14] : memref<440x4xf32, #tpu.memory_space<vmem>>, vector<8x4xf32>
    tpu.vector_store %arg9[%c48, %c0_14], %13 {strides = array<i32>} : memref<440x4xf32, #tpu.memory_space<vmem>>, vector<8x4xf32>,
    %17 = vector.extract_strided_slice %8 {offsets = [16, 0], sizes = [16, 4], strides = [1, 1]} : vector<256x4xf32> to vector<16x4xf32>
    %c56 = arith.constant 56 : index
    %c0_15 = arith.constant 0 : index
    %18 = vector.load %arg9[%c56, %c0_15] : memref<440x4xf32, #tpu.memory_space<vmem>>, vector<16x4xf32>
    tpu.vector_store %arg9[%c56, %c0_15], %17 {strides = array<i32>} : memref<440x4xf32, #tpu.memory_space<vmem>>, vector<16x4xf32>,
    %c72 = arith.constant 72 : index
    %c0_16 = arith.constant 0 : index
    %19 = vector.load %arg9[%c72, %c0_16] : memref<440x4xf32, #tpu.memory_space<vmem>>, vector<8x4xf32>
    tpu.vector_store %arg9[%c72, %c0_16], %13 {strides = array<i32>} : memref<440x4xf32, #tpu.memory_space<vmem>>, vector<8x4xf32>,
    %20 = vector.extract_strided_slice %8 {offsets = [32, 0], sizes = [16, 4], strides = [1, 1]} : vector<256x4xf32> to vector<16x4xf32>
    %c80 = arith.constant 80 : index
    %c0_17 = arith.constant 0 : index
    %21 = vector.load %arg9[%c80, %c0_17] : memref<440x4xf32, #tpu.memory_space<vmem>>, vector<16x4xf32>
    tpu.vector_store %arg9[%c80, %c0_17], %20 {strides = array<i32>} : memref<440x4xf32, #tpu.memory_space<vmem>>, vector<16x4xf32>,
    %c96 = arith.constant 96 : index
    %c0_18 = arith.constant 0 : index
    %22 = vector.load %arg9[%c96, %c0_18] : memref<440x4xf32, #tpu.memory_space<vmem>>, vector<8x4xf32>
    tpu.vector_store %arg9[%c96, %c0_18], %13 {strides = array<i32>} : memref<440x4xf32, #tpu.memory_space<vmem>>, vector<8x4xf32>,
    %23 = vector.extract_strided_slice %8 {offsets = [48, 0], sizes = [16, 4], strides = [1, 1]} : vector<256x4xf32> to vector<16x4xf32>
    %c104 = arith.constant 104 : index
    %c0_19 = arith.constant 0 : index
    %24 = vector.load %arg9[%c104, %c0_19] : memref<440x4xf32, #tpu.memory_space<vmem>>, vector<16x4xf32>
    tpu.vector_store %arg9[%c104, %c0_19], %23 {strides = array<i32>} : memref<440x4xf32, #tpu.memory_space<vmem>>, vector<16x4xf32>,
    %c120 = arith.constant 120 : index
    %c0_20 = arith.constant 0 : index
    %25 = vector.load %arg9[%c120, %c0_20] : memref<440x4xf32, #tpu.memory_space<vmem>>, vector<8x4xf32>
    tpu.vector_store %arg9[%c120, %c0_20], %13 {strides = array<i32>} : memref<440x4xf32, #tpu.memory_space<vmem>>, vector<8x4xf32>,
    %26 = vector.extract_strided_slice %8 {offsets = [64, 0], sizes = [16, 4], strides = [1, 1]} : vector<256x4xf32> to vector<16x4xf32>
    %c128 = arith.constant 128 : index
    %c0_21 = arith.constant 0 : index
    %27 = vector.load %arg9[%c128, %c0_21] : memref<440x4xf32, #tpu.memory_space<vmem>>, vector<16x4xf32>
    tpu.vector_store %arg9[%c128, %c0_21], %26 {strides = array<i32>} : memref<440x4xf32, #tpu.memory_space<vmem>>, vector<16x4xf32>,
    %c144 = arith.constant 144 : index
    %c0_22 = arith.constant 0 : index
    %28 = vector.load %arg9[%c144, %c0_22] : memref<440x4xf32, #tpu.memory_space<vmem>>, vector<8x4xf32>
    tpu.vector_store %arg9[%c144, %c0_22], %13 {strides = array<i32>} : memref<440x4xf32, #tpu.memory_space<vmem>>, vector<8x4xf32>,
    %29 = vector.extract_strided_slice %8 {offsets = [80, 0], sizes = [16, 4], strides = [1, 1]} : vector<256x4xf32> to vector<16x4xf32>
    %c152 = arith.constant 152 : index
    %c0_23 = arith.constant 0 : index
    %30 = vector.load %arg9[%c152, %c0_23] : memref<440x4xf32, #tpu.memory_space<vmem>>, vector<16x4xf32>
    tpu.vector_store %arg9[%c152, %c0_23], %29 {strides = array<i32>} : memref<440x4xf32, #tpu.memory_space<vmem>>, vector<16x4xf32>,
    %c168 = arith.constant 168 : index
    %c0_24 = arith.constant 0 : index
    %31 = vector.load %arg9[%c168, %c0_24] : memref<440x4xf32, #tpu.memory_space<vmem>>, vector<8x4xf32>
    tpu.vector_store %arg9[%c168, %c0_24], %13 {strides = array<i32>} : memref<440x4xf32, #tpu.memory_space<vmem>>, vector<8x4xf32>,
    %32 = vector.extract_strided_slice %8 {offsets = [96, 0], sizes = [16, 4], strides = [1, 1]} : vector<256x4xf32> to vector<16x4xf32>
    %c176 = arith.constant 176 : index
    %c0_25 = arith.constant 0 : index
    %33 = vector.load %arg9[%c176, %c0_25] : memref<440x4xf32, #tpu.memory_space<vmem>>, vector<16x4xf32>
    tpu.vector_store %arg9[%c176, %c0_25], %32 {strides = array<i32>} : memref<440x4xf32, #tpu.memory_space<vmem>>, vector<16x4xf32>,
    %c192 = arith.constant 192 : index
    %c0_26 = arith.constant 0 : index
    %34 = vector.load %arg9[%c192, %c0_26] : memref<440x4xf32, #tpu.memory_space<vmem>>, vector<8x4xf32>
    tpu.vector_store %arg9[%c192, %c0_26], %13 {strides = array<i32>} : memref<440x4xf32, #tpu.memory_space<vmem>>, vector<8x4xf32>,
    %35 = vector.extract_strided_slice %8 {offsets = [112, 0], sizes = [16, 4], strides = [1, 1]} : vector<256x4xf32> to vector<16x4xf32>
    %c200 = arith.constant 200 : index
    %c0_27 = arith.constant 0 : index
    %36 = vector.load %arg9[%c200, %c0_27] : memref<440x4xf32, #tpu.memory_space<vmem>>, vector<16x4xf32>
    tpu.vector_store %arg9[%c200, %c0_27], %35 {strides = array<i32>} : memref<440x4xf32, #tpu.memory_space<vmem>>, vector<16x4xf32>,
    %c216 = arith.constant 216 : index
    %c0_28 = arith.constant 0 : index
    %37 = vector.load %arg9[%c216, %c0_28] : memref<440x4xf32, #tpu.memory_space<vmem>>, vector<8x4xf32>
    tpu.vector_store %arg9[%c216, %c0_28], %13 {strides = array<i32>} : memref<440x4xf32, #tpu.memory_space<vmem>>, vector<8x4xf32>,
    %38 = vector.extract_strided_slice %8 {offsets = [128, 0], sizes = [16, 4], strides = [1, 1]} : vector<256x4xf32> to vector<16x4xf32>
    %c224 = arith.constant 224 : index
    %c0_29 = arith.constant 0 : index
    %39 = vector.load %arg9[%c224, %c0_29] : memref<440x4xf32, #tpu.memory_space<vmem>>, vector<16x4xf32>
    tpu.vector_store %arg9[%c224, %c0_29], %38 {strides = array<i32>} : memref<440x4xf32, #tpu.memory_space<vmem>>, vector<16x4xf32>,
    %c240 = arith.constant 240 : index
    %c0_30 = arith.constant 0 : index
    %40 = vector.load %arg9[%c240, %c0_30] : memref<440x4xf32, #tpu.memory_space<vmem>>, vector<8x4xf32>
    tpu.vector_store %arg9[%c240, %c0_30], %13 {strides = array<i32>} : memref<440x4xf32, #tpu.memory_space<vmem>>, vector<8x4xf32>,
    %41 = vector.extract_strided_slice %8 {offsets = [144, 0], sizes = [16, 4], strides = [1, 1]} : vector<256x4xf32> to vector<16x4xf32>
    %c248 = arith.constant 248 : index
    %c0_31 = arith.constant 0 : index
    %42 = vector.load %arg9[%c248, %c0_31] : memref<440x4xf32, #tpu.memory_space<vmem>>, vector<16x4xf32>
    tpu.vector_store %arg9[%c248, %c0_31], %41 {strides = array<i32>} : memref<440x4xf32, #tpu.memory_space<vmem>>, vector<16x4xf32>,
    %c264 = arith.constant 264 : index
    %c0_32 = arith.constant 0 : index
    %43 = vector.load %arg9[%c264, %c0_32] : memref<440x4xf32, #tpu.memory_space<vmem>>, vector<8x4xf32>
    tpu.vector_store %arg9[%c264, %c0_32], %13 {strides = array<i32>} : memref<440x4xf32, #tpu.memory_space<vmem>>, vector<8x4xf32>,
    %44 = vector.extract_strided_slice %8 {offsets = [160, 0], sizes = [16, 4], strides = [1, 1]} : vector<256x4xf32> to vector<16x4xf32>
    %c272 = arith.constant 272 : index
    %c0_33 = arith.constant 0 : index
    %45 = vector.load %arg9[%c272, %c0_33] : memref<440x4xf32, #tpu.memory_space<vmem>>, vector<16x4xf32>
    tpu.vector_store %arg9[%c272, %c0_33], %44 {strides = array<i32>} : memref<440x4xf32, #tpu.memory_space<vmem>>, vector<16x4xf32>,
    %c288 = arith.constant 288 : index
    %c0_34 = arith.constant 0 : index
    %46 = vector.load %arg9[%c288, %c0_34] : memref<440x4xf32, #tpu.memory_space<vmem>>, vector<8x4xf32>
    tpu.vector_store %arg9[%c288, %c0_34], %13 {strides = array<i32>} : memref<440x4xf32, #tpu.memory_space<vmem>>, vector<8x4xf32>,
    %47 = vector.extract_strided_slice %8 {offsets = [176, 0], sizes = [16, 4], strides = [1, 1]} : vector<256x4xf32> to vector<16x4xf32>
    %c296 = arith.constant 296 : index
    %c0_35 = arith.constant 0 : index
    %48 = vector.load %arg9[%c296, %c0_35] : memref<440x4xf32, #tpu.memory_space<vmem>>, vector<16x4xf32>
    tpu.vector_store %arg9[%c296, %c0_35], %47 {strides = array<i32>} : memref<440x4xf32, #tpu.memory_space<vmem>>, vector<16x4xf32>,
    %c312 = arith.constant 312 : index
    %c0_36 = arith.constant 0 : index
    %49 = vector.load %arg9[%c312, %c0_36] : memref<440x4xf32, #tpu.memory_space<vmem>>, vector<8x4xf32>
    tpu.vector_store %arg9[%c312, %c0_36], %13 {strides = array<i32>} : memref<440x4xf32, #tpu.memory_space<vmem>>, vector<8x4xf32>,
    %50 = vector.extract_strided_slice %8 {offsets = [192, 0], sizes = [16, 4], strides = [1, 1]} : vector<256x4xf32> to vector<16x4xf32>
    %c320 = arith.constant 320 : index
    %c0_37 = arith.constant 0 : index
    %51 = vector.load %arg9[%c320, %c0_37] : memref<440x4xf32, #tpu.memory_space<vmem>>, vector<16x4xf32>
    tpu.vector_store %arg9[%c320, %c0_37], %50 {strides = array<i32>} : memref<440x4xf32, #tpu.memory_space<vmem>>, vector<16x4xf32>,
    %c336 = arith.constant 336 : index
    %c0_38 = arith.constant 0 : index
    %52 = vector.load %arg9[%c336, %c0_38] : memref<440x4xf32, #tpu.memory_space<vmem>>, vector<8x4xf32>
    tpu.vector_store %arg9[%c336, %c0_38], %13 {strides = array<i32>} : memref<440x4xf32, #tpu.memory_space<vmem>>, vector<8x4xf32>,
    %53 = vector.extract_strided_slice %8 {offsets = [208, 0], sizes = [16, 4], strides = [1, 1]} : vector<256x4xf32> to vector<16x4xf32>
    %c344 = arith.constant 344 : index
    %c0_39 = arith.constant 0 : index
    %54 = vector.load %arg9[%c344, %c0_39] : memref<440x4xf32, #tpu.memory_space<vmem>>, vector<16x4xf32>
    tpu.vector_store %arg9[%c344, %c0_39], %53 {strides = array<i32>} : memref<440x4xf32, #tpu.memory_space<vmem>>, vector<16x4xf32>,
    %c360 = arith.constant 360 : index
    %c0_40 = arith.constant 0 : index
    %55 = vector.load %arg9[%c360, %c0_40] : memref<440x4xf32, #tpu.memory_space<vmem>>, vector<8x4xf32>
    tpu.vector_store %arg9[%c360, %c0_40], %13 {strides = array<i32>} : memref<440x4xf32, #tpu.memory_space<vmem>>, vector<8x4xf32>,
    %56 = vector.extract_strided_slice %8 {offsets = [224, 0], sizes = [16, 4], strides = [1, 1]} : vector<256x4xf32> to vector<16x4xf32>
    %c368 = arith.constant 368 : index
    %c0_41 = arith.constant 0 : index
    %57 = vector.load %arg9[%c368, %c0_41] : memref<440x4xf32, #tpu.memory_space<vmem>>, vector<16x4xf32>
    tpu.vector_store %arg9[%c368, %c0_41], %56 {strides = array<i32>} : memref<440x4xf32, #tpu.memory_space<vmem>>, vector<16x4xf32>,
    %c384 = arith.constant 384 : index
    %c0_42 = arith.constant 0 : index
    %58 = vector.load %arg9[%c384, %c0_42] : memref<440x4xf32, #tpu.memory_space<vmem>>, vector<8x4xf32>
    tpu.vector_store %arg9[%c384, %c0_42], %13 {strides = array<i32>} : memref<440x4xf32, #tpu.memory_space<vmem>>, vector<8x4xf32>,
    %59 = vector.extract_strided_slice %8 {offsets = [240, 0], sizes = [16, 4], strides = [1, 1]} : vector<256x4xf32> to vector<16x4xf32>
    %c392 = arith.constant 392 : index
    %c0_43 = arith.constant 0 : index
    %60 = vector.load %arg9[%c392, %c0_43] : memref<440x4xf32, #tpu.memory_space<vmem>>, vector<16x4xf32>
    tpu.vector_store %arg9[%c392, %c0_43], %59 {strides = array<i32>} : memref<440x4xf32, #tpu.memory_space<vmem>>, vector<16x4xf32>,
    %c408 = arith.constant 408 : index
    %c0_44 = arith.constant 0 : index
    %61 = vector.load %arg9[%c408, %c0_44] : memref<440x4xf32, #tpu.memory_space<vmem>>, vector<8x4xf32>
    tpu.vector_store %arg9[%c408, %c0_44], %13 {strides = array<i32>} : memref<440x4xf32, #tpu.memory_space<vmem>>, vector<8x4xf32>,
    %c0_45 = arith.constant 0 : index
    %c0_46 = arith.constant 0 : index
    %62 = vector.load %arg9[%c0_45, %c0_46] : memref<440x4xf32, #tpu.memory_space<vmem>>, vector<440x4xf32>
    %c0_47 = arith.constant 0 : index
    %c0_48 = arith.constant 0 : index
    %63 = vector.load %arg4[%c0_47, %c0_48] : memref<4x36xf32, #tpu.memory_space<vmem>>, vector<4x36xf32>
    %cst_49 = arith.constant dense<0.000000e+00> : vector<440x36xf32>
    %64 = tpu.matmul %62, %63, %cst_49 {dimension_numbers = #tpu.dot_dimension_numbers<[1], [0], [0], [1], [0, 0, 1, 1], [], []>} : vector<440x4xf32>, vector<4x36xf32>, vector<440x36xf32> -> vector<440x36xf32>
    %65 = vector.extract_strided_slice %64 {offsets = [7, 0], sizes = [376, 4], strides = [1, 1]} : vector<440x36xf32> to vector<376x4xf32>
    %66 = vector.extract_strided_slice %64 {offsets = [8, 4], sizes = [376, 4], strides = [1, 1]} : vector<440x36xf32> to vector<376x4xf32>
    %67 = arith.addf %65, %66 : vector<376x4xf32>
    %68 = vector.extract_strided_slice %64 {offsets = [9, 8], sizes = [376, 4], strides = [1, 1]} : vector<440x36xf32> to vector<376x4xf32>
    %69 = arith.addf %67, %68 : vector<376x4xf32>
    %70 = vector.extract_strided_slice %64 {offsets = [31, 12], sizes = [376, 4], strides = [1, 1]} : vector<440x36xf32> to vector<376x4xf32>
    %71 = arith.addf %69, %70 : vector<376x4xf32>
    %72 = vector.extract_strided_slice %64 {offsets = [32, 16], sizes = [376, 4], strides = [1, 1]} : vector<440x36xf32> to vector<376x4xf32>
    %73 = arith.addf %71, %72 : vector<376x4xf32>
    %74 = vector.extract_strided_slice %64 {offsets = [33, 20], sizes = [376, 4], strides = [1, 1]} : vector<440x36xf32> to vector<376x4xf32>
    %75 = arith.addf %73, %74 : vector<376x4xf32>
    %76 = vector.extract_strided_slice %64 {offsets = [55, 24], sizes = [376, 4], strides = [1, 1]} : vector<440x36xf32> to vector<376x4xf32>
    %77 = arith.addf %75, %76 : vector<376x4xf32>
    %78 = vector.extract_strided_slice %64 {offsets = [56, 28], sizes = [376, 4], strides = [1, 1]} : vector<440x36xf32> to vector<376x4xf32>
    %79 = arith.addf %77, %78 : vector<376x4xf32>
    %80 = vector.extract_strided_slice %64 {offsets = [57, 32], sizes = [376, 4], strides = [1, 1]} : vector<440x36xf32> to vector<376x4xf32>
    %81 = arith.addf %79, %80 : vector<376x4xf32>
    %c0_50 = arith.constant 0 : index
    %c0_51 = arith.constant 0 : index
    %82 = vector.load %arg5[%c0_50, %c0_51] : memref<1x4xf32, #tpu.memory_space<vmem>>, vector<1x4xf32>
    %83 = vector.broadcast %82 : vector<1x4xf32> to vector<376x4xf32>
    %84 = arith.addf %81, %83 : vector<376x4xf32>
    %cst_52 = arith.constant 0.000000e+00 : f32
    %85 = vector.broadcast %cst_52 : f32 to vector<376x4xf32>
    %86 = arith.maximumf %84, %85 : vector<376x4xf32>
    %c0_53 = arith.constant 0 : index
    %c0_54 = arith.constant 0 : index
    %87 = vector.load %arg6[%c0_53, %c0_54] : memref<4x16xf32, #tpu.memory_space<vmem>>, vector<4x16xf32>
    %cst_55 = arith.constant dense<0.000000e+00> : vector<376x16xf32>
    %88 = tpu.matmul %86, %87, %cst_55 {dimension_numbers = #tpu.dot_dimension_numbers<[1], [0], [0], [1], [0, 0, 1, 1], [], []>} : vector<376x4xf32>, vector<4x16xf32>, vector<376x16xf32> -> vector<376x16xf32>
    %c0_56 = arith.constant 0 : index
    %c0_57 = arith.constant 0 : index
    %89 = vector.load %arg7[%c0_56, %c0_57] : memref<1x16xf32, #tpu.memory_space<vmem>>, vector<1x16xf32>
    %c0_58 = arith.constant 0 : index
    %c0_59 = arith.constant 0 : index
    %c0_60 = arith.constant 0 : index
    %90 = vector.load %arg1[%c0_58, %c0_59, %c0_60] : memref<1x256x16xf32, #tpu.memory_space<vmem>>, vector<1x16x16xf32>
    %91 = vector.shape_cast %90 : vector<1x16x16xf32> to vector<16x16xf32>
    %92 = vector.extract_strided_slice %88 {offsets = [0, 0], sizes = [16, 16], strides = [1, 1]} : vector<376x16xf32> to vector<16x16xf32>
    %93 = vector.broadcast %89 : vector<1x16xf32> to vector<16x16xf32>
    %94 = arith.addf %92, %93 : vector<16x16xf32>
    %95 = arith.addf %94, %91 : vector<16x16xf32>
    %cst_61 = arith.constant 0.000000e+00 : f32
    %96 = vector.broadcast %cst_61 : f32 to vector<16x16xf32>
    %97 = arith.maximumf %95, %96 : vector<16x16xf32>
    %c0_62 = arith.constant 0 : index
    %c0_63 = arith.constant 0 : index
    %c0_64 = arith.constant 0 : index
    %98 = vector.load %arg8[%c0_62, %c0_63, %c0_64] : memref<1x256x16xf32, #tpu.memory_space<vmem>>, vector<1x16x16xf32>
    %99 = vector.shape_cast %98 : vector<1x16x16xf32> to vector<16x16xf32>
    %100 = vector.shape_cast %97 : vector<16x16xf32> to vector<1x16x16xf32>
    tpu.vector_store %arg8[%c0_62, %c0_63, %c0_64], %100 {strides = array<i32>} : memref<1x256x16xf32, #tpu.memory_space<vmem>>, vector<1x16x16xf32>,
    %c0_65 = arith.constant 0 : index
    %c16 = arith.constant 16 : index
    %c0_66 = arith.constant 0 : index
    %101 = vector.load %arg1[%c0_65, %c16, %c0_66] : memref<1x256x16xf32, #tpu.memory_space<vmem>>, vector<1x16x16xf32>
    %102 = vector.shape_cast %101 : vector<1x16x16xf32> to vector<16x16xf32>
    %103 = vector.extract_strided_slice %88 {offsets = [24, 0], sizes = [16, 16], strides = [1, 1]} : vector<376x16xf32> to vector<16x16xf32>
    %104 = vector.broadcast %89 : vector<1x16xf32> to vector<16x16xf32>
    %105 = arith.addf %103, %104 : vector<16x16xf32>
    %106 = arith.addf %105, %102 : vector<16x16xf32>
    %cst_67 = arith.constant 0.000000e+00 : f32
    %107 = vector.broadcast %cst_67 : f32 to vector<16x16xf32>
    %108 = arith.maximumf %106, %107 : vector<16x16xf32>
    %c0_68 = arith.constant 0 : index
    %c16_69 = arith.constant 16 : index
    %c0_70 = arith.constant 0 : index
    %109 = vector.load %arg8[%c0_68, %c16_69, %c0_70] : memref<1x256x16xf32, #tpu.memory_space<vmem>>, vector<1x16x16xf32>
    %110 = vector.shape_cast %109 : vector<1x16x16xf32> to vector<16x16xf32>
    %111 = vector.shape_cast %108 : vector<16x16xf32> to vector<1x16x16xf32>
    tpu.vector_store %arg8[%c0_68, %c16_69, %c0_70], %111 {strides = array<i32>} : memref<1x256x16xf32, #tpu.memory_space<vmem>>, vector<1x16x16xf32>,
    %c0_71 = arith.constant 0 : index
    %c32_72 = arith.constant 32 : index
    %c0_73 = arith.constant 0 : index
    %112 = vector.load %arg1[%c0_71, %c32_72, %c0_73] : memref<1x256x16xf32, #tpu.memory_space<vmem>>, vector<1x16x16xf32>
    %113 = vector.shape_cast %112 : vector<1x16x16xf32> to vector<16x16xf32>
    %114 = vector.extract_strided_slice %88 {offsets = [48, 0], sizes = [16, 16], strides = [1, 1]} : vector<376x16xf32> to vector<16x16xf32>
    %115 = vector.broadcast %89 : vector<1x16xf32> to vector<16x16xf32>
    %116 = arith.addf %114, %115 : vector<16x16xf32>
    %117 = arith.addf %116, %113 : vector<16x16xf32>
    %cst_74 = arith.constant 0.000000e+00 : f32
    %118 = vector.broadcast %cst_74 : f32 to vector<16x16xf32>
    %119 = arith.maximumf %117, %118 : vector<16x16xf32>
    %c0_75 = arith.constant 0 : index
    %c32_76 = arith.constant 32 : index
    %c0_77 = arith.constant 0 : index
    %120 = vector.load %arg8[%c0_75, %c32_76, %c0_77] : memref<1x256x16xf32, #tpu.memory_space<vmem>>, vector<1x16x16xf32>
    %121 = vector.shape_cast %120 : vector<1x16x16xf32> to vector<16x16xf32>
    %122 = vector.shape_cast %119 : vector<16x16xf32> to vector<1x16x16xf32>
    tpu.vector_store %arg8[%c0_75, %c32_76, %c0_77], %122 {strides = array<i32>} : memref<1x256x16xf32, #tpu.memory_space<vmem>>, vector<1x16x16xf32>,
    %c0_78 = arith.constant 0 : index
    %c48_79 = arith.constant 48 : index
    %c0_80 = arith.constant 0 : index
    %123 = vector.load %arg1[%c0_78, %c48_79, %c0_80] : memref<1x256x16xf32, #tpu.memory_space<vmem>>, vector<1x16x16xf32>
    %124 = vector.shape_cast %123 : vector<1x16x16xf32> to vector<16x16xf32>
    %125 = vector.extract_strided_slice %88 {offsets = [72, 0], sizes = [16, 16], strides = [1, 1]} : vector<376x16xf32> to vector<16x16xf32>
    %126 = vector.broadcast %89 : vector<1x16xf32> to vector<16x16xf32>
    %127 = arith.addf %125, %126 : vector<16x16xf32>
    %128 = arith.addf %127, %124 : vector<16x16xf32>
    %cst_81 = arith.constant 0.000000e+00 : f32
    %129 = vector.broadcast %cst_81 : f32 to vector<16x16xf32>
    %130 = arith.maximumf %128, %129 : vector<16x16xf32>
    %c0_82 = arith.constant 0 : index
    %c48_83 = arith.constant 48 : index
    %c0_84 = arith.constant 0 : index
    %131 = vector.load %arg8[%c0_82, %c48_83, %c0_84] : memref<1x256x16xf32, #tpu.memory_space<vmem>>, vector<1x16x16xf32>
    %132 = vector.shape_cast %131 : vector<1x16x16xf32> to vector<16x16xf32>
    %133 = vector.shape_cast %130 : vector<16x16xf32> to vector<1x16x16xf32>
    tpu.vector_store %arg8[%c0_82, %c48_83, %c0_84], %133 {strides = array<i32>} : memref<1x256x16xf32, #tpu.memory_space<vmem>>, vector<1x16x16xf32>,
    %c0_85 = arith.constant 0 : index
    %c64 = arith.constant 64 : index
    %c0_86 = arith.constant 0 : index
    %134 = vector.load %arg1[%c0_85, %c64, %c0_86] : memref<1x256x16xf32, #tpu.memory_space<vmem>>, vector<1x16x16xf32>
    %135 = vector.shape_cast %134 : vector<1x16x16xf32> to vector<16x16xf32>
    %136 = vector.extract_strided_slice %88 {offsets = [96, 0], sizes = [16, 16], strides = [1, 1]} : vector<376x16xf32> to vector<16x16xf32>
    %137 = vector.broadcast %89 : vector<1x16xf32> to vector<16x16xf32>
    %138 = arith.addf %136, %137 : vector<16x16xf32>
    %139 = arith.addf %138, %135 : vector<16x16xf32>
    %cst_87 = arith.constant 0.000000e+00 : f32
    %140 = vector.broadcast %cst_87 : f32 to vector<16x16xf32>
    %141 = arith.maximumf %139, %140 : vector<16x16xf32>
    %c0_88 = arith.constant 0 : index
    %c64_89 = arith.constant 64 : index
    %c0_90 = arith.constant 0 : index
    %142 = vector.load %arg8[%c0_88, %c64_89, %c0_90] : memref<1x256x16xf32, #tpu.memory_space<vmem>>, vector<1x16x16xf32>
    %143 = vector.shape_cast %142 : vector<1x16x16xf32> to vector<16x16xf32>
    %144 = vector.shape_cast %141 : vector<16x16xf32> to vector<1x16x16xf32>
    tpu.vector_store %arg8[%c0_88, %c64_89, %c0_90], %144 {strides = array<i32>} : memref<1x256x16xf32, #tpu.memory_space<vmem>>, vector<1x16x16xf32>,
    %c0_91 = arith.constant 0 : index
    %c80_92 = arith.constant 80 : index
    %c0_93 = arith.constant 0 : index
    %145 = vector.load %arg1[%c0_91, %c80_92, %c0_93] : memref<1x256x16xf32, #tpu.memory_space<vmem>>, vector<1x16x16xf32>
    %146 = vector.shape_cast %145 : vector<1x16x16xf32> to vector<16x16xf32>
    %147 = vector.extract_strided_slice %88 {offsets = [120, 0], sizes = [16, 16], strides = [1, 1]} : vector<376x16xf32> to vector<16x16xf32>
    %148 = vector.broadcast %89 : vector<1x16xf32> to vector<16x16xf32>
    %149 = arith.addf %147, %148 : vector<16x16xf32>
    %150 = arith.addf %149, %146 : vector<16x16xf32>
    %cst_94 = arith.constant 0.000000e+00 : f32
    %151 = vector.broadcast %cst_94 : f32 to vector<16x16xf32>
    %152 = arith.maximumf %150, %151 : vector<16x16xf32>
    %c0_95 = arith.constant 0 : index
    %c80_96 = arith.constant 80 : index
    %c0_97 = arith.constant 0 : index
    %153 = vector.load %arg8[%c0_95, %c80_96, %c0_97] : memref<1x256x16xf32, #tpu.memory_space<vmem>>, vector<1x16x16xf32>
    %154 = vector.shape_cast %153 : vector<1x16x16xf32> to vector<16x16xf32>
    %155 = vector.shape_cast %152 : vector<16x16xf32> to vector<1x16x16xf32>
    tpu.vector_store %arg8[%c0_95, %c80_96, %c0_97], %155 {strides = array<i32>} : memref<1x256x16xf32, #tpu.memory_space<vmem>>, vector<1x16x16xf32>,
    %c0_98 = arith.constant 0 : index
    %c96_99 = arith.constant 96 : index
    %c0_100 = arith.constant 0 : index
    %156 = vector.load %arg1[%c0_98, %c96_99, %c0_100] : memref<1x256x16xf32, #tpu.memory_space<vmem>>, vector<1x16x16xf32>
    %157 = vector.shape_cast %156 : vector<1x16x16xf32> to vector<16x16xf32>
    %158 = vector.extract_strided_slice %88 {offsets = [144, 0], sizes = [16, 16], strides = [1, 1]} : vector<376x16xf32> to vector<16x16xf32>
    %159 = vector.broadcast %89 : vector<1x16xf32> to vector<16x16xf32>
    %160 = arith.addf %158, %159 : vector<16x16xf32>
    %161 = arith.addf %160, %157 : vector<16x16xf32>
    %cst_101 = arith.constant 0.000000e+00 : f32
    %162 = vector.broadcast %cst_101 : f32 to vector<16x16xf32>
    %163 = arith.maximumf %161, %162 : vector<16x16xf32>
    %c0_102 = arith.constant 0 : index
    %c96_103 = arith.constant 96 : index
    %c0_104 = arith.constant 0 : index
    %164 = vector.load %arg8[%c0_102, %c96_103, %c0_104] : memref<1x256x16xf32, #tpu.memory_space<vmem>>, vector<1x16x16xf32>
    %165 = vector.shape_cast %164 : vector<1x16x16xf32> to vector<16x16xf32>
    %166 = vector.shape_cast %163 : vector<16x16xf32> to vector<1x16x16xf32>
    tpu.vector_store %arg8[%c0_102, %c96_103, %c0_104], %166 {strides = array<i32>} : memref<1x256x16xf32, #tpu.memory_space<vmem>>, vector<1x16x16xf32>,
    %c0_105 = arith.constant 0 : index
    %c112 = arith.constant 112 : index
    %c0_106 = arith.constant 0 : index
    %167 = vector.load %arg1[%c0_105, %c112, %c0_106] : memref<1x256x16xf32, #tpu.memory_space<vmem>>, vector<1x16x16xf32>
    %168 = vector.shape_cast %167 : vector<1x16x16xf32> to vector<16x16xf32>
    %169 = vector.extract_strided_slice %88 {offsets = [168, 0], sizes = [16, 16], strides = [1, 1]} : vector<376x16xf32> to vector<16x16xf32>
    %170 = vector.broadcast %89 : vector<1x16xf32> to vector<16x16xf32>
    %171 = arith.addf %169, %170 : vector<16x16xf32>
    %172 = arith.addf %171, %168 : vector<16x16xf32>
    %cst_107 = arith.constant 0.000000e+00 : f32
    %173 = vector.broadcast %cst_107 : f32 to vector<16x16xf32>
    %174 = arith.maximumf %172, %173 : vector<16x16xf32>
    %c0_108 = arith.constant 0 : index
    %c112_109 = arith.constant 112 : index
    %c0_110 = arith.constant 0 : index
    %175 = vector.load %arg8[%c0_108, %c112_109, %c0_110] : memref<1x256x16xf32, #tpu.memory_space<vmem>>, vector<1x16x16xf32>
    %176 = vector.shape_cast %175 : vector<1x16x16xf32> to vector<16x16xf32>
    %177 = vector.shape_cast %174 : vector<16x16xf32> to vector<1x16x16xf32>
    tpu.vector_store %arg8[%c0_108, %c112_109, %c0_110], %177 {strides = array<i32>} : memref<1x256x16xf32, #tpu.memory_space<vmem>>, vector<1x16x16xf32>,
    %c0_111 = arith.constant 0 : index
    %c128_112 = arith.constant 128 : index
    %c0_113 = arith.constant 0 : index
    %178 = vector.load %arg1[%c0_111, %c128_112, %c0_113] : memref<1x256x16xf32, #tpu.memory_space<vmem>>, vector<1x16x16xf32>
    %179 = vector.shape_cast %178 : vector<1x16x16xf32> to vector<16x16xf32>
    %180 = vector.extract_strided_slice %88 {offsets = [192, 0], sizes = [16, 16], strides = [1, 1]} : vector<376x16xf32> to vector<16x16xf32>
    %181 = vector.broadcast %89 : vector<1x16xf32> to vector<16x16xf32>
    %182 = arith.addf %180, %181 : vector<16x16xf32>
    %183 = arith.addf %182, %179 : vector<16x16xf32>
    %cst_114 = arith.constant 0.000000e+00 : f32
    %184 = vector.broadcast %cst_114 : f32 to vector<16x16xf32>
    %185 = arith.maximumf %183, %184 : vector<16x16xf32>
    %c0_115 = arith.constant 0 : index
    %c128_116 = arith.constant 128 : index
    %c0_117 = arith.constant 0 : index
    %186 = vector.load %arg8[%c0_115, %c128_116, %c0_117] : memref<1x256x16xf32, #tpu.memory_space<vmem>>, vector<1x16x16xf32>
    %187 = vector.shape_cast %186 : vector<1x16x16xf32> to vector<16x16xf32>
    %188 = vector.shape_cast %185 : vector<16x16xf32> to vector<1x16x16xf32>
    tpu.vector_store %arg8[%c0_115, %c128_116, %c0_117], %188 {strides = array<i32>} : memref<1x256x16xf32, #tpu.memory_space<vmem>>, vector<1x16x16xf32>,
    %c0_118 = arith.constant 0 : index
    %c144_119 = arith.constant 144 : index
    %c0_120 = arith.constant 0 : index
    %189 = vector.load %arg1[%c0_118, %c144_119, %c0_120] : memref<1x256x16xf32, #tpu.memory_space<vmem>>, vector<1x16x16xf32>
    %190 = vector.shape_cast %189 : vector<1x16x16xf32> to vector<16x16xf32>
    %191 = vector.extract_strided_slice %88 {offsets = [216, 0], sizes = [16, 16], strides = [1, 1]} : vector<376x16xf32> to vector<16x16xf32>
    %192 = vector.broadcast %89 : vector<1x16xf32> to vector<16x16xf32>
    %193 = arith.addf %191, %192 : vector<16x16xf32>
    %194 = arith.addf %193, %190 : vector<16x16xf32>
    %cst_121 = arith.constant 0.000000e+00 : f32
    %195 = vector.broadcast %cst_121 : f32 to vector<16x16xf32>
    %196 = arith.maximumf %194, %195 : vector<16x16xf32>
    %c0_122 = arith.constant 0 : index
    %c144_123 = arith.constant 144 : index
    %c0_124 = arith.constant 0 : index
    %197 = vector.load %arg8[%c0_122, %c144_123, %c0_124] : memref<1x256x16xf32, #tpu.memory_space<vmem>>, vector<1x16x16xf32>
    %198 = vector.shape_cast %197 : vector<1x16x16xf32> to vector<16x16xf32>
    %199 = vector.shape_cast %196 : vector<16x16xf32> to vector<1x16x16xf32>
    tpu.vector_store %arg8[%c0_122, %c144_123, %c0_124], %199 {strides = array<i32>} : memref<1x256x16xf32, #tpu.memory_space<vmem>>, vector<1x16x16xf32>,
    %c0_125 = arith.constant 0 : index
    %c160 = arith.constant 160 : index
    %c0_126 = arith.constant 0 : index
    %200 = vector.load %arg1[%c0_125, %c160, %c0_126] : memref<1x256x16xf32, #tpu.memory_space<vmem>>, vector<1x16x16xf32>
    %201 = vector.shape_cast %200 : vector<1x16x16xf32> to vector<16x16xf32>
    %202 = vector.extract_strided_slice %88 {offsets = [240, 0], sizes = [16, 16], strides = [1, 1]} : vector<376x16xf32> to vector<16x16xf32>
    %203 = vector.broadcast %89 : vector<1x16xf32> to vector<16x16xf32>
    %204 = arith.addf %202, %203 : vector<16x16xf32>
    %205 = arith.addf %204, %201 : vector<16x16xf32>
    %cst_127 = arith.constant 0.000000e+00 : f32
    %206 = vector.broadcast %cst_127 : f32 to vector<16x16xf32>
    %207 = arith.maximumf %205, %206 : vector<16x16xf32>
    %c0_128 = arith.constant 0 : index
    %c160_129 = arith.constant 160 : index
    %c0_130 = arith.constant 0 : index
    %208 = vector.load %arg8[%c0_128, %c160_129, %c0_130] : memref<1x256x16xf32, #tpu.memory_space<vmem>>, vector<1x16x16xf32>
    %209 = vector.shape_cast %208 : vector<1x16x16xf32> to vector<16x16xf32>
    %210 = vector.shape_cast %207 : vector<16x16xf32> to vector<1x16x16xf32>
    tpu.vector_store %arg8[%c0_128, %c160_129, %c0_130], %210 {strides = array<i32>} : memref<1x256x16xf32, #tpu.memory_space<vmem>>, vector<1x16x16xf32>,
    %c0_131 = arith.constant 0 : index
    %c176_132 = arith.constant 176 : index
    %c0_133 = arith.constant 0 : index
    %211 = vector.load %arg1[%c0_131, %c176_132, %c0_133] : memref<1x256x16xf32, #tpu.memory_space<vmem>>, vector<1x16x16xf32>
    %212 = vector.shape_cast %211 : vector<1x16x16xf32> to vector<16x16xf32>
    %213 = vector.extract_strided_slice %88 {offsets = [264, 0], sizes = [16, 16], strides = [1, 1]} : vector<376x16xf32> to vector<16x16xf32>
    %214 = vector.broadcast %89 : vector<1x16xf32> to vector<16x16xf32>
    %215 = arith.addf %213, %214 : vector<16x16xf32>
    %216 = arith.addf %215, %212 : vector<16x16xf32>
    %cst_134 = arith.constant 0.000000e+00 : f32
    %217 = vector.broadcast %cst_134 : f32 to vector<16x16xf32>
    %218 = arith.maximumf %216, %217 : vector<16x16xf32>
    %c0_135 = arith.constant 0 : index
    %c176_136 = arith.constant 176 : index
    %c0_137 = arith.constant 0 : index
    %219 = vector.load %arg8[%c0_135, %c176_136, %c0_137] : memref<1x256x16xf32, #tpu.memory_space<vmem>>, vector<1x16x16xf32>
    %220 = vector.shape_cast %219 : vector<1x16x16xf32> to vector<16x16xf32>
    %221 = vector.shape_cast %218 : vector<16x16xf32> to vector<1x16x16xf32>
    tpu.vector_store %arg8[%c0_135, %c176_136, %c0_137], %221 {strides = array<i32>} : memref<1x256x16xf32, #tpu.memory_space<vmem>>, vector<1x16x16xf32>,
    %c0_138 = arith.constant 0 : index
    %c192_139 = arith.constant 192 : index
    %c0_140 = arith.constant 0 : index
    %222 = vector.load %arg1[%c0_138, %c192_139, %c0_140] : memref<1x256x16xf32, #tpu.memory_space<vmem>>, vector<1x16x16xf32>
    %223 = vector.shape_cast %222 : vector<1x16x16xf32> to vector<16x16xf32>
    %224 = vector.extract_strided_slice %88 {offsets = [288, 0], sizes = [16, 16], strides = [1, 1]} : vector<376x16xf32> to vector<16x16xf32>
    %225 = vector.broadcast %89 : vector<1x16xf32> to vector<16x16xf32>
    %226 = arith.addf %224, %225 : vector<16x16xf32>
    %227 = arith.addf %226, %223 : vector<16x16xf32>
    %cst_141 = arith.constant 0.000000e+00 : f32
    %228 = vector.broadcast %cst_141 : f32 to vector<16x16xf32>
    %229 = arith.maximumf %227, %228 : vector<16x16xf32>
    %c0_142 = arith.constant 0 : index
    %c192_143 = arith.constant 192 : index
    %c0_144 = arith.constant 0 : index
    %230 = vector.load %arg8[%c0_142, %c192_143, %c0_144] : memref<1x256x16xf32, #tpu.memory_space<vmem>>, vector<1x16x16xf32>
    %231 = vector.shape_cast %230 : vector<1x16x16xf32> to vector<16x16xf32>
    %232 = vector.shape_cast %229 : vector<16x16xf32> to vector<1x16x16xf32>
    tpu.vector_store %arg8[%c0_142, %c192_143, %c0_144], %232 {strides = array<i32>} : memref<1x256x16xf32, #tpu.memory_space<vmem>>, vector<1x16x16xf32>,
    %c0_145 = arith.constant 0 : index
    %c208 = arith.constant 208 : index
    %c0_146 = arith.constant 0 : index
    %233 = vector.load %arg1[%c0_145, %c208, %c0_146] : memref<1x256x16xf32, #tpu.memory_space<vmem>>, vector<1x16x16xf32>
    %234 = vector.shape_cast %233 : vector<1x16x16xf32> to vector<16x16xf32>
    %235 = vector.extract_strided_slice %88 {offsets = [312, 0], sizes = [16, 16], strides = [1, 1]} : vector<376x16xf32> to vector<16x16xf32>
    %236 = vector.broadcast %89 : vector<1x16xf32> to vector<16x16xf32>
    %237 = arith.addf %235, %236 : vector<16x16xf32>
    %238 = arith.addf %237, %234 : vector<16x16xf32>
    %cst_147 = arith.constant 0.000000e+00 : f32
    %239 = vector.broadcast %cst_147 : f32 to vector<16x16xf32>
    %240 = arith.maximumf %238, %239 : vector<16x16xf32>
    %c0_148 = arith.constant 0 : index
    %c208_149 = arith.constant 208 : index
    %c0_150 = arith.constant 0 : index
    %241 = vector.load %arg8[%c0_148, %c208_149, %c0_150] : memref<1x256x16xf32, #tpu.memory_space<vmem>>, vector<1x16x16xf32>
    %242 = vector.shape_cast %241 : vector<1x16x16xf32> to vector<16x16xf32>
    %243 = vector.shape_cast %240 : vector<16x16xf32> to vector<1x16x16xf32>
    tpu.vector_store %arg8[%c0_148, %c208_149, %c0_150], %243 {strides = array<i32>} : memref<1x256x16xf32, #tpu.memory_space<vmem>>, vector<1x16x16xf32>,
    %c0_151 = arith.constant 0 : index
    %c224_152 = arith.constant 224 : index
    %c0_153 = arith.constant 0 : index
    %244 = vector.load %arg1[%c0_151, %c224_152, %c0_153] : memref<1x256x16xf32, #tpu.memory_space<vmem>>, vector<1x16x16xf32>
    %245 = vector.shape_cast %244 : vector<1x16x16xf32> to vector<16x16xf32>
    %246 = vector.extract_strided_slice %88 {offsets = [336, 0], sizes = [16, 16], strides = [1, 1]} : vector<376x16xf32> to vector<16x16xf32>
    %247 = vector.broadcast %89 : vector<1x16xf32> to vector<16x16xf32>
    %248 = arith.addf %246, %247 : vector<16x16xf32>
    %249 = arith.addf %248, %245 : vector<16x16xf32>
    %cst_154 = arith.constant 0.000000e+00 : f32
    %250 = vector.broadcast %cst_154 : f32 to vector<16x16xf32>
    %251 = arith.maximumf %249, %250 : vector<16x16xf32>
    %c0_155 = arith.constant 0 : index
    %c224_156 = arith.constant 224 : index
    %c0_157 = arith.constant 0 : index
    %252 = vector.load %arg8[%c0_155, %c224_156, %c0_157] : memref<1x256x16xf32, #tpu.memory_space<vmem>>, vector<1x16x16xf32>
    %253 = vector.shape_cast %252 : vector<1x16x16xf32> to vector<16x16xf32>
    %254 = vector.shape_cast %251 : vector<16x16xf32> to vector<1x16x16xf32>
    tpu.vector_store %arg8[%c0_155, %c224_156, %c0_157], %254 {strides = array<i32>} : memref<1x256x16xf32, #tpu.memory_space<vmem>>, vector<1x16x16xf32>,
    %c0_158 = arith.constant 0 : index
    %c240_159 = arith.constant 240 : index
    %c0_160 = arith.constant 0 : index
    %255 = vector.load %arg1[%c0_158, %c240_159, %c0_160] : memref<1x256x16xf32, #tpu.memory_space<vmem>>, vector<1x16x16xf32>
    %256 = vector.shape_cast %255 : vector<1x16x16xf32> to vector<16x16xf32>
    %257 = vector.extract_strided_slice %88 {offsets = [360, 0], sizes = [16, 16], strides = [1, 1]} : vector<376x16xf32> to vector<16x16xf32>
    %258 = vector.broadcast %89 : vector<1x16xf32> to vector<16x16xf32>
    %259 = arith.addf %257, %258 : vector<16x16xf32>
    %260 = arith.addf %259, %256 : vector<16x16xf32>
    %cst_161 = arith.constant 0.000000e+00 : f32
    %261 = vector.broadcast %cst_161 : f32 to vector<16x16xf32>
    %262 = arith.maximumf %260, %261 : vector<16x16xf32>
    %c0_162 = arith.constant 0 : index
    %c240_163 = arith.constant 240 : index
    %c0_164 = arith.constant 0 : index
    %263 = vector.load %arg8[%c0_162, %c240_163, %c0_164] : memref<1x256x16xf32, #tpu.memory_space<vmem>>, vector<1x16x16xf32>
    %264 = vector.shape_cast %263 : vector<1x16x16xf32> to vector<16x16xf32>
    %265 = vector.shape_cast %262 : vector<16x16xf32> to vector<1x16x16xf32>
    tpu.vector_store %arg8[%c0_162, %c240_163, %c0_164], %265 {strides = array<i32>} : memref<1x256x16xf32, #tpu.memory_space<vmem>>, vector<1x16x16xf32>,
    return
  }
  func.func @transform_0(%arg0: i32) -> (i32, i32, i32) {
    %c0_i32 = arith.constant 0 : i32
    %c0_i32_0 = arith.constant 0 : i32
    %c0_i32_1 = arith.constant 0 : i32
    return %arg0, %c0_i32, %c0_i32_0 : i32, i32, i32
  }
  func.func @transform_1(%arg0: i32) -> (i32, i32) {
    %c0_i32 = arith.constant 0 : i32
    %c0_i32_0 = arith.constant 0 : i32
    %c0_i32_1 = arith.constant 0 : i32
    return %c0_i32, %c0_i32_0 : i32, i32
  }
  func.func @transform_2(%arg0: i32) -> (i32, i32) {
    %c0_i32 = arith.constant 0 : i32
    %c0_i32_0 = arith.constant 0 : i32
    %c0_i32_1 = arith.constant 0 : i32
    return %c0_i32, %c0_i32_0 : i32, i32
  }
  func.func @transform_3(%arg0: i32) -> (i32, i32) {
    %c0_i32 = arith.constant 0 : i32
    %c0_i32_0 = arith.constant 0 : i32
    %c0_i32_1 = arith.constant 0 : i32
    return %c0_i32, %c0_i32_0 : i32, i32
  }
  func.func @transform_4(%arg0: i32) -> (i32, i32) {
    %c0_i32 = arith.constant 0 : i32
    %c0_i32_0 = arith.constant 0 : i32
    %c0_i32_1 = arith.constant 0 : i32
    return %c0_i32, %c0_i32_0 : i32, i32
  }
  func.func @transform_5(%arg0: i32) -> (i32, i32) {
    %c0_i32 = arith.constant 0 : i32
    %c0_i32_0 = arith.constant 0 : i32
    %c0_i32_1 = arith.constant 0 : i32
    return %c0_i32, %c0_i32_0 : i32, i32
  }
  func.func @transform_6(%arg0: i32) -> (i32, i32) {
    %c0_i32 = arith.constant 0 : i32
    %c0_i32_0 = arith.constant 0 : i32
    %c0_i32_1 = arith.constant 0 : i32
    return %c0_i32, %c0_i32_0 : i32, i32
  }
  func.func @transform_7(%arg0: i32) -> (i32, i32, i32) {
    %c0_i32 = arith.constant 0 : i32
    %c0_i32_0 = arith.constant 0 : i32
    %c0_i32_1 = arith.constant 0 : i32
    return %arg0, %c0_i32, %c0_i32_0 : i32, i32, i32
  }
}

</mosaic_0001>

<llo_original>
// kernel: tpu_custom_call.1
$region0: #{tpu_custom_call.1}
  #allocation0 [shape = 'u32[]', space=smem, size = 0x4, offset = 0x4, fixed_abs, tag = 'smem constant byte address 0x4 - core index']
  #allocation1 [shape = 'u32[72,128]{1,0:T(1,128)}', space=vmem, size = 0x9000, scoped, tag = 'internal scratch']
  #allocation2 [shape = 'f32[440,4]{1,0:T(8,128)}', space=vmem, size = 0x37000, scoped, tag = 'scratch operand']
  %s0 = inlined_call_operand.vmem [shape: f32[2,256,16], index: 0, kind: input, shape index: {}]
  %s1 = inlined_call_operand.vmem [shape: f32[16,4], index: 1, kind: input, shape index: {}]
  %s2 = inlined_call_operand.vmem [shape: f32[1,4], index: 2, kind: input, shape index: {}]
  %s3 = inlined_call_operand.vmem [shape: f32[4,36], index: 3, kind: input, shape index: {}]
  %s4 = inlined_call_operand.vmem [shape: f32[1,4], index: 4, kind: input, shape index: {}]
  %s5 = inlined_call_operand.vmem [shape: f32[4,16], index: 5, kind: input, shape index: {}]
  %s6 = inlined_call_operand.vmem [shape: f32[1,16], index: 6, kind: input, shape index: {}]
  %s7 = inlined_call_operand.vmem [shape: f32[2,256,16], index: 7, kind: output, shape index: {}]
  %s8 = sld [smem:[#allocation0]]
  $region61: #{tpu_custom_call.1} parent=0
    _
  %s10 = ssub.s32 1, %s8
  %s11 = scalar_select 0, %s10, %s8
  loop: start=0, step=1, limit=4
  $region2: #{tpu_custom_call.1} parent=0 // loop_pre_header
    _
  $region3: #{tpu_custom_call.1} parent=0 // loop_header
    %s13 = sphi 0, %s17
    %p14 = scmp.ge.s32.totalorder %s13, 4
    %s23 = sphi 0, %s25
    %s26 = sphi 0, %s23
    %s27 = sphi 0, %s26
    %s43 = sphi 0, %s27
    %s47 = sphi 0, %s47
    %s49 = sphi 0, %s47
    %s50 = sphi 0, %s49
    %s64 = sphi 0, %s50
    %s68 = sphi 0, %s68
    %s70 = sphi 0, %s68
    %s71 = sphi 0, %s70
    %s85 = sphi 0, %s71
    %s89 = sphi 0, %s89
    %s91 = sphi 0, %s89
    %s92 = sphi 0, %s91
    %s106 = sphi 0, %s92
    %s110 = sphi 0, %s110
    %s112 = sphi 0, %s110
    %s113 = sphi 0, %s112
    %s127 = sphi 0, %s113
    %s131 = sphi 0, %s131
    %s133 = sphi 0, %s131
    %s134 = sphi 0, %s133
    %s148 = sphi 0, %s134
    %s152 = sphi 0, %s152
    %s154 = sphi 0, %s152
    %s155 = sphi 0, %s154
    %s169 = sphi 0, %s155
    %s175 = sphi 0, %s177
    %s178 = sphi 0, %s175
    %s179 = sphi 0, %s178
    %s195 = sphi 0, %s179
  $region4: #{tpu_custom_call.1} parent=0 // loop_header_branch
    %16 = sbr.rel (%p14) target = $region8
  $region5: #{tpu_custom_call.1} parent=0 // loop_body
    %s18 = ssub.s32 %s13, 1
    %s19 = ssub.s32 %s13, 2
    %s20 = sadd.s32 %s13, 1
    %s21 = ssub.s32 %s13, %s20
    %p22 = scmp.eq.s32.totalorder %s21, 0
    %s24 = sadd.s32 %s23, 1
    %s25 = scalar_select %p22, %s23, %s24
    %p28 = pneg %p22
    %p29 = scmp.eq.s32.totalorder %s13, 1
    %p30 = por %p28, %p29
    %p31 = scmp.ne.s32.totalorder %s23, %s26
    %p32 = scmp.eq.s32.totalorder %s13, 0
    %p33 = por %p31, %p32
    %p34 = scmp.ne.s32.totalorder %s23, %s26
    %p35 = scmp.eq.s32.totalorder %s18, 1
    %p36 = por %p34, %p35
    %p37 = scmp.ne.s32.totalorder %s26, %s27
    %p38 = scmp.eq.s32.totalorder %s18, 0
    %p39 = por %p37, %p38
    %p40 = scmp.ne.s32.totalorder %s26, %s27
    %p41 = scmp.eq.s32.totalorder %s19, 1
    %p42 = por %p40, %p41
    %p44 = scmp.ne.s32.totalorder %s27, %s43
    %p45 = scmp.eq.s32.totalorder %s19, 0
    %p46 = por %p44, %p45
    %s48 = sadd.s32 %s47, 1
    %p51 = scmp.eq.s32.totalorder %s13, 1
    %p52 = scmp.ne.s32.totalorder %s47, %s49
    %p53 = scmp.eq.s32.totalorder %s13, 0
    %p54 = por %p52, %p53
    %p55 = scmp.ne.s32.totalorder %s47, %s49
    %p56 = scmp.eq.s32.totalorder %s18, 1
    %p57 = por %p55, %p56
    %p58 = scmp.ne.s32.totalorder %s49, %s50
    %p59 = scmp.eq.s32.totalorder %s18, 0
    %p60 = por %p58, %p59
    %p61 = scmp.ne.s32.totalorder %s49, %s50
    %p62 = scmp.eq.s32.totalorder %s19, 1
    %p63 = por %p61, %p62
    %p65 = scmp.ne.s32.totalorder %s50, %s64
    %p66 = scmp.eq.s32.totalorder %s19, 0
    %p67 = por %p65, %p66
    %s69 = sadd.s32 %s68, 1
    %p72 = scmp.eq.s32.totalorder %s13, 1
    %p73 = scmp.ne.s32.totalorder %s68, %s70
    %p74 = scmp.eq.s32.totalorder %s13, 0
    %p75 = por %p73, %p74
    %p76 = scmp.ne.s32.totalorder %s68, %s70
    %p77 = scmp.eq.s32.totalorder %s18, 1
    %p78 = por %p76, %p77
    %p79 = scmp.ne.s32.totalorder %s70, %s71
    %p80 = scmp.eq.s32.totalorder %s18, 0
    %p81 = por %p79, %p80
    %p82 = scmp.ne.s32.totalorder %s70, %s71
    %p83 = scmp.eq.s32.totalorder %s19, 1
    %p84 = por %p82, %p83
    %p86 = scmp.ne.s32.totalorder %s71, %s85
    %p87 = scmp.eq.s32.totalorder %s19, 0
    %p88 = por %p86, %p87
    %s90 = sadd.s32 %s89, 1
    %p93 = scmp.eq.s32.totalorder %s13, 1
    %p94 = scmp.ne.s32.totalorder %s89, %s91
    %p95 = scmp.eq.s32.totalorder %s13, 0
    %p96 = por %p94, %p95
    %p97 = scmp.ne.s32.totalorder %s89, %s91
    %p98 = scmp.eq.s32.totalorder %s18, 1
    %p99 = por %p97, %p98
    %p100 = scmp.ne.s32.totalorder %s91, %s92
    %p101 = scmp.eq.s32.totalorder %s18, 0
    %p102 = por %p100, %p101
    %p103 = scmp.ne.s32.totalorder %s91, %s92
    %p104 = scmp.eq.s32.totalorder %s19, 1
    %p105 = por %p103, %p104
    %p107 = scmp.ne.s32.totalorder %s92, %s106
    %p108 = scmp.eq.s32.totalorder %s19, 0
    %p109 = por %p107, %p108
    %s111 = sadd.s32 %s110, 1
    %p114 = scmp.eq.s32.totalorder %s13, 1
    %p115 = scmp.ne.s32.totalorder %s110, %s112
    %p116 = scmp.eq.s32.totalorder %s13, 0
    %p117 = por %p115, %p116
    %p118 = scmp.ne.s32.totalorder %s110, %s112
    %p119 = scmp.eq.s32.totalorder %s18, 1
    %p120 = por %p118, %p119
    %p121 = scmp.ne.s32.totalorder %s112, %s113
    %p122 = scmp.eq.s32.totalorder %s18, 0
    %p123 = por %p121, %p122
    %p124 = scmp.ne.s32.totalorder %s112, %s113
    %p125 = scmp.eq.s32.totalorder %s19, 1
    %p126 = por %p124, %p125
    %p128 = scmp.ne.s32.totalorder %s113, %s127
    %p129 = scmp.eq.s32.totalorder %s19, 0
    %p130 = por %p128, %p129
    %s132 = sadd.s32 %s131, 1
    %p135 = scmp.eq.s32.totalorder %s13, 1
    %p136 = scmp.ne.s32.totalorder %s131, %s133
    %p137 = scmp.eq.s32.totalorder %s13, 0
    %p138 = por %p136, %p137
    %p139 = scmp.ne.s32.totalorder %s131, %s133
    %p140 = scmp.eq.s32.totalorder %s18, 1
    %p141 = por %p139, %p140
    %p142 = scmp.ne.s32.totalorder %s133, %s134
    %p143 = scmp.eq.s32.totalorder %s18, 0
    %p144 = por %p142, %p143
    %p145 = scmp.ne.s32.totalorder %s133, %s134
    %p146 = scmp.eq.s32.totalorder %s19, 1
    %p147 = por %p145, %p146
    %p149 = scmp.ne.s32.totalorder %s134, %s148
    %p150 = scmp.eq.s32.totalorder %s19, 0
    %p151 = por %p149, %p150
    %s153 = sadd.s32 %s152, 1
    %p156 = scmp.eq.s32.totalorder %s13, 1
    %p157 = scmp.ne.s32.totalorder %s152, %s154
    %p158 = scmp.eq.s32.totalorder %s13, 0
    %p159 = por %p157, %p158
    %p160 = scmp.ne.s32.totalorder %s152, %s154
    %p161 = scmp.eq.s32.totalorder %s18, 1
    %p162 = por %p160, %p161
    %p163 = scmp.ne.s32.totalorder %s154, %s155
    %p164 = scmp.eq.s32.totalorder %s18, 0
    %p165 = por %p163, %p164
    %p166 = scmp.ne.s32.totalorder %s154, %s155
    %p167 = scmp.eq.s32.totalorder %s19, 1
    %p168 = por %p166, %p167
    %p170 = scmp.ne.s32.totalorder %s155, %s169
    %p171 = scmp.eq.s32.totalorder %s19, 0
    %p172 = por %p170, %p171
    %s173 = ssub.s32 %s13, %s20
    %p174 = scmp.eq.s32.totalorder %s173, 0
    %s176 = sadd.s32 %s175, 1
    %s177 = scalar_select %p174, %s175, %s176
    %p180 = pneg %p174
    %p181 = scmp.eq.s32.totalorder %s13, 1
    %p182 = por %p180, %p181
    %p183 = scmp.ne.s32.totalorder %s175, %s178
    %p184 = scmp.eq.s32.totalorder %s13, 0
    %p185 = por %p183, %p184
    %p186 = scmp.ne.s32.totalorder %s175, %s178
    %p187 = scmp.eq.s32.totalorder %s18, 1
    %p188 = por %p186, %p187
    %p189 = scmp.ne.s32.totalorder %s178, %s179
    %p190 = scmp.eq.s32.totalorder %s18, 0
    %p191 = por %p189, %p190
    %p192 = scmp.ne.s32.totalorder %s178, %s179
    %p193 = scmp.eq.s32.totalorder %s19, 1
    %p194 = por %p192, %p193
    %p196 = scmp.ne.s32.totalorder %s179, %s195
    %p197 = scmp.eq.s32.totalorder %s19, 0
    %p198 = por %p196, %p197
    %p199 = scmp.le.s32.totalorder 1, %s13
    %p200 = scmp.lt.s32.totalorder %s13, 3
    %p201 = pnand %p199, %p200
    %p202 = pneg %p201
    // Predicated region
    $region9: #{tpu_custom_call.1} parent=5 // pred_check
      _
    $region10: #{tpu_custom_call.1} parent=5 // pred_check_branch
      %204 = sbr.rel (%p201) target = $region12
    $region11: #{tpu_custom_call.1} parent=5 // pred_region
      %s205 = ssub.s32 %s13, 1
      // Predicated region
      $region13: #{tpu_custom_call.1} parent=11 // pred_check
        %p206 = pneg %p60
      $region14: #{tpu_custom_call.1} parent=11 // pred_check_branch
        %208 = sbr.rel (%p206) target = $region16
      $region15: #{tpu_custom_call.1} parent=11 // pred_region
        _
      $region16: #{tpu_custom_call.1} parent=11 // pred_fallthru
        _
      // Predicated region
      $region17: #{tpu_custom_call.1} parent=11 // pred_check
        %p209 = pneg %p81
      $region18: #{tpu_custom_call.1} parent=11 // pred_check_branch
        %211 = sbr.rel (%p209) target = $region20
      $region19: #{tpu_custom_call.1} parent=11 // pred_region
        _
      $region20: #{tpu_custom_call.1} parent=11 // pred_fallthru
        _
      // Predicated region
      $region21: #{tpu_custom_call.1} parent=11 // pred_check
        %p212 = pneg %p102
      $region22: #{tpu_custom_call.1} parent=11 // pred_check_branch
        %214 = sbr.rel (%p212) target = $region24
      $region23: #{tpu_custom_call.1} parent=11 // pred_region
        _
      $region24: #{tpu_custom_call.1} parent=11 // pred_fallthru
        _
      // Predicated region
      $region25: #{tpu_custom_call.1} parent=11 // pred_check
        %p215 = pneg %p123
      $region26: #{tpu_custom_call.1} parent=11 // pred_check_branch
        %217 = sbr.rel (%p215) target = $region28
      $region27: #{tpu_custom_call.1} parent=11 // pred_region
        _
      $region28: #{tpu_custom_call.1} parent=11 // pred_fallthru
        _
      // Predicated region
      $region29: #{tpu_custom_call.1} parent=11 // pred_check
        %p218 = pneg %p144
      $region30: #{tpu_custom_call.1} parent=11 // pred_check_branch
        %220 = sbr.rel (%p218) target = $region32
      $region31: #{tpu_custom_call.1} parent=11 // pred_region
        _
      $region32: #{tpu_custom_call.1} parent=11 // pred_fallthru
        _
      // Predicated region
      $region33: #{tpu_custom_call.1} parent=11 // pred_check
        %p221 = pneg %p165
      $region34: #{tpu_custom_call.1} parent=11 // pred_check_branch
        %223 = sbr.rel (%p221) target = $region36
      $region35: #{tpu_custom_call.1} parent=11 // pred_region
        _
      $region36: #{tpu_custom_call.1} parent=11 // pred_fallthru
        _
    $region12: #{tpu_custom_call.1} parent=5 // pred_fallthru
      _
    %p224 = scmp.lt.s32.totalorder %s13, 2
    // Predicated region
    $region37: #{tpu_custom_call.1} parent=5 // pred_check
      %p225 = pneg %p224
    $region38: #{tpu_custom_call.1} parent=5 // pred_check_branch
      %227 = sbr.rel (%p225) target = $region40
    $region39: #{tpu_custom_call.1} parent=5 // pred_region
      // Predicated region
      $region41: #{tpu_custom_call.1} parent=39 // pred_check
        %p228 = pneg %p33
      $region42: #{tpu_custom_call.1} parent=39 // pred_check_branch
        %230 = sbr.rel (%p228) target = $region44
      $region43: #{tpu_custom_call.1} parent=39 // pred_region
        %p231 = scmp.lt.s32.totalorder %s13, 1
        %s232 = scalar_select %p231, %s13, 1
        %s233 = smul.addr %s232, 32
        %s234 = smul.addr %s233, 8
        %s235 = scalar_lea.vmem %s0, %s234
      $region44: #{tpu_custom_call.1} parent=39 // pred_fallthru
        _
    $region40: #{tpu_custom_call.1} parent=5 // pred_fallthru
      _
    %p236 = scmp.le.s32.totalorder 1, %s13
    %p237 = scmp.lt.s32.totalorder %s13, 3
    %p238 = pnand %p236, %p237
    %p239 = pneg %p238
    // Predicated region
    $region45: #{tpu_custom_call.1} parent=5 // pred_check
      _
    $region46: #{tpu_custom_call.1} parent=5 // pred_check_branch
      %241 = sbr.rel (%p238) target = $region48
    $region47: #{tpu_custom_call.1} parent=5 // pred_region
      %s242 = ssub.s32 %s13, 1
      %p243 = scmp.lt.s32.totalorder %s18, 1
      %s244 = scalar_select %p243, %s18, 1
      %s245 = smul.addr %s244, 32
      %s246 = smul.addr %s245, 8
      %s247 = scalar_lea.vmem %s0, %s246
      %p248 = pneg %p39
      %p249 = pneg %p36
      %p250 = pneg %p60
      %p251 = pneg %p57
      %p252 = pneg %p81
      %p253 = pneg %p78
      %p254 = pneg %p102
      %p255 = pneg %p99
      %p256 = pneg %p123
      %p257 = pneg %p120
      %p258 = pneg %p144
      %p259 = pneg %p141
      %p260 = pneg %p165
      %p261 = pneg %p162
      %p262 = pneg %p191
      %p263 = pneg %p188
      %p264 = scmp.lt.s32.totalorder %s18, 1
      %s265 = scalar_select %p264, %s18, 1
      %s266 = smul.addr %s265, 32
      %s267 = smul.addr %s266, 8
      %s268 = scalar_lea.vmem %s7, %s267
      %p269 = scmp.lt.s32.totalorder %s18, 1
      %s270 = scalar_select %p269, %s18, 1
      %s271 = smul.addr %s270, 32
      %s272 = smul.addr %s271, 8
      %s273 = scalar_lea.vmem %s0, %s272
      %p274 = scmp.lt.s32.totalorder %s18, 1
      %s275 = scalar_select %p274, %s18, 1
      %s276 = smul.addr %s275, 32
      %s277 = smul.addr %s276, 8
      %s278 = scalar_lea.vmem %s7, %s277
      %v279 = vld [vmem:[%s273] sm:$0xff]
      %v280 = vld [vmem:[%s273 + $0x8] sm:$0xff]
      %v281 = vld [vmem:[%s273 + $0x10] sm:$0xff]
      %v282 = vld [vmem:[%s273 + $0x18] sm:$0xff]
      %v283 = vld [vmem:[%s273 + $0x20] sm:$0xff]
      %v284 = vld [vmem:[%s273 + $0x28] sm:$0xff]
      %v285 = vld [vmem:[%s273 + $0x30] sm:$0xff]
      %v286 = vld [vmem:[%s273 + $0x38] sm:$0xff]
      %v287 = vld [vmem:[%s273 + $0x40] sm:$0xff]
      %v288 = vld [vmem:[%s273 + $0x48] sm:$0xff]
      %v289 = vld [vmem:[%s273 + $0x50] sm:$0xff]
      %v290 = vld [vmem:[%s273 + $0x58] sm:$0xff]
      %v291 = vld [vmem:[%s273 + $0x60] sm:$0xff]
      %v292 = vld [vmem:[%s273 + $0x68] sm:$0xff]
      %v293 = vld [vmem:[%s273 + $0x70] sm:$0xff]
      %v294 = vld [vmem:[%s273 + $0x78] sm:$0xff]
      %v295 = vld [vmem:[%s273 + $0x80] sm:$0xff]
      %v296 = vld [vmem:[%s273 + $0x88] sm:$0xff]
      %v297 = vld [vmem:[%s273 + $0x90] sm:$0xff]
      %v298 = vld [vmem:[%s273 + $0x98] sm:$0xff]
      %v299 = vld [vmem:[%s273 + $0xa0] sm:$0xff]
      %v300 = vld [vmem:[%s273 + $0xa8] sm:$0xff]
      %v301 = vld [vmem:[%s273 + $0xb0] sm:$0xff]
      %v302 = vld [vmem:[%s273 + $0xb8] sm:$0xff]
      %v303 = vld [vmem:[%s273 + $0xc0] sm:$0xff]
      %v304 = vld [vmem:[%s273 + $0xc8] sm:$0xff]
      %v305 = vld [vmem:[%s273 + $0xd0] sm:$0xff]
      %v306 = vld [vmem:[%s273 + $0xd8] sm:$0xff]
      %v307 = vld [vmem:[%s273 + $0xe0] sm:$0xff]
      %v308 = vld [vmem:[%s273 + $0xe8] sm:$0xff]
      %v309 = vld [vmem:[%s273 + $0xf0] sm:$0xff]
      %v310 = vld [vmem:[%s273 + $0xf8] sm:$0xff]
      %v311 = vld [vmem:[%s1] sm:$0xff]
      %v312 = vld [vmem:[%s1 + $0x8] sm:$0xff]
      %v313 = vld [vmem:[%s2] sm:$0x1]
      %v315 = vperm.slane %v313, 0
      %vm317 = vcmask 130048
      %v319 = vsel %vm317, %v279, 0
      %v322 = vsel %vm317, %v280, 0
      %v325 = vsel %vm317, %v281, 0
      %v328 = vsel %vm317, %v282, 0
      %v331 = vsel %vm317, %v283, 0
      %v334 = vsel %vm317, %v284, 0
      %v337 = vsel %vm317, %v285, 0
      %v340 = vsel %vm317, %v286, 0
      %v343 = vsel %vm317, %v287, 0
      %v346 = vsel %vm317, %v288, 0
      %v349 = vsel %vm317, %v289, 0
      %v352 = vsel %vm317, %v290, 0
      %v355 = vsel %vm317, %v291, 0
      %v358 = vsel %vm317, %v292, 0
      %v361 = vsel %vm317, %v293, 0
      %v364 = vsel %vm317, %v294, 0
      %v367 = vsel %vm317, %v295, 0
      %v370 = vsel %vm317, %v296, 0
      %v373 = vsel %vm317, %v297, 0
      %v376 = vsel %vm317, %v298, 0
      %v379 = vsel %vm317, %v299, 0
      %v382 = vsel %vm317, %v300, 0
      %v385 = vsel %vm317, %v301, 0
      %v388 = vsel %vm317, %v302, 0
      %v391 = vsel %vm317, %v303, 0
      %v394 = vsel %vm317, %v304, 0
      %v397 = vsel %vm317, %v305, 0
      %v400 = vsel %vm317, %v306, 0
      %v403 = vsel %vm317, %v307, 0
      %v406 = vsel %vm317, %v308, 0
      %v409 = vsel %vm317, %v309, 0
      %v412 = vsel %vm317, %v310, 0
      %414 = vmatpush.msra.mxu0 0.0
      %415 = vmatpush.msra.mxu0 0.0
      %416 = vmatpush.msra.mxu0 0.0
      %417 = vmatpush.msra.mxu0 0.0
      %418 = vmatpush.msra.mxu0 0.0
      %419 = vmatpush.msra.mxu0 0.0
      %420 = vmatpush.msra.mxu0 0.0
      %421 = vmatpush.msra.mxu0 0.0
      %422 = vmatpush.msra.mxu0 0.0
      %423 = vmatpush.msra.mxu0 0.0
      %424 = vmatpush.msra.mxu0 0.0
      %425 = vmatpush.msra.mxu0 0.0
      %426 = vmatpush.msra.mxu0 0.0
      %427 = vmatpush.msra.mxu0 0.0
      %428 = vmatpush.msra.mxu0 %v312
      %429 = vmatpush.msra.mxu0 %v311
      %430 = vmatmul.f32.gmra.mxu0 %v319
      %v431 = vpop.f32.mrf.mxu0
      %v432 = vadd.f32 %v315, %v431
      %433 = vmatmul.f32.gmra.mxu0 %v322
      %v434 = vpop.f32.mrf.mxu0
      %v435 = vadd.f32 %v315, %v434
      %436 = vmatmul.f32.gmra.mxu0 %v325
      %v437 = vpop.f32.mrf.mxu0
      %v438 = vadd.f32 %v315, %v437
      %439 = vmatmul.f32.gmra.mxu0 %v328
      %v440 = vpop.f32.mrf.mxu0
      %v441 = vadd.f32 %v315, %v440
      %442 = vmatmul.f32.gmra.mxu0 %v331
      %v443 = vpop.f32.mrf.mxu0
      %v444 = vadd.f32 %v315, %v443
      %445 = vmatmul.f32.gmra.mxu0 %v334
      %v446 = vpop.f32.mrf.mxu0
      %v447 = vadd.f32 %v315, %v446
      %448 = vmatmul.f32.gmra.mxu0 %v337
      %v449 = vpop.f32.mrf.mxu0
      %v450 = vadd.f32 %v315, %v449
      %451 = vmatmul.f32.gmra.mxu0 %v340
      %v452 = vpop.f32.mrf.mxu0
      %v453 = vadd.f32 %v315, %v452
      %454 = vmatmul.f32.gmra.mxu0 %v343
      %v455 = vpop.f32.mrf.mxu0
      %v456 = vadd.f32 %v315, %v455
      %457 = vmatmul.f32.gmra.mxu0 %v346
      %v458 = vpop.f32.mrf.mxu0
      %v459 = vadd.f32 %v315, %v458
      %460 = vmatmul.f32.gmra.mxu0 %v349
      %v461 = vpop.f32.mrf.mxu0
      %v462 = vadd.f32 %v315, %v461
      %463 = vmatmul.f32.gmra.mxu0 %v352
      %v464 = vpop.f32.mrf.mxu0
      %v465 = vadd.f32 %v315, %v464
      %466 = vmatmul.f32.gmra.mxu0 %v355
      %v467 = vpop.f32.mrf.mxu0
      %v468 = vadd.f32 %v315, %v467
      %469 = vmatmul.f32.gmra.mxu0 %v358
      %v470 = vpop.f32.mrf.mxu0
      %v471 = vadd.f32 %v315, %v470
      %472 = vmatmul.f32.gmra.mxu0 %v361
      %v473 = vpop.f32.mrf.mxu0
      %v474 = vadd.f32 %v315, %v473
      %475 = vmatmul.f32.gmra.mxu0 %v364
      %v476 = vpop.f32.mrf.mxu0
      %v477 = vadd.f32 %v315, %v476
      %478 = vmatmul.f32.gmra.mxu0 %v367
      %v479 = vpop.f32.mrf.mxu0
      %v480 = vadd.f32 %v315, %v479
      %481 = vmatmul.f32.gmra.mxu0 %v370
      %v482 = vpop.f32.mrf.mxu0
      %v483 = vadd.f32 %v315, %v482
      %484 = vmatmul.f32.gmra.mxu0 %v373
      %v485 = vpop.f32.mrf.mxu0
      %v486 = vadd.f32 %v315, %v485
      %487 = vmatmul.f32.gmra.mxu0 %v376
      %v488 = vpop.f32.mrf.mxu0
      %v489 = vadd.f32 %v315, %v488
      %490 = vmatmul.f32.gmra.mxu0 %v379
      %v491 = vpop.f32.mrf.mxu0
      %v492 = vadd.f32 %v315, %v491
      %493 = vmatmul.f32.gmra.mxu0 %v382
      %v494 = vpop.f32.mrf.mxu0
      %v495 = vadd.f32 %v315, %v494
      %496 = vmatmul.f32.gmra.mxu0 %v385
      %v497 = vpop.f32.mrf.mxu0
      %v498 = vadd.f32 %v315, %v497
      %499 = vmatmul.f32.gmra.mxu0 %v388
      %v500 = vpop.f32.mrf.mxu0
      %v501 = vadd.f32 %v315, %v500
      %502 = vmatmul.f32.gmra.mxu0 %v391
      %v503 = vpop.f32.mrf.mxu0
      %v504 = vadd.f32 %v315, %v503
      %505 = vmatmul.f32.gmra.mxu0 %v394
      %v506 = vpop.f32.mrf.mxu0
      %v507 = vadd.f32 %v315, %v506
      %508 = vmatmul.f32.gmra.mxu0 %v397
      %v509 = vpop.f32.mrf.mxu0
      %v510 = vadd.f32 %v315, %v509
      %511 = vmatmul.f32.gmra.mxu0 %v400
      %v512 = vpop.f32.mrf.mxu0
      %v513 = vadd.f32 %v315, %v512
      %514 = vmatmul.f32.gmra.mxu0 %v403
      %v515 = vpop.f32.mrf.mxu0
      %v516 = vadd.f32 %v315, %v515
      %517 = vmatmul.f32.gmra.mxu0 %v406
      %v518 = vpop.f32.mrf.mxu0
      %v519 = vadd.f32 %v315, %v518
      %520 = vmatmul.f32.gmra.mxu0 %v409
      %v521 = vpop.f32.mrf.mxu0
      %v522 = vadd.f32 %v315, %v521
      %523 = vmatmul.f32.gmra.mxu0 %v412
      %v524 = vpop.f32.mrf.mxu0
      %v525 = vadd.f32 %v315, %v524
      %526 = vdwg.mxu0
      %v527 = vmax.f32 %v432, 0.0
      %v528 = vmax.f32 %v435, 0.0
      %v529 = vmax.f32 %v438, 0.0
      %v530 = vmax.f32 %v441, 0.0
      %v531 = vmax.f32 %v444, 0.0
      %v532 = vmax.f32 %v447, 0.0
      %v533 = vmax.f32 %v450, 0.0
      %v534 = vmax.f32 %v453, 0.0
      %v535 = vmax.f32 %v456, 0.0
      %v536 = vmax.f32 %v459, 0.0
      %v537 = vmax.f32 %v462, 0.0
      %v538 = vmax.f32 %v465, 0.0
      %v539 = vmax.f32 %v468, 0.0
      %v540 = vmax.f32 %v471, 0.0
      %v541 = vmax.f32 %v474, 0.0
      %v542 = vmax.f32 %v477, 0.0
      %v543 = vmax.f32 %v480, 0.0
      %v544 = vmax.f32 %v483, 0.0
      %v545 = vmax.f32 %v486, 0.0
      %v546 = vmax.f32 %v489, 0.0
      %v547 = vmax.f32 %v492, 0.0
      %v548 = vmax.f32 %v495, 0.0
      %v549 = vmax.f32 %v498, 0.0
      %v550 = vmax.f32 %v501, 0.0
      %v551 = vmax.f32 %v504, 0.0
      %v552 = vmax.f32 %v507, 0.0
      %v553 = vmax.f32 %v510, 0.0
      %v554 = vmax.f32 %v513, 0.0
      %v555 = vmax.f32 %v516, 0.0
      %v556 = vmax.f32 %v519, 0.0
      %v557 = vmax.f32 %v522, 0.0
      %v558 = vmax.f32 %v525, 0.0
      %vm559 = vcmask 31744
      %560 = vst.msk [vmem:[#allocation2] sm:$0xff] %vm559, 0.0
      %561 = vst.msk [vmem:[#allocation2 + $0x8] sm:$0xff] %vm559, 0.0
      %562 = vst.msk [vmem:[#allocation2 + $0x10] sm:$0xff] %vm559, 0.0
      %563 = vst.msk [vmem:[#allocation2 + $0x18] sm:$0xff] %vm559, 0.0
      %564 = vst.msk [vmem:[#allocation2 + $0x1a0] sm:$0xff] %vm559, 0.0
      %565 = vst.msk [vmem:[#allocation2 + $0x1a8] sm:$0xff] %vm559, 0.0
      %566 = vst.msk [vmem:[#allocation2 + $0x1b0] sm:$0xff] %vm559, 0.0
      %567 = vst.msk [vmem:[#allocation2 + $0x20] sm:$0xff] %vm559, %v527
      %568 = vst.msk [vmem:[#allocation2 + $0x28] sm:$0xff] %vm559, %v528
      %569 = vst.msk [vmem:[#allocation2 + $0x30] sm:$0xff] %vm559, 0.0
      %570 = vst.msk [vmem:[#allocation2 + $0x38] sm:$0xff] %vm559, %v529
      %571 = vst.msk [vmem:[#allocation2 + $0x40] sm:$0xff] %vm559, %v530
      %572 = vst.msk [vmem:[#allocation2 + $0x48] sm:$0xff] %vm559, 0.0
      %573 = vst.msk [vmem:[#allocation2 + $0x50] sm:$0xff] %vm559, %v531
      %574 = vst.msk [vmem:[#allocation2 + $0x58] sm:$0xff] %vm559, %v532
      %575 = vst.msk [vmem:[#allocation2 + $0x60] sm:$0xff] %vm559, 0.0
      %576 = vst.msk [vmem:[#allocation2 + $0x68] sm:$0xff] %vm559, %v533
      %577 = vst.msk [vmem:[#allocation2 + $0x70] sm:$0xff] %vm559, %v534
      %578 = vst.msk [vmem:[#allocation2 + $0x78] sm:$0xff] %vm559, 0.0
      %579 = vst.msk [vmem:[#allocation2 + $0x80] sm:$0xff] %vm559, %v535
      %580 = vst.msk [vmem:[#allocation2 + $0x88] sm:$0xff] %vm559, %v536
      %581 = vst.msk [vmem:[#allocation2 + $0x90] sm:$0xff] %vm559, 0.0
      %582 = vst.msk [vmem:[#allocation2 + $0x98] sm:$0xff] %vm559, %v537
      %583 = vst.msk [vmem:[#allocation2 + $0xa0] sm:$0xff] %vm559, %v538
      %584 = vst.msk [vmem:[#allocation2 + $0xa8] sm:$0xff] %vm559, 0.0
      %585 = vst.msk [vmem:[#allocation2 + $0xb0] sm:$0xff] %vm559, %v539
      %586 = vst.msk [vmem:[#allocation2 + $0xb8] sm:$0xff] %vm559, %v540
      %587 = vst.msk [vmem:[#allocation2 + $0xc0] sm:$0xff] %vm559, 0.0
      %588 = vst.msk [vmem:[#allocation2 + $0xc8] sm:$0xff] %vm559, %v541
      %589 = vst.msk [vmem:[#allocation2 + $0xd0] sm:$0xff] %vm559, %v542
      %590 = vst.msk [vmem:[#allocation2 + $0xd8] sm:$0xff] %vm559, 0.0
      %591 = vst.msk [vmem:[#allocation2 + $0xe0] sm:$0xff] %vm559, %v543
      %592 = vst.msk [vmem:[#allocation2 + $0xe8] sm:$0xff] %vm559, %v544
      %593 = vst.msk [vmem:[#allocation2 + $0xf0] sm:$0xff] %vm559, 0.0
      %594 = vst.msk [vmem:[#allocation2 + $0xf8] sm:$0xff] %vm559, %v545
      %595 = vst.msk [vmem:[#allocation2 + $0x100] sm:$0xff] %vm559, %v546
      %596 = vst.msk [vmem:[#allocation2 + $0x108] sm:$0xff] %vm559, 0.0
      %597 = vst.msk [vmem:[#allocation2 + $0x110] sm:$0xff] %vm559, %v547
      %598 = vst.msk [vmem:[#allocation2 + $0x118] sm:$0xff] %vm559, %v548
      %599 = vst.msk [vmem:[#allocation2 + $0x120] sm:$0xff] %vm559, 0.0
      %600 = vst.msk [vmem:[#allocation2 + $0x128] sm:$0xff] %vm559, %v549
      %601 = vst.msk [vmem:[#allocation2 + $0x130] sm:$0xff] %vm559, %v550
      %602 = vst.msk [vmem:[#allocation2 + $0x138] sm:$0xff] %vm559, 0.0
      %603 = vst.msk [vmem:[#allocation2 + $0x140] sm:$0xff] %vm559, %v551
      %604 = vst.msk [vmem:[#allocation2 + $0x148] sm:$0xff] %vm559, %v552
      %605 = vst.msk [vmem:[#allocation2 + $0x150] sm:$0xff] %vm559, 0.0
      %606 = vst.msk [vmem:[#allocation2 + $0x158] sm:$0xff] %vm559, %v553
      %607 = vst.msk [vmem:[#allocation2 + $0x160] sm:$0xff] %vm559, %v554
      %608 = vst.msk [vmem:[#allocation2 + $0x168] sm:$0xff] %vm559, 0.0
      %609 = vst.msk [vmem:[#allocation2 + $0x170] sm:$0xff] %vm559, %v555
      %610 = vst.msk [vmem:[#allocation2 + $0x178] sm:$0xff] %vm559, %v556
      %611 = vst.msk [vmem:[#allocation2 + $0x180] sm:$0xff] %vm559, 0.0
      %612 = vst.msk [vmem:[#allocation2 + $0x188] sm:$0xff] %vm559, %v557
      %613 = vst.msk [vmem:[#allocation2 + $0x190] sm:$0xff] %vm559, %v558
      %614 = vst.msk [vmem:[#allocation2 + $0x198] sm:$0xff] %vm559, 0.0
      %v615 = vld [vmem:[#allocation2] sm:$0xff]
      %v616 = vld [vmem:[#allocation2 + $0x8] sm:$0xff]
      %v617 = vld [vmem:[#allocation2 + $0x10] sm:$0xff]
      %v618 = vld [vmem:[#allocation2 + $0x18] sm:$0xff]
      %v619 = vld [vmem:[#allocation2 + $0x20] sm:$0xff]
      %v620 = vld [vmem:[#allocation2 + $0x28] sm:$0xff]
      %v621 = vld [vmem:[#allocation2 + $0x30] sm:$0xff]
      %v622 = vld [vmem:[#allocation2 + $0x38] sm:$0xff]
      %v623 = vld [vmem:[#allocation2 + $0x40] sm:$0xff]
      %v624 = vld [vmem:[#allocation2 + $0x48] sm:$0xff]
      %v625 = vld [vmem:[#allocation2 + $0x50] sm:$0xff]
      %v626 = vld [vmem:[#allocation2 + $0x58] sm:$0xff]
      %v627 = vld [vmem:[#allocation2 + $0x60] sm:$0xff]
      %v628 = vld [vmem:[#allocation2 + $0x68] sm:$0xff]
      %v629 = vld [vmem:[#allocation2 + $0x70] sm:$0xff]
      %v630 = vld [vmem:[#allocation2 + $0x78] sm:$0xff]
      %v631 = vld [vmem:[#allocation2 + $0x80] sm:$0xff]
      %v632 = vld [vmem:[#allocation2 + $0x88] sm:$0xff]
      %v633 = vld [vmem:[#allocation2 + $0x90] sm:$0xff]
      %v634 = vld [vmem:[#allocation2 + $0x98] sm:$0xff]
      %v635 = vld [vmem:[#allocation2 + $0xa0] sm:$0xff]
      %v636 = vld [vmem:[#allocation2 + $0xa8] sm:$0xff]
      %v637 = vld [vmem:[#allocation2 + $0xb0] sm:$0xff]
      %v638 = vld [vmem:[#allocation2 + $0xb8] sm:$0xff]
      %v639 = vld [vmem:[#allocation2 + $0xc0] sm:$0xff]
      %v640 = vld [vmem:[#allocation2 + $0xc8] sm:$0xff]
      %v641 = vld [vmem:[#allocation2 + $0xd0] sm:$0xff]
      %v642 = vld [vmem:[#allocation2 + $0xd8] sm:$0xff]
      %v643 = vld [vmem:[#allocation2 + $0xe0] sm:$0xff]
      %v644 = vld [vmem:[#allocation2 + $0xe8] sm:$0xff]
      %v645 = vld [vmem:[#allocation2 + $0xf0] sm:$0xff]
      %v646 = vld [vmem:[#allocation2 + $0xf8] sm:$0xff]
      %v647 = vld [vmem:[#allocation2 + $0x100] sm:$0xff]
      %v648 = vld [vmem:[#allocation2 + $0x108] sm:$0xff]
      %v649 = vld [vmem:[#allocation2 + $0x110] sm:$0xff]
      %v650 = vld [vmem:[#allocation2 + $0x118] sm:$0xff]
      %v651 = vld [vmem:[#allocation2 + $0x120] sm:$0xff]
      %v652 = vld [vmem:[#allocation2 + $0x128] sm:$0xff]
      %v653 = vld [vmem:[#allocation2 + $0x130] sm:$0xff]
      %v654 = vld [vmem:[#allocation2 + $0x138] sm:$0xff]
      %v655 = vld [vmem:[#allocation2 + $0x140] sm:$0xff]
      %v656 = vld [vmem:[#allocation2 + $0x148] sm:$0xff]
      %v657 = vld [vmem:[#allocation2 + $0x150] sm:$0xff]
      %v658 = vld [vmem:[#allocation2 + $0x158] sm:$0xff]
      %v659 = vld [vmem:[#allocation2 + $0x160] sm:$0xff]
      %v660 = vld [vmem:[#allocation2 + $0x168] sm:$0xff]
      %v661 = vld [vmem:[#allocation2 + $0x170] sm:$0xff]
      %v662 = vld [vmem:[#allocation2 + $0x178] sm:$0xff]
      %v663 = vld [vmem:[#allocation2 + $0x180] sm:$0xff]
      %v664 = vld [vmem:[#allocation2 + $0x188] sm:$0xff]
      %v665 = vld [vmem:[#allocation2 + $0x190] sm:$0xff]
      %v666 = vld [vmem:[#allocation2 + $0x198] sm:$0xff]
      %v667 = vld [vmem:[#allocation2 + $0x1a0] sm:$0xff]
      %v668 = vld [vmem:[#allocation2 + $0x1a8] sm:$0xff]
      %v669 = vld [vmem:[#allocation2 + $0x1b0] sm:$0xff]
      %v670 = vld [vmem:[%s3] sm:$0xf]
      %v672 = vsel %vm559, %v615, 0
      %v675 = vsel %vm559, %v616, 0
      %v678 = vsel %vm559, %v617, 0
      %v681 = vsel %vm559, %v618, 0
      %v684 = vsel %vm559, %v619, 0
      %v687 = vsel %vm559, %v620, 0
      %v690 = vsel %vm559, %v621, 0
      %v693 = vsel %vm559, %v622, 0
      %v696 = vsel %vm559, %v623, 0
      %v699 = vsel %vm559, %v624, 0
      %v702 = vsel %vm559, %v625, 0
      %v705 = vsel %vm559, %v626, 0
      %v708 = vsel %vm559, %v627, 0
      %v711 = vsel %vm559, %v628, 0
      %v714 = vsel %vm559, %v629, 0
      %v717 = vsel %vm559, %v630, 0
      %v720 = vsel %vm559, %v631, 0
      %v723 = vsel %vm559, %v632, 0
      %v726 = vsel %vm559, %v633, 0
      %v729 = vsel %vm559, %v634, 0
      %v732 = vsel %vm559, %v635, 0
      %v735 = vsel %vm559, %v636, 0
      %v738 = vsel %vm559, %v637, 0
      %v741 = vsel %vm559, %v638, 0
      %v744 = vsel %vm559, %v639, 0
      %v747 = vsel %vm559, %v640, 0
      %v750 = vsel %vm559, %v641, 0
      %v753 = vsel %vm559, %v642, 0
      %v756 = vsel %vm559, %v643, 0
      %v759 = vsel %vm559, %v644, 0
      %v762 = vsel %vm559, %v645, 0
      %v765 = vsel %vm559, %v646, 0
      %v768 = vsel %vm559, %v647, 0
      %v771 = vsel %vm559, %v648, 0
      %v774 = vsel %vm559, %v649, 0
      %v777 = vsel %vm559, %v650, 0
      %v780 = vsel %vm559, %v651, 0
      %v783 = vsel %vm559, %v652, 0
      %v786 = vsel %vm559, %v653, 0
      %v789 = vsel %vm559, %v654, 0
      %v792 = vsel %vm559, %v655, 0
      %v795 = vsel %vm559, %v656, 0
      %v798 = vsel %vm559, %v657, 0
      %v801 = vsel %vm559, %v658, 0
      %v804 = vsel %vm559, %v659, 0
      %v807 = vsel %vm559, %v660, 0
      %v810 = vsel %vm559, %v661, 0
      %v813 = vsel %vm559, %v662, 0
      %v816 = vsel %vm559, %v663, 0
      %v819 = vsel %vm559, %v664, 0
      %v822 = vsel %vm559, %v665, 0
      %v825 = vsel %vm559, %v666, 0
      %v828 = vsel %vm559, %v667, 0
      %v831 = vsel %vm559, %v668, 0
      %v834 = vsel %vm559, %v669, 0
      %vm836 = vcmask 1043456
      %v838 = vsel %vm836, %v670, 0
      %840 = vmatpush.msra.mxu0 0.0
      %841 = vmatpush.msra.mxu0 0.0
      %842 = vmatpush.msra.mxu0 0.0
      %843 = vmatpush.msra.mxu0 0.0
      %844 = vmatpush.msra.mxu0 0.0
      %845 = vmatpush.msra.mxu0 0.0
      %846 = vmatpush.msra.mxu0 0.0
      %847 = vmatpush.msra.mxu0 0.0
      %848 = vmatpush.msra.mxu0 0.0
      %849 = vmatpush.msra.mxu0 0.0
      %850 = vmatpush.msra.mxu0 0.0
      %851 = vmatpush.msra.mxu0 0.0
      %852 = vmatpush.msra.mxu0 0.0
      %853 = vmatpush.msra.mxu0 0.0
      %854 = vmatpush.msra.mxu0 0.0
      %855 = vmatpush.msra.mxu0 %v838
      %856 = vmatmul.f32.gmra.mxu0 %v672
      %v857 = vpop.f32.mrf.mxu0
      %v858 = vadd.f32 0.0, %v857
      %859 = vmatmul.f32.gmra.mxu0 %v675
      %v860 = vpop.f32.mrf.mxu0
      %v861 = vadd.f32 0.0, %v860
      %862 = vmatmul.f32.gmra.mxu0 %v678
      %v863 = vpop.f32.mrf.mxu0
      %v864 = vadd.f32 0.0, %v863
      %865 = vmatmul.f32.gmra.mxu0 %v681
      %v866 = vpop.f32.mrf.mxu0
      %v867 = vadd.f32 0.0, %v866
      %868 = vmatmul.f32.gmra.mxu0 %v684
      %v869 = vpop.f32.mrf.mxu0
      %v870 = vadd.f32 0.0, %v869
      %871 = vmatmul.f32.gmra.mxu0 %v687
      %v872 = vpop.f32.mrf.mxu0
      %v873 = vadd.f32 0.0, %v872
      %874 = vmatmul.f32.gmra.mxu0 %v690
      %v875 = vpop.f32.mrf.mxu0
      %v876 = vadd.f32 0.0, %v875
      %877 = vmatmul.f32.gmra.mxu0 %v693
      %v878 = vpop.f32.mrf.mxu0
      %v879 = vadd.f32 0.0, %v878
      %880 = vmatmul.f32.gmra.mxu0 %v696
      %v881 = vpop.f32.mrf.mxu0
      %v882 = vadd.f32 0.0, %v881
      %883 = vmatmul.f32.gmra.mxu0 %v699
      %v884 = vpop.f32.mrf.mxu0
      %v885 = vadd.f32 0.0, %v884
      %886 = vmatmul.f32.gmra.mxu0 %v702
      %v887 = vpop.f32.mrf.mxu0
      %v888 = vadd.f32 0.0, %v887
      %889 = vmatmul.f32.gmra.mxu0 %v705
      %v890 = vpop.f32.mrf.mxu0
      %v891 = vadd.f32 0.0, %v890
      %892 = vmatmul.f32.gmra.mxu0 %v708
      %v893 = vpop.f32.mrf.mxu0
      %v894 = vadd.f32 0.0, %v893
      %895 = vmatmul.f32.gmra.mxu0 %v711
      %v896 = vpop.f32.mrf.mxu0
      %v897 = vadd.f32 0.0, %v896
      %898 = vmatmul.f32.gmra.mxu0 %v714
      %v899 = vpop.f32.mrf.mxu0
      %v900 = vadd.f32 0.0, %v899
      %901 = vmatmul.f32.gmra.mxu0 %v717
      %v902 = vpop.f32.mrf.mxu0
      %v903 = vadd.f32 0.0, %v902
      %904 = vmatmul.f32.gmra.mxu0 %v720
      %v905 = vpop.f32.mrf.mxu0
      %v906 = vadd.f32 0.0, %v905
      %907 = vmatmul.f32.gmra.mxu0 %v723
      %v908 = vpop.f32.mrf.mxu0
      %v909 = vadd.f32 0.0, %v908
      %910 = vmatmul.f32.gmra.mxu0 %v726
      %v911 = vpop.f32.mrf.mxu0
      %v912 = vadd.f32 0.0, %v911
      %913 = vmatmul.f32.gmra.mxu0 %v729
      %v914 = vpop.f32.mrf.mxu0
      %v915 = vadd.f32 0.0, %v914
      %916 = vmatmul.f32.gmra.mxu0 %v732
      %v917 = vpop.f32.mrf.mxu0
      %v918 = vadd.f32 0.0, %v917
      %919 = vmatmul.f32.gmra.mxu0 %v735
      %v920 = vpop.f32.mrf.mxu0
      %v921 = vadd.f32 0.0, %v920
      %922 = vmatmul.f32.gmra.mxu0 %v738
      %v923 = vpop.f32.mrf.mxu0
      %v924 = vadd.f32 0.0, %v923
      %925 = vmatmul.f32.gmra.mxu0 %v741
      %v926 = vpop.f32.mrf.mxu0
      %v927 = vadd.f32 0.0, %v926
      %928 = vmatmul.f32.gmra.mxu0 %v744
      %v929 = vpop.f32.mrf.mxu0
      %v930 = vadd.f32 0.0, %v929
      %931 = vmatmul.f32.gmra.mxu0 %v747
      %v932 = vpop.f32.mrf.mxu0
      %v933 = vadd.f32 0.0, %v932
      %934 = vmatmul.f32.gmra.mxu0 %v750
      %v935 = vpop.f32.mrf.mxu0
      %v936 = vadd.f32 0.0, %v935
      %937 = vmatmul.f32.gmra.mxu0 %v753
      %v938 = vpop.f32.mrf.mxu0
      %v939 = vadd.f32 0.0, %v938
      %940 = vmatmul.f32.gmra.mxu0 %v756
      %v941 = vpop.f32.mrf.mxu0
      %v942 = vadd.f32 0.0, %v941
      %943 = vmatmul.f32.gmra.mxu0 %v759
      %v944 = vpop.f32.mrf.mxu0
      %v945 = vadd.f32 0.0, %v944
      %946 = vmatmul.f32.gmra.mxu0 %v762
      %v947 = vpop.f32.mrf.mxu0
      %v948 = vadd.f32 0.0, %v947
      %949 = vmatmul.f32.gmra.mxu0 %v765
      %v950 = vpop.f32.mrf.mxu0
      %v951 = vadd.f32 0.0, %v950
      %952 = vmatmul.f32.gmra.mxu0 %v768
      %v953 = vpop.f32.mrf.mxu0
      %v954 = vadd.f32 0.0, %v953
      %955 = vmatmul.f32.gmra.mxu0 %v771
      %v956 = vpop.f32.mrf.mxu0
      %v957 = vadd.f32 0.0, %v956
      %958 = vmatmul.f32.gmra.mxu0 %v774
      %v959 = vpop.f32.mrf.mxu0
      %v960 = vadd.f32 0.0, %v959
      %961 = vmatmul.f32.gmra.mxu0 %v777
      %v962 = vpop.f32.mrf.mxu0
      %v963 = vadd.f32 0.0, %v962
      %964 = vmatmul.f32.gmra.mxu0 %v780
      %v965 = vpop.f32.mrf.mxu0
      %v966 = vadd.f32 0.0, %v965
      %967 = vmatmul.f32.gmra.mxu0 %v783
      %v968 = vpop.f32.mrf.mxu0
      %v969 = vadd.f32 0.0, %v968
      %970 = vmatmul.f32.gmra.mxu0 %v786
      %v971 = vpop.f32.mrf.mxu0
      %v972 = vadd.f32 0.0, %v971
      %973 = vmatmul.f32.gmra.mxu0 %v789
      %v974 = vpop.f32.mrf.mxu0
      %v975 = vadd.f32 0.0, %v974
      %976 = vmatmul.f32.gmra.mxu0 %v792
      %v977 = vpop.f32.mrf.mxu0
      %v978 = vadd.f32 0.0, %v977
      %979 = vmatmul.f32.gmra.mxu0 %v795
      %v980 = vpop.f32.mrf.mxu0
      %v981 = vadd.f32 0.0, %v980
      %982 = vmatmul.f32.gmra.mxu0 %v798
      %v983 = vpop.f32.mrf.mxu0
      %v984 = vadd.f32 0.0, %v983
      %985 = vmatmul.f32.gmra.mxu0 %v801
      %v986 = vpop.f32.mrf.mxu0
      %v987 = vadd.f32 0.0, %v986
      %988 = vmatmul.f32.gmra.mxu0 %v804
      %v989 = vpop.f32.mrf.mxu0
      %v990 = vadd.f32 0.0, %v989
      %991 = vmatmul.f32.gmra.mxu0 %v807
      %v992 = vpop.f32.mrf.mxu0
      %v993 = vadd.f32 0.0, %v992
      %994 = vmatmul.f32.gmra.mxu0 %v810
      %v995 = vpop.f32.mrf.mxu0
      %v996 = vadd.f32 0.0, %v995
      %997 = vmatmul.f32.gmra.mxu0 %v813
      %v998 = vpop.f32.mrf.mxu0
      %v999 = vadd.f32 0.0, %v998
      %1000 = vmatmul.f32.gmra.mxu0 %v816
      %v1001 = vpop.f32.mrf.mxu0
      %v1002 = vadd.f32 0.0, %v1001
      %1003 = vmatmul.f32.gmra.mxu0 %v819
      %v1004 = vpop.f32.mrf.mxu0
      %v1005 = vadd.f32 0.0, %v1004
      %1006 = vmatmul.f32.gmra.mxu0 %v822
      %v1007 = vpop.f32.mrf.mxu0
      %v1008 = vadd.f32 0.0, %v1007
      %1009 = vmatmul.f32.gmra.mxu0 %v825
      %v1010 = vpop.f32.mrf.mxu0
      %v1011 = vadd.f32 0.0, %v1010
      %1012 = vmatmul.f32.gmra.mxu0 %v828
      %v1013 = vpop.f32.mrf.mxu0
      %v1014 = vadd.f32 0.0, %v1013
      %1015 = vmatmul.f32.gmra.mxu0 %v831
      %v1016 = vpop.f32.mrf.mxu0
      %v1017 = vadd.f32 0.0, %v1016
      %1018 = vmatmul.f32.gmra.mxu0 %v834
      %v1019 = vpop.f32.mrf.mxu0
      %v1020 = vadd.f32 0.0, %v1019
      %1021 = vdwg.mxu0
      %vm1069 = vcmask 1046528
      %v1070 = vrot.slane %v861, 1
      %v1071 = vrot.slane %v864, 1
      %v1072 = vsel %vm1069, %v1070, %v1071
      %v1073 = vrot.slane %v867, 1
      %v1074 = vsel %vm1069, %v1071, %v1073
      %v1075 = vrot.slane %v870, 1
      %v1076 = vsel %vm1069, %v1073, %v1075
      %v1077 = vrot.slane %v873, 1
      %v1078 = vsel %vm1069, %v1075, %v1077
      %v1079 = vrot.slane %v876, 1
      %v1080 = vsel %vm1069, %v1077, %v1079
      %v1081 = vrot.slane %v879, 1
      %v1082 = vsel %vm1069, %v1079, %v1081
      %v1083 = vrot.slane %v882, 1
      %v1084 = vsel %vm1069, %v1081, %v1083
      %v1085 = vrot.slane %v885, 1
      %v1086 = vsel %vm1069, %v1083, %v1085
      %v1087 = vrot.slane %v888, 1
      %v1088 = vsel %vm1069, %v1085, %v1087
      %v1089 = vrot.slane %v891, 1
      %v1090 = vsel %vm1069, %v1087, %v1089
      %v1091 = vrot.slane %v894, 1
      %v1092 = vsel %vm1069, %v1089, %v1091
      %v1093 = vrot.slane %v897, 1
      %v1094 = vsel %vm1069, %v1091, %v1093
      %v1095 = vrot.slane %v900, 1
      %v1096 = vsel %vm1069, %v1093, %v1095
      %v1097 = vrot.slane %v903, 1
      %v1098 = vsel %vm1069, %v1095, %v1097
      %v1099 = vrot.slane %v906, 1
      %v1100 = vsel %vm1069, %v1097, %v1099
      %v1101 = vrot.slane %v909, 1
      %v1102 = vsel %vm1069, %v1099, %v1101
      %v1103 = vrot.slane %v912, 1
      %v1104 = vsel %vm1069, %v1101, %v1103
      %v1105 = vrot.slane %v915, 1
      %v1106 = vsel %vm1069, %v1103, %v1105
      %v1107 = vrot.slane %v918, 1
      %v1108 = vsel %vm1069, %v1105, %v1107
      %v1109 = vrot.slane %v921, 1
      %v1110 = vsel %vm1069, %v1107, %v1109
      %v1111 = vrot.slane %v924, 1
      %v1112 = vsel %vm1069, %v1109, %v1111
      %v1113 = vrot.slane %v927, 1
      %v1114 = vsel %vm1069, %v1111, %v1113
      %v1115 = vrot.slane %v930, 1
      %v1116 = vsel %vm1069, %v1113, %v1115
      %v1117 = vrot.slane %v933, 1
      %v1118 = vsel %vm1069, %v1115, %v1117
      %v1119 = vrot.slane %v936, 1
      %v1120 = vsel %vm1069, %v1117, %v1119
      %v1121 = vrot.slane %v939, 1
      %v1122 = vsel %vm1069, %v1119, %v1121
      %v1123 = vrot.slane %v942, 1
      %v1124 = vsel %vm1069, %v1121, %v1123
      %v1125 = vrot.slane %v945, 1
      %v1126 = vsel %vm1069, %v1123, %v1125
      %v1127 = vrot.slane %v948, 1
      %v1128 = vsel %vm1069, %v1125, %v1127
      %v1129 = vrot.slane %v951, 1
      %v1130 = vsel %vm1069, %v1127, %v1129
      %v1131 = vrot.slane %v954, 1
      %v1132 = vsel %vm1069, %v1129, %v1131
      %v1133 = vrot.slane %v957, 1
      %v1134 = vsel %vm1069, %v1131, %v1133
      %v1135 = vrot.slane %v960, 1
      %v1136 = vsel %vm1069, %v1133, %v1135
      %v1137 = vrot.slane %v963, 1
      %v1138 = vsel %vm1069, %v1135, %v1137
      %v1139 = vrot.slane %v966, 1
      %v1140 = vsel %vm1069, %v1137, %v1139
      %v1141 = vrot.slane %v969, 1
      %v1142 = vsel %vm1069, %v1139, %v1141
      %v1143 = vrot.slane %v972, 1
      %v1144 = vsel %vm1069, %v1141, %v1143
      %v1145 = vrot.slane %v975, 1
      %v1146 = vsel %vm1069, %v1143, %v1145
      %v1147 = vrot.slane %v978, 1
      %v1148 = vsel %vm1069, %v1145, %v1147
      %v1149 = vrot.slane %v981, 1
      %v1150 = vsel %vm1069, %v1147, %v1149
      %v1151 = vrot.slane %v984, 1
      %v1152 = vsel %vm1069, %v1149, %v1151
      %v1153 = vrot.slane %v987, 1
      %v1154 = vsel %vm1069, %v1151, %v1153
      %v1155 = vrot.slane %v990, 1
      %v1156 = vsel %vm1069, %v1153, %v1155
      %v1157 = vrot.slane %v993, 1
      %v1158 = vsel %vm1069, %v1155, %v1157
      %v1159 = vrot.slane %v996, 1
      %v1160 = vsel %vm1069, %v1157, %v1159
      %v1161 = vrot.slane %v999, 1
      %v1162 = vsel %vm1069, %v1159, %v1161
      %1163 = vrot.lane.b32.xlu0 %v1070, 124
      %v1164 = vpop.permute.xlu0 %1163
      %1165 = vrot.lane.b32.xlu0 %v1072, 124
      %v1166 = vpop.permute.xlu0 %1165
      %1167 = vrot.lane.b32.xlu0 %v1074, 124
      %v1168 = vpop.permute.xlu0 %1167
      %1169 = vrot.lane.b32.xlu0 %v1076, 124
      %v1170 = vpop.permute.xlu0 %1169
      %1171 = vrot.lane.b32.xlu0 %v1078, 124
      %v1172 = vpop.permute.xlu0 %1171
      %1173 = vrot.lane.b32.xlu0 %v1080, 124
      %v1174 = vpop.permute.xlu0 %1173
      %1175 = vrot.lane.b32.xlu0 %v1082, 124
      %v1176 = vpop.permute.xlu0 %1175
      %1177 = vrot.lane.b32.xlu0 %v1084, 124
      %v1178 = vpop.permute.xlu0 %1177
      %1179 = vrot.lane.b32.xlu0 %v1086, 124
      %v1180 = vpop.permute.xlu0 %1179
      %1181 = vrot.lane.b32.xlu0 %v1088, 124
      %v1182 = vpop.permute.xlu0 %1181
      %1183 = vrot.lane.b32.xlu0 %v1090, 124
      %v1184 = vpop.permute.xlu0 %1183
      %1185 = vrot.lane.b32.xlu0 %v1092, 124
      %v1186 = vpop.permute.xlu0 %1185
      %1187 = vrot.lane.b32.xlu0 %v1094, 124
      %v1188 = vpop.permute.xlu0 %1187
      %1189 = vrot.lane.b32.xlu0 %v1096, 124
      %v1190 = vpop.permute.xlu0 %1189
      %1191 = vrot.lane.b32.xlu0 %v1098, 124
      %v1192 = vpop.permute.xlu0 %1191
      %1193 = vrot.lane.b32.xlu0 %v1100, 124
      %v1194 = vpop.permute.xlu0 %1193
      %1195 = vrot.lane.b32.xlu0 %v1102, 124
      %v1196 = vpop.permute.xlu0 %1195
      %1197 = vrot.lane.b32.xlu0 %v1104, 124
      %v1198 = vpop.permute.xlu0 %1197
      %1199 = vrot.lane.b32.xlu0 %v1106, 124
      %v1200 = vpop.permute.xlu0 %1199
      %1201 = vrot.lane.b32.xlu0 %v1108, 124
      %v1202 = vpop.permute.xlu0 %1201
      %1203 = vrot.lane.b32.xlu0 %v1110, 124
      %v1204 = vpop.permute.xlu0 %1203
      %1205 = vrot.lane.b32.xlu0 %v1112, 124
      %v1206 = vpop.permute.xlu0 %1205
      %1207 = vrot.lane.b32.xlu0 %v1114, 124
      %v1208 = vpop.permute.xlu0 %1207
      %1209 = vrot.lane.b32.xlu0 %v1116, 124
      %v1210 = vpop.permute.xlu0 %1209
      %1211 = vrot.lane.b32.xlu0 %v1118, 124
      %v1212 = vpop.permute.xlu0 %1211
      %1213 = vrot.lane.b32.xlu0 %v1120, 124
      %v1214 = vpop.permute.xlu0 %1213
      %1215 = vrot.lane.b32.xlu0 %v1122, 124
      %v1216 = vpop.permute.xlu0 %1215
      %1217 = vrot.lane.b32.xlu0 %v1124, 124
      %v1218 = vpop.permute.xlu0 %1217
      %1219 = vrot.lane.b32.xlu0 %v1126, 124
      %v1220 = vpop.permute.xlu0 %1219
      %1221 = vrot.lane.b32.xlu0 %v1128, 124
      %v1222 = vpop.permute.xlu0 %1221
      %1223 = vrot.lane.b32.xlu0 %v1130, 124
      %v1224 = vpop.permute.xlu0 %1223
      %1225 = vrot.lane.b32.xlu0 %v1132, 124
      %v1226 = vpop.permute.xlu0 %1225
      %1227 = vrot.lane.b32.xlu0 %v1134, 124
      %v1228 = vpop.permute.xlu0 %1227
      %1229 = vrot.lane.b32.xlu0 %v1136, 124
      %v1230 = vpop.permute.xlu0 %1229
      %1231 = vrot.lane.b32.xlu0 %v1138, 124
      %v1232 = vpop.permute.xlu0 %1231
      %1233 = vrot.lane.b32.xlu0 %v1140, 124
      %v1234 = vpop.permute.xlu0 %1233
      %1235 = vrot.lane.b32.xlu0 %v1142, 124
      %v1236 = vpop.permute.xlu0 %1235
      %1237 = vrot.lane.b32.xlu0 %v1144, 124
      %v1238 = vpop.permute.xlu0 %1237
      %1239 = vrot.lane.b32.xlu0 %v1146, 124
      %v1240 = vpop.permute.xlu0 %1239
      %1241 = vrot.lane.b32.xlu0 %v1148, 124
      %v1242 = vpop.permute.xlu0 %1241
      %1243 = vrot.lane.b32.xlu0 %v1150, 124
      %v1244 = vpop.permute.xlu0 %1243
      %1245 = vrot.lane.b32.xlu0 %v1152, 124
      %v1246 = vpop.permute.xlu0 %1245
      %1247 = vrot.lane.b32.xlu0 %v1154, 124
      %v1248 = vpop.permute.xlu0 %1247
      %1249 = vrot.lane.b32.xlu0 %v1156, 124
      %v1250 = vpop.permute.xlu0 %1249
      %1251 = vrot.lane.b32.xlu0 %v1158, 124
      %v1252 = vpop.permute.xlu0 %1251
      %1253 = vrot.lane.b32.xlu0 %v1160, 124
      %v1254 = vpop.permute.xlu0 %1253
      %1255 = vrot.lane.b32.xlu0 %v1162, 124
      %v1256 = vpop.permute.xlu0 %1255
      %1257 = vrot.lane.b32.xlu0 %v1161, 124
      %v1258 = vpop.permute.xlu0 %1257
      %v1307 = vadd.f32 %v858, %v1164
      %v1308 = vadd.f32 %v861, %v1166
      %v1309 = vadd.f32 %v864, %v1168
      %v1310 = vadd.f32 %v867, %v1170
      %v1311 = vadd.f32 %v870, %v1172
      %v1312 = vadd.f32 %v873, %v1174
      %v1313 = vadd.f32 %v876, %v1176
      %v1314 = vadd.f32 %v879, %v1178
      %v1315 = vadd.f32 %v882, %v1180
      %v1316 = vadd.f32 %v885, %v1182
      %v1317 = vadd.f32 %v888, %v1184
      %v1318 = vadd.f32 %v891, %v1186
      %v1319 = vadd.f32 %v894, %v1188
      %v1320 = vadd.f32 %v897, %v1190
      %v1321 = vadd.f32 %v900, %v1192
      %v1322 = vadd.f32 %v903, %v1194
      %v1323 = vadd.f32 %v906, %v1196
      %v1324 = vadd.f32 %v909, %v1198
      %v1325 = vadd.f32 %v912, %v1200
      %v1326 = vadd.f32 %v915, %v1202
      %v1327 = vadd.f32 %v918, %v1204
      %v1328 = vadd.f32 %v921, %v1206
      %v1329 = vadd.f32 %v924, %v1208
      %v1330 = vadd.f32 %v927, %v1210
      %v1331 = vadd.f32 %v930, %v1212
      %v1332 = vadd.f32 %v933, %v1214
      %v1333 = vadd.f32 %v936, %v1216
      %v1334 = vadd.f32 %v939, %v1218
      %v1335 = vadd.f32 %v942, %v1220
      %v1336 = vadd.f32 %v945, %v1222
      %v1337 = vadd.f32 %v948, %v1224
      %v1338 = vadd.f32 %v951, %v1226
      %v1339 = vadd.f32 %v954, %v1228
      %v1340 = vadd.f32 %v957, %v1230
      %v1341 = vadd.f32 %v960, %v1232
      %v1342 = vadd.f32 %v963, %v1234
      %v1343 = vadd.f32 %v966, %v1236
      %v1344 = vadd.f32 %v969, %v1238
      %v1345 = vadd.f32 %v972, %v1240
      %v1346 = vadd.f32 %v975, %v1242
      %v1347 = vadd.f32 %v978, %v1244
      %v1348 = vadd.f32 %v981, %v1246
      %v1349 = vadd.f32 %v984, %v1248
      %v1350 = vadd.f32 %v987, %v1250
      %v1351 = vadd.f32 %v990, %v1252
      %v1352 = vadd.f32 %v993, %v1254
      %v1353 = vadd.f32 %v996, %v1256
      %v1354 = vadd.f32 %v999, %v1258
      %vm1356 = vcmask 1045504
      %v1357 = vrot.slane %v861, 2
      %v1358 = vrot.slane %v864, 2
      %v1359 = vsel %vm1356, %v1357, %v1358
      %v1360 = vrot.slane %v867, 2
      %v1361 = vsel %vm1356, %v1358, %v1360
      %v1362 = vrot.slane %v870, 2
      %v1363 = vsel %vm1356, %v1360, %v1362
      %v1364 = vrot.slane %v873, 2
      %v1365 = vsel %vm1356, %v1362, %v1364
      %v1366 = vrot.slane %v876, 2
      %v1367 = vsel %vm1356, %v1364, %v1366
      %v1368 = vrot.slane %v879, 2
      %v1369 = vsel %vm1356, %v1366, %v1368
      %v1370 = vrot.slane %v882, 2
      %v1371 = vsel %vm1356, %v1368, %v1370
      %v1372 = vrot.slane %v885, 2
      %v1373 = vsel %vm1356, %v1370, %v1372
      %v1374 = vrot.slane %v888, 2
      %v1375 = vsel %vm1356, %v1372, %v1374
      %v1376 = vrot.slane %v891, 2
      %v1377 = vsel %vm1356, %v1374, %v1376
      %v1378 = vrot.slane %v894, 2
      %v1379 = vsel %vm1356, %v1376, %v1378
      %v1380 = vrot.slane %v897, 2
      %v1381 = vsel %vm1356, %v1378, %v1380
      %v1382 = vrot.slane %v900, 2
      %v1383 = vsel %vm1356, %v1380, %v1382
      %v1384 = vrot.slane %v903, 2
      %v1385 = vsel %vm1356, %v1382, %v1384
      %v1386 = vrot.slane %v906, 2
      %v1387 = vsel %vm1356, %v1384, %v1386
      %v1388 = vrot.slane %v909, 2
      %v1389 = vsel %vm1356, %v1386, %v1388
      %v1390 = vrot.slane %v912, 2
      %v1391 = vsel %vm1356, %v1388, %v1390
      %v1392 = vrot.slane %v915, 2
      %v1393 = vsel %vm1356, %v1390, %v1392
      %v1394 = vrot.slane %v918, 2
      %v1395 = vsel %vm1356, %v1392, %v1394
      %v1396 = vrot.slane %v921, 2
      %v1397 = vsel %vm1356, %v1394, %v1396
      %v1398 = vrot.slane %v924, 2
      %v1399 = vsel %vm1356, %v1396, %v1398
      %v1400 = vrot.slane %v927, 2
      %v1401 = vsel %vm1356, %v1398, %v1400
      %v1402 = vrot.slane %v930, 2
      %v1403 = vsel %vm1356, %v1400, %v1402
      %v1404 = vrot.slane %v933, 2
      %v1405 = vsel %vm1356, %v1402, %v1404
      %v1406 = vrot.slane %v936, 2
      %v1407 = vsel %vm1356, %v1404, %v1406
      %v1408 = vrot.slane %v939, 2
      %v1409 = vsel %vm1356, %v1406, %v1408
      %v1410 = vrot.slane %v942, 2
      %v1411 = vsel %vm1356, %v1408, %v1410
      %v1412 = vrot.slane %v945, 2
      %v1413 = vsel %vm1356, %v1410, %v1412
      %v1414 = vrot.slane %v948, 2
      %v1415 = vsel %vm1356, %v1412, %v1414
      %v1416 = vrot.slane %v951, 2
      %v1417 = vsel %vm1356, %v1414, %v1416
      %v1418 = vrot.slane %v954, 2
      %v1419 = vsel %vm1356, %v1416, %v1418
      %v1420 = vrot.slane %v957, 2
      %v1421 = vsel %vm1356, %v1418, %v1420
      %v1422 = vrot.slane %v960, 2
      %v1423 = vsel %vm1356, %v1420, %v1422
      %v1424 = vrot.slane %v963, 2
      %v1425 = vsel %vm1356, %v1422, %v1424
      %v1426 = vrot.slane %v966, 2
      %v1427 = vsel %vm1356, %v1424, %v1426
      %v1428 = vrot.slane %v969, 2
      %v1429 = vsel %vm1356, %v1426, %v1428
      %v1430 = vrot.slane %v972, 2
      %v1431 = vsel %vm1356, %v1428, %v1430
      %v1432 = vrot.slane %v975, 2
      %v1433 = vsel %vm1356, %v1430, %v1432
      %v1434 = vrot.slane %v978, 2
      %v1435 = vsel %vm1356, %v1432, %v1434
      %v1436 = vrot.slane %v981, 2
      %v1437 = vsel %vm1356, %v1434, %v1436
      %v1438 = vrot.slane %v984, 2
      %v1439 = vsel %vm1356, %v1436, %v1438
      %v1440 = vrot.slane %v987, 2
      %v1441 = vsel %vm1356, %v1438, %v1440
      %v1442 = vrot.slane %v990, 2
      %v1443 = vsel %vm1356, %v1440, %v1442
      %v1444 = vrot.slane %v993, 2
      %v1445 = vsel %vm1356, %v1442, %v1444
      %v1446 = vrot.slane %v996, 2
      %v1447 = vsel %vm1356, %v1444, %v1446
      %v1448 = vrot.slane %v999, 2
      %v1449 = vsel %vm1356, %v1446, %v1448
      %v1450 = vrot.slane %v1002, 2
      %v1451 = vsel %vm1356, %v1448, %v1450
      %1452 = vrot.lane.b32.xlu0 %v1357, 120
      %v1453 = vpop.permute.xlu0 %1452
      %1454 = vrot.lane.b32.xlu0 %v1359, 120
      %v1455 = vpop.permute.xlu0 %1454
      %1456 = vrot.lane.b32.xlu0 %v1361, 120
      %v1457 = vpop.permute.xlu0 %1456
      %1458 = vrot.lane.b32.xlu0 %v1363, 120
      %v1459 = vpop.permute.xlu0 %1458
      %1460 = vrot.lane.b32.xlu0 %v1365, 120
      %v1461 = vpop.permute.xlu0 %1460
      %1462 = vrot.lane.b32.xlu0 %v1367, 120
      %v1463 = vpop.permute.xlu0 %1462
      %1464 = vrot.lane.b32.xlu0 %v1369, 120
      %v1465 = vpop.permute.xlu0 %1464
      %1466 = vrot.lane.b32.xlu0 %v1371, 120
      %v1467 = vpop.permute.xlu0 %1466
      %1468 = vrot.lane.b32.xlu0 %v1373, 120
      %v1469 = vpop.permute.xlu0 %1468
      %1470 = vrot.lane.b32.xlu0 %v1375, 120
      %v1471 = vpop.permute.xlu0 %1470
      %1472 = vrot.lane.b32.xlu0 %v1377, 120
      %v1473 = vpop.permute.xlu0 %1472
      %1474 = vrot.lane.b32.xlu0 %v1379, 120
      %v1475 = vpop.permute.xlu0 %1474
      %1476 = vrot.lane.b32.xlu0 %v1381, 120
      %v1477 = vpop.permute.xlu0 %1476
      %1478 = vrot.lane.b32.xlu0 %v1383, 120
      %v1479 = vpop.permute.xlu0 %1478
      %1480 = vrot.lane.b32.xlu0 %v1385, 120
      %v1481 = vpop.permute.xlu0 %1480
      %1482 = vrot.lane.b32.xlu0 %v1387, 120
      %v1483 = vpop.permute.xlu0 %1482
      %1484 = vrot.lane.b32.xlu0 %v1389, 120
      %v1485 = vpop.permute.xlu0 %1484
      %1486 = vrot.lane.b32.xlu0 %v1391, 120
      %v1487 = vpop.permute.xlu0 %1486
      %1488 = vrot.lane.b32.xlu0 %v1393, 120
      %v1489 = vpop.permute.xlu0 %1488
      %1490 = vrot.lane.b32.xlu0 %v1395, 120
      %v1491 = vpop.permute.xlu0 %1490
      %1492 = vrot.lane.b32.xlu0 %v1397, 120
      %v1493 = vpop.permute.xlu0 %1492
      %1494 = vrot.lane.b32.xlu0 %v1399, 120
      %v1495 = vpop.permute.xlu0 %1494
      %1496 = vrot.lane.b32.xlu0 %v1401, 120
      %v1497 = vpop.permute.xlu0 %1496
      %1498 = vrot.lane.b32.xlu0 %v1403, 120
      %v1499 = vpop.permute.xlu0 %1498
      %1500 = vrot.lane.b32.xlu0 %v1405, 120
      %v1501 = vpop.permute.xlu0 %1500
      %1502 = vrot.lane.b32.xlu0 %v1407, 120
      %v1503 = vpop.permute.xlu0 %1502
      %1504 = vrot.lane.b32.xlu0 %v1409, 120
      %v1505 = vpop.permute.xlu0 %1504
      %1506 = vrot.lane.b32.xlu0 %v1411, 120
      %v1507 = vpop.permute.xlu0 %1506
      %1508 = vrot.lane.b32.xlu0 %v1413, 120
      %v1509 = vpop.permute.xlu0 %1508
      %1510 = vrot.lane.b32.xlu0 %v1415, 120
      %v1511 = vpop.permute.xlu0 %1510
      %1512 = vrot.lane.b32.xlu0 %v1417, 120
      %v1513 = vpop.permute.xlu0 %1512
      %1514 = vrot.lane.b32.xlu0 %v1419, 120
      %v1515 = vpop.permute.xlu0 %1514
      %1516 = vrot.lane.b32.xlu0 %v1421, 120
      %v1517 = vpop.permute.xlu0 %1516
      %1518 = vrot.lane.b32.xlu0 %v1423, 120
      %v1519 = vpop.permute.xlu0 %1518
      %1520 = vrot.lane.b32.xlu0 %v1425, 120
      %v1521 = vpop.permute.xlu0 %1520
      %1522 = vrot.lane.b32.xlu0 %v1427, 120
      %v1523 = vpop.permute.xlu0 %1522
      %1524 = vrot.lane.b32.xlu0 %v1429, 120
      %v1525 = vpop.permute.xlu0 %1524
      %1526 = vrot.lane.b32.xlu0 %v1431, 120
      %v1527 = vpop.permute.xlu0 %1526
      %1528 = vrot.lane.b32.xlu0 %v1433, 120
      %v1529 = vpop.permute.xlu0 %1528
      %1530 = vrot.lane.b32.xlu0 %v1435, 120
      %v1531 = vpop.permute.xlu0 %1530
      %1532 = vrot.lane.b32.xlu0 %v1437, 120
      %v1533 = vpop.permute.xlu0 %1532
      %1534 = vrot.lane.b32.xlu0 %v1439, 120
      %v1535 = vpop.permute.xlu0 %1534
      %1536 = vrot.lane.b32.xlu0 %v1441, 120
      %v1537 = vpop.permute.xlu0 %1536
      %1538 = vrot.lane.b32.xlu0 %v1443, 120
      %v1539 = vpop.permute.xlu0 %1538
      %1540 = vrot.lane.b32.xlu0 %v1445, 120
      %v1541 = vpop.permute.xlu0 %1540
      %1542 = vrot.lane.b32.xlu0 %v1447, 120
      %v1543 = vpop.permute.xlu0 %1542
      %1544 = vrot.lane.b32.xlu0 %v1449, 120
      %v1545 = vpop.permute.xlu0 %1544
      %1546 = vrot.lane.b32.xlu0 %v1451, 120
      %v1547 = vpop.permute.xlu0 %1546
      %v1596 = vadd.f32 %v1307, %v1453
      %v1597 = vadd.f32 %v1308, %v1455
      %v1598 = vadd.f32 %v1309, %v1457
      %v1599 = vadd.f32 %v1310, %v1459
      %v1600 = vadd.f32 %v1311, %v1461
      %v1601 = vadd.f32 %v1312, %v1463
      %v1602 = vadd.f32 %v1313, %v1465
      %v1603 = vadd.f32 %v1314, %v1467
      %v1604 = vadd.f32 %v1315, %v1469
      %v1605 = vadd.f32 %v1316, %v1471
      %v1606 = vadd.f32 %v1317, %v1473
      %v1607 = vadd.f32 %v1318, %v1475
      %v1608 = vadd.f32 %v1319, %v1477
      %v1609 = vadd.f32 %v1320, %v1479
      %v1610 = vadd.f32 %v1321, %v1481
      %v1611 = vadd.f32 %v1322, %v1483
      %v1612 = vadd.f32 %v1323, %v1485
      %v1613 = vadd.f32 %v1324, %v1487
      %v1614 = vadd.f32 %v1325, %v1489
      %v1615 = vadd.f32 %v1326, %v1491
      %v1616 = vadd.f32 %v1327, %v1493
      %v1617 = vadd.f32 %v1328, %v1495
      %v1618 = vadd.f32 %v1329, %v1497
      %v1619 = vadd.f32 %v1330, %v1499
      %v1620 = vadd.f32 %v1331, %v1501
      %v1621 = vadd.f32 %v1332, %v1503
      %v1622 = vadd.f32 %v1333, %v1505
      %v1623 = vadd.f32 %v1334, %v1507
      %v1624 = vadd.f32 %v1335, %v1509
      %v1625 = vadd.f32 %v1336, %v1511
      %v1626 = vadd.f32 %v1337, %v1513
      %v1627 = vadd.f32 %v1338, %v1515
      %v1628 = vadd.f32 %v1339, %v1517
      %v1629 = vadd.f32 %v1340, %v1519
      %v1630 = vadd.f32 %v1341, %v1521
      %v1631 = vadd.f32 %v1342, %v1523
      %v1632 = vadd.f32 %v1343, %v1525
      %v1633 = vadd.f32 %v1344, %v1527
      %v1634 = vadd.f32 %v1345, %v1529
      %v1635 = vadd.f32 %v1346, %v1531
      %v1636 = vadd.f32 %v1347, %v1533
      %v1637 = vadd.f32 %v1348, %v1535
      %v1638 = vadd.f32 %v1349, %v1537
      %v1639 = vadd.f32 %v1350, %v1539
      %v1640 = vadd.f32 %v1351, %v1541
      %v1641 = vadd.f32 %v1352, %v1543
      %v1642 = vadd.f32 %v1353, %v1545
      %v1643 = vadd.f32 %v1354, %v1547
      %1646 = vrot.lane.b32.xlu0 %v867, 116
      %v1647 = vpop.permute.xlu0 %1646
      %1648 = vrot.lane.b32.xlu0 %v870, 116
      %v1649 = vpop.permute.xlu0 %1648
      %1650 = vrot.lane.b32.xlu0 %v873, 116
      %v1651 = vpop.permute.xlu0 %1650
      %1652 = vrot.lane.b32.xlu0 %v876, 116
      %v1653 = vpop.permute.xlu0 %1652
      %1654 = vrot.lane.b32.xlu0 %v879, 116
      %v1655 = vpop.permute.xlu0 %1654
      %1656 = vrot.lane.b32.xlu0 %v882, 116
      %v1657 = vpop.permute.xlu0 %1656
      %1658 = vrot.lane.b32.xlu0 %v885, 116
      %v1659 = vpop.permute.xlu0 %1658
      %1660 = vrot.lane.b32.xlu0 %v888, 116
      %v1661 = vpop.permute.xlu0 %1660
      %1662 = vrot.lane.b32.xlu0 %v891, 116
      %v1663 = vpop.permute.xlu0 %1662
      %1664 = vrot.lane.b32.xlu0 %v894, 116
      %v1665 = vpop.permute.xlu0 %1664
      %1666 = vrot.lane.b32.xlu0 %v897, 116
      %v1667 = vpop.permute.xlu0 %1666
      %1668 = vrot.lane.b32.xlu0 %v900, 116
      %v1669 = vpop.permute.xlu0 %1668
      %1670 = vrot.lane.b32.xlu0 %v903, 116
      %v1671 = vpop.permute.xlu0 %1670
      %1672 = vrot.lane.b32.xlu0 %v906, 116
      %v1673 = vpop.permute.xlu0 %1672
      %1674 = vrot.lane.b32.xlu0 %v909, 116
      %v1675 = vpop.permute.xlu0 %1674
      %1676 = vrot.lane.b32.xlu0 %v912, 116
      %v1677 = vpop.permute.xlu0 %1676
      %1678 = vrot.lane.b32.xlu0 %v915, 116
      %v1679 = vpop.permute.xlu0 %1678
      %1680 = vrot.lane.b32.xlu0 %v918, 116
      %v1681 = vpop.permute.xlu0 %1680
      %1682 = vrot.lane.b32.xlu0 %v921, 116
      %v1683 = vpop.permute.xlu0 %1682
      %1684 = vrot.lane.b32.xlu0 %v924, 116
      %v1685 = vpop.permute.xlu0 %1684
      %1686 = vrot.lane.b32.xlu0 %v927, 116
      %v1687 = vpop.permute.xlu0 %1686
      %1688 = vrot.lane.b32.xlu0 %v930, 116
      %v1689 = vpop.permute.xlu0 %1688
      %1690 = vrot.lane.b32.xlu0 %v933, 116
      %v1691 = vpop.permute.xlu0 %1690
      %1692 = vrot.lane.b32.xlu0 %v936, 116
      %v1693 = vpop.permute.xlu0 %1692
      %1694 = vrot.lane.b32.xlu0 %v939, 116
      %v1695 = vpop.permute.xlu0 %1694
      %1696 = vrot.lane.b32.xlu0 %v942, 116
      %v1697 = vpop.permute.xlu0 %1696
      %1698 = vrot.lane.b32.xlu0 %v945, 116
      %v1699 = vpop.permute.xlu0 %1698
      %1700 = vrot.lane.b32.xlu0 %v948, 116
      %v1701 = vpop.permute.xlu0 %1700
      %1702 = vrot.lane.b32.xlu0 %v951, 116
      %v1703 = vpop.permute.xlu0 %1702
      %1704 = vrot.lane.b32.xlu0 %v954, 116
      %v1705 = vpop.permute.xlu0 %1704
      %1706 = vrot.lane.b32.xlu0 %v957, 116
      %v1707 = vpop.permute.xlu0 %1706
      %1708 = vrot.lane.b32.xlu0 %v960, 116
      %v1709 = vpop.permute.xlu0 %1708
      %1710 = vrot.lane.b32.xlu0 %v963, 116
      %v1711 = vpop.permute.xlu0 %1710
      %1712 = vrot.lane.b32.xlu0 %v966, 116
      %v1713 = vpop.permute.xlu0 %1712
      %1714 = vrot.lane.b32.xlu0 %v969, 116
      %v1715 = vpop.permute.xlu0 %1714
      %1716 = vrot.lane.b32.xlu0 %v972, 116
      %v1717 = vpop.permute.xlu0 %1716
      %1718 = vrot.lane.b32.xlu0 %v975, 116
      %v1719 = vpop.permute.xlu0 %1718
      %1720 = vrot.lane.b32.xlu0 %v978, 116
      %v1721 = vpop.permute.xlu0 %1720
      %1722 = vrot.lane.b32.xlu0 %v981, 116
      %v1723 = vpop.permute.xlu0 %1722
      %1724 = vrot.lane.b32.xlu0 %v984, 116
      %v1725 = vpop.permute.xlu0 %1724
      %1726 = vrot.lane.b32.xlu0 %v987, 116
      %v1727 = vpop.permute.xlu0 %1726
      %1728 = vrot.lane.b32.xlu0 %v990, 116
      %v1729 = vpop.permute.xlu0 %1728
      %1730 = vrot.lane.b32.xlu0 %v993, 116
      %v1731 = vpop.permute.xlu0 %1730
      %1732 = vrot.lane.b32.xlu0 %v996, 116
      %v1733 = vpop.permute.xlu0 %1732
      %1734 = vrot.lane.b32.xlu0 %v999, 116
      %v1735 = vpop.permute.xlu0 %1734
      %1736 = vrot.lane.b32.xlu0 %v1002, 116
      %v1737 = vpop.permute.xlu0 %1736
      %1738 = vrot.lane.b32.xlu0 %v1005, 116
      %v1739 = vpop.permute.xlu0 %1738
      %1740 = vrot.lane.b32.xlu0 %v1008, 116
      %v1741 = vpop.permute.xlu0 %1740
      %v1790 = vadd.f32 %v1596, %v1647
      %v1791 = vadd.f32 %v1597, %v1649
      %v1792 = vadd.f32 %v1598, %v1651
      %v1793 = vadd.f32 %v1599, %v1653
      %v1794 = vadd.f32 %v1600, %v1655
      %v1795 = vadd.f32 %v1601, %v1657
      %v1796 = vadd.f32 %v1602, %v1659
      %v1797 = vadd.f32 %v1603, %v1661
      %v1798 = vadd.f32 %v1604, %v1663
      %v1799 = vadd.f32 %v1605, %v1665
      %v1800 = vadd.f32 %v1606, %v1667
      %v1801 = vadd.f32 %v1607, %v1669
      %v1802 = vadd.f32 %v1608, %v1671
      %v1803 = vadd.f32 %v1609, %v1673
      %v1804 = vadd.f32 %v1610, %v1675
      %v1805 = vadd.f32 %v1611, %v1677
      %v1806 = vadd.f32 %v1612, %v1679
      %v1807 = vadd.f32 %v1613, %v1681
      %v1808 = vadd.f32 %v1614, %v1683
      %v1809 = vadd.f32 %v1615, %v1685
      %v1810 = vadd.f32 %v1616, %v1687
      %v1811 = vadd.f32 %v1617, %v1689
      %v1812 = vadd.f32 %v1618, %v1691
      %v1813 = vadd.f32 %v1619, %v1693
      %v1814 = vadd.f32 %v1620, %v1695
      %v1815 = vadd.f32 %v1621, %v1697
      %v1816 = vadd.f32 %v1622, %v1699
      %v1817 = vadd.f32 %v1623, %v1701
      %v1818 = vadd.f32 %v1624, %v1703
      %v1819 = vadd.f32 %v1625, %v1705
      %v1820 = vadd.f32 %v1626, %v1707
      %v1821 = vadd.f32 %v1627, %v1709
      %v1822 = vadd.f32 %v1628, %v1711
      %v1823 = vadd.f32 %v1629, %v1713
      %v1824 = vadd.f32 %v1630, %v1715
      %v1825 = vadd.f32 %v1631, %v1717
      %v1826 = vadd.f32 %v1632, %v1719
      %v1827 = vadd.f32 %v1633, %v1721
      %v1828 = vadd.f32 %v1634, %v1723
      %v1829 = vadd.f32 %v1635, %v1725
      %v1830 = vadd.f32 %v1636, %v1727
      %v1831 = vadd.f32 %v1637, %v1729
      %v1832 = vadd.f32 %v1638, %v1731
      %v1833 = vadd.f32 %v1639, %v1733
      %v1834 = vadd.f32 %v1640, %v1735
      %v1835 = vadd.f32 %v1641, %v1737
      %v1836 = vadd.f32 %v1642, %v1739
      %v1837 = vadd.f32 %v1643, %v1741
      %v1838 = vrot.slane %v1002, 1
      %v1839 = vsel %vm1069, %v1161, %v1838
      %v1840 = vrot.slane %v1005, 1
      %v1841 = vsel %vm1069, %v1838, %v1840
      %v1842 = vrot.slane %v1008, 1
      %v1843 = vsel %vm1069, %v1840, %v1842
      %1844 = vrot.lane.b32.xlu0 %v1075, 112
      %v1845 = vpop.permute.xlu0 %1844
      %1846 = vrot.lane.b32.xlu0 %v1078, 112
      %v1847 = vpop.permute.xlu0 %1846
      %1848 = vrot.lane.b32.xlu0 %v1080, 112
      %v1849 = vpop.permute.xlu0 %1848
      %1850 = vrot.lane.b32.xlu0 %v1082, 112
      %v1851 = vpop.permute.xlu0 %1850
      %1852 = vrot.lane.b32.xlu0 %v1084, 112
      %v1853 = vpop.permute.xlu0 %1852
      %1854 = vrot.lane.b32.xlu0 %v1086, 112
      %v1855 = vpop.permute.xlu0 %1854
      %1856 = vrot.lane.b32.xlu0 %v1088, 112
      %v1857 = vpop.permute.xlu0 %1856
      %1858 = vrot.lane.b32.xlu0 %v1090, 112
      %v1859 = vpop.permute.xlu0 %1858
      %1860 = vrot.lane.b32.xlu0 %v1092, 112
      %v1861 = vpop.permute.xlu0 %1860
      %1862 = vrot.lane.b32.xlu0 %v1094, 112
      %v1863 = vpop.permute.xlu0 %1862
      %1864 = vrot.lane.b32.xlu0 %v1096, 112
      %v1865 = vpop.permute.xlu0 %1864
      %1866 = vrot.lane.b32.xlu0 %v1098, 112
      %v1867 = vpop.permute.xlu0 %1866
      %1868 = vrot.lane.b32.xlu0 %v1100, 112
      %v1869 = vpop.permute.xlu0 %1868
      %1870 = vrot.lane.b32.xlu0 %v1102, 112
      %v1871 = vpop.permute.xlu0 %1870
      %1872 = vrot.lane.b32.xlu0 %v1104, 112
      %v1873 = vpop.permute.xlu0 %1872
      %1874 = vrot.lane.b32.xlu0 %v1106, 112
      %v1875 = vpop.permute.xlu0 %1874
      %1876 = vrot.lane.b32.xlu0 %v1108, 112
      %v1877 = vpop.permute.xlu0 %1876
      %1878 = vrot.lane.b32.xlu0 %v1110, 112
      %v1879 = vpop.permute.xlu0 %1878
      %1880 = vrot.lane.b32.xlu0 %v1112, 112
      %v1881 = vpop.permute.xlu0 %1880
      %1882 = vrot.lane.b32.xlu0 %v1114, 112
      %v1883 = vpop.permute.xlu0 %1882
      %1884 = vrot.lane.b32.xlu0 %v1116, 112
      %v1885 = vpop.permute.xlu0 %1884
      %1886 = vrot.lane.b32.xlu0 %v1118, 112
      %v1887 = vpop.permute.xlu0 %1886
      %1888 = vrot.lane.b32.xlu0 %v1120, 112
      %v1889 = vpop.permute.xlu0 %1888
      %1890 = vrot.lane.b32.xlu0 %v1122, 112
      %v1891 = vpop.permute.xlu0 %1890
      %1892 = vrot.lane.b32.xlu0 %v1124, 112
      %v1893 = vpop.permute.xlu0 %1892
      %1894 = vrot.lane.b32.xlu0 %v1126, 112
      %v1895 = vpop.permute.xlu0 %1894
      %1896 = vrot.lane.b32.xlu0 %v1128, 112
      %v1897 = vpop.permute.xlu0 %1896
      %1898 = vrot.lane.b32.xlu0 %v1130, 112
      %v1899 = vpop.permute.xlu0 %1898
      %1900 = vrot.lane.b32.xlu0 %v1132, 112
      %v1901 = vpop.permute.xlu0 %1900
      %1902 = vrot.lane.b32.xlu0 %v1134, 112
      %v1903 = vpop.permute.xlu0 %1902
      %1904 = vrot.lane.b32.xlu0 %v1136, 112
      %v1905 = vpop.permute.xlu0 %1904
      %1906 = vrot.lane.b32.xlu0 %v1138, 112
      %v1907 = vpop.permute.xlu0 %1906
      %1908 = vrot.lane.b32.xlu0 %v1140, 112
      %v1909 = vpop.permute.xlu0 %1908
      %1910 = vrot.lane.b32.xlu0 %v1142, 112
      %v1911 = vpop.permute.xlu0 %1910
      %1912 = vrot.lane.b32.xlu0 %v1144, 112
      %v1913 = vpop.permute.xlu0 %1912
      %1914 = vrot.lane.b32.xlu0 %v1146, 112
      %v1915 = vpop.permute.xlu0 %1914
      %1916 = vrot.lane.b32.xlu0 %v1148, 112
      %v1917 = vpop.permute.xlu0 %1916
      %1918 = vrot.lane.b32.xlu0 %v1150, 112
      %v1919 = vpop.permute.xlu0 %1918
      %1920 = vrot.lane.b32.xlu0 %v1152, 112
      %v1921 = vpop.permute.xlu0 %1920
      %1922 = vrot.lane.b32.xlu0 %v1154, 112
      %v1923 = vpop.permute.xlu0 %1922
      %1924 = vrot.lane.b32.xlu0 %v1156, 112
      %v1925 = vpop.permute.xlu0 %1924
      %1926 = vrot.lane.b32.xlu0 %v1158, 112
      %v1927 = vpop.permute.xlu0 %1926
      %1928 = vrot.lane.b32.xlu0 %v1160, 112
      %v1929 = vpop.permute.xlu0 %1928
      %1930 = vrot.lane.b32.xlu0 %v1162, 112
      %v1931 = vpop.permute.xlu0 %1930
      %1932 = vrot.lane.b32.xlu0 %v1839, 112
      %v1933 = vpop.permute.xlu0 %1932
      %1934 = vrot.lane.b32.xlu0 %v1841, 112
      %v1935 = vpop.permute.xlu0 %1934
      %1936 = vrot.lane.b32.xlu0 %v1843, 112
      %v1937 = vpop.permute.xlu0 %1936
      %1938 = vrot.lane.b32.xlu0 %v1842, 112
      %v1939 = vpop.permute.xlu0 %1938
      %v1988 = vadd.f32 %v1790, %v1845
      %v1989 = vadd.f32 %v1791, %v1847
      %v1990 = vadd.f32 %v1792, %v1849
      %v1991 = vadd.f32 %v1793, %v1851
      %v1992 = vadd.f32 %v1794, %v1853
      %v1993 = vadd.f32 %v1795, %v1855
      %v1994 = vadd.f32 %v1796, %v1857
      %v1995 = vadd.f32 %v1797, %v1859
      %v1996 = vadd.f32 %v1798, %v1861
      %v1997 = vadd.f32 %v1799, %v1863
      %v1998 = vadd.f32 %v1800, %v1865
      %v1999 = vadd.f32 %v1801, %v1867
      %v2000 = vadd.f32 %v1802, %v1869
      %v2001 = vadd.f32 %v1803, %v1871
      %v2002 = vadd.f32 %v1804, %v1873
      %v2003 = vadd.f32 %v1805, %v1875
      %v2004 = vadd.f32 %v1806, %v1877
      %v2005 = vadd.f32 %v1807, %v1879
      %v2006 = vadd.f32 %v1808, %v1881
      %v2007 = vadd.f32 %v1809, %v1883
      %v2008 = vadd.f32 %v1810, %v1885
      %v2009 = vadd.f32 %v1811, %v1887
      %v2010 = vadd.f32 %v1812, %v1889
      %v2011 = vadd.f32 %v1813, %v1891
      %v2012 = vadd.f32 %v1814, %v1893
      %v2013 = vadd.f32 %v1815, %v1895
      %v2014 = vadd.f32 %v1816, %v1897
      %v2015 = vadd.f32 %v1817, %v1899
      %v2016 = vadd.f32 %v1818, %v1901
      %v2017 = vadd.f32 %v1819, %v1903
      %v2018 = vadd.f32 %v1820, %v1905
      %v2019 = vadd.f32 %v1821, %v1907
      %v2020 = vadd.f32 %v1822, %v1909
      %v2021 = vadd.f32 %v1823, %v1911
      %v2022 = vadd.f32 %v1824, %v1913
      %v2023 = vadd.f32 %v1825, %v1915
      %v2024 = vadd.f32 %v1826, %v1917
      %v2025 = vadd.f32 %v1827, %v1919
      %v2026 = vadd.f32 %v1828, %v1921
      %v2027 = vadd.f32 %v1829, %v1923
      %v2028 = vadd.f32 %v1830, %v1925
      %v2029 = vadd.f32 %v1831, %v1927
      %v2030 = vadd.f32 %v1832, %v1929
      %v2031 = vadd.f32 %v1833, %v1931
      %v2032 = vadd.f32 %v1834, %v1933
      %v2033 = vadd.f32 %v1835, %v1935
      %v2034 = vadd.f32 %v1836, %v1937
      %v2035 = vadd.f32 %v1837, %v1939
      %v2037 = vrot.slane %v1005, 2
      %v2038 = vsel %vm1356, %v1450, %v2037
      %v2039 = vrot.slane %v1008, 2
      %v2040 = vsel %vm1356, %v2037, %v2039
      %v2041 = vrot.slane %v1011, 2
      %v2042 = vsel %vm1356, %v2039, %v2041
      %2043 = vrot.lane.b32.xlu0 %v1362, 108
      %v2044 = vpop.permute.xlu0 %2043
      %2045 = vrot.lane.b32.xlu0 %v1365, 108
      %v2046 = vpop.permute.xlu0 %2045
      %2047 = vrot.lane.b32.xlu0 %v1367, 108
      %v2048 = vpop.permute.xlu0 %2047
      %2049 = vrot.lane.b32.xlu0 %v1369, 108
      %v2050 = vpop.permute.xlu0 %2049
      %2051 = vrot.lane.b32.xlu0 %v1371, 108
      %v2052 = vpop.permute.xlu0 %2051
      %2053 = vrot.lane.b32.xlu0 %v1373, 108
      %v2054 = vpop.permute.xlu0 %2053
      %2055 = vrot.lane.b32.xlu0 %v1375, 108
      %v2056 = vpop.permute.xlu0 %2055
      %2057 = vrot.lane.b32.xlu0 %v1377, 108
      %v2058 = vpop.permute.xlu0 %2057
      %2059 = vrot.lane.b32.xlu0 %v1379, 108
      %v2060 = vpop.permute.xlu0 %2059
      %2061 = vrot.lane.b32.xlu0 %v1381, 108
      %v2062 = vpop.permute.xlu0 %2061
      %2063 = vrot.lane.b32.xlu0 %v1383, 108
      %v2064 = vpop.permute.xlu0 %2063
      %2065 = vrot.lane.b32.xlu0 %v1385, 108
      %v2066 = vpop.permute.xlu0 %2065
      %2067 = vrot.lane.b32.xlu0 %v1387, 108
      %v2068 = vpop.permute.xlu0 %2067
      %2069 = vrot.lane.b32.xlu0 %v1389, 108
      %v2070 = vpop.permute.xlu0 %2069
      %2071 = vrot.lane.b32.xlu0 %v1391, 108
      %v2072 = vpop.permute.xlu0 %2071
      %2073 = vrot.lane.b32.xlu0 %v1393, 108
      %v2074 = vpop.permute.xlu0 %2073
      %2075 = vrot.lane.b32.xlu0 %v1395, 108
      %v2076 = vpop.permute.xlu0 %2075
      %2077 = vrot.lane.b32.xlu0 %v1397, 108
      %v2078 = vpop.permute.xlu0 %2077
      %2079 = vrot.lane.b32.xlu0 %v1399, 108
      %v2080 = vpop.permute.xlu0 %2079
      %2081 = vrot.lane.b32.xlu0 %v1401, 108
      %v2082 = vpop.permute.xlu0 %2081
      %2083 = vrot.lane.b32.xlu0 %v1403, 108
      %v2084 = vpop.permute.xlu0 %2083
      %2085 = vrot.lane.b32.xlu0 %v1405, 108
      %v2086 = vpop.permute.xlu0 %2085
      %2087 = vrot.lane.b32.xlu0 %v1407, 108
      %v2088 = vpop.permute.xlu0 %2087
      %2089 = vrot.lane.b32.xlu0 %v1409, 108
      %v2090 = vpop.permute.xlu0 %2089
      %2091 = vrot.lane.b32.xlu0 %v1411, 108
      %v2092 = vpop.permute.xlu0 %2091
      %2093 = vrot.lane.b32.xlu0 %v1413, 108
      %v2094 = vpop.permute.xlu0 %2093
      %2095 = vrot.lane.b32.xlu0 %v1415, 108
      %v2096 = vpop.permute.xlu0 %2095
      %2097 = vrot.lane.b32.xlu0 %v1417, 108
      %v2098 = vpop.permute.xlu0 %2097
      %2099 = vrot.lane.b32.xlu0 %v1419, 108
      %v2100 = vpop.permute.xlu0 %2099
      %2101 = vrot.lane.b32.xlu0 %v1421, 108
      %v2102 = vpop.permute.xlu0 %2101
      %2103 = vrot.lane.b32.xlu0 %v1423, 108
      %v2104 = vpop.permute.xlu0 %2103
      %2105 = vrot.lane.b32.xlu0 %v1425, 108
      %v2106 = vpop.permute.xlu0 %2105
      %2107 = vrot.lane.b32.xlu0 %v1427, 108
      %v2108 = vpop.permute.xlu0 %2107
      %2109 = vrot.lane.b32.xlu0 %v1429, 108
      %v2110 = vpop.permute.xlu0 %2109
      %2111 = vrot.lane.b32.xlu0 %v1431, 108
      %v2112 = vpop.permute.xlu0 %2111
      %2113 = vrot.lane.b32.xlu0 %v1433, 108
      %v2114 = vpop.permute.xlu0 %2113
      %2115 = vrot.lane.b32.xlu0 %v1435, 108
      %v2116 = vpop.permute.xlu0 %2115
      %2117 = vrot.lane.b32.xlu0 %v1437, 108
      %v2118 = vpop.permute.xlu0 %2117
      %2119 = vrot.lane.b32.xlu0 %v1439, 108
      %v2120 = vpop.permute.xlu0 %2119
      %2121 = vrot.lane.b32.xlu0 %v1441, 108
      %v2122 = vpop.permute.xlu0 %2121
      %2123 = vrot.lane.b32.xlu0 %v1443, 108
      %v2124 = vpop.permute.xlu0 %2123
      %2125 = vrot.lane.b32.xlu0 %v1445, 108
      %v2126 = vpop.permute.xlu0 %2125
      %2127 = vrot.lane.b32.xlu0 %v1447, 108
      %v2128 = vpop.permute.xlu0 %2127
      %2129 = vrot.lane.b32.xlu0 %v1449, 108
      %v2130 = vpop.permute.xlu0 %2129
      %2131 = vrot.lane.b32.xlu0 %v1451, 108
      %v2132 = vpop.permute.xlu0 %2131
      %2133 = vrot.lane.b32.xlu0 %v2038, 108
      %v2134 = vpop.permute.xlu0 %2133
      %2135 = vrot.lane.b32.xlu0 %v2040, 108
      %v2136 = vpop.permute.xlu0 %2135
      %2137 = vrot.lane.b32.xlu0 %v2042, 108
      %v2138 = vpop.permute.xlu0 %2137
      %v2187 = vadd.f32 %v1988, %v2044
      %v2188 = vadd.f32 %v1989, %v2046
      %v2189 = vadd.f32 %v1990, %v2048
      %v2190 = vadd.f32 %v1991, %v2050
      %v2191 = vadd.f32 %v1992, %v2052
      %v2192 = vadd.f32 %v1993, %v2054
      %v2193 = vadd.f32 %v1994, %v2056
      %v2194 = vadd.f32 %v1995, %v2058
      %v2195 = vadd.f32 %v1996, %v2060
      %v2196 = vadd.f32 %v1997, %v2062
      %v2197 = vadd.f32 %v1998, %v2064
      %v2198 = vadd.f32 %v1999, %v2066
      %v2199 = vadd.f32 %v2000, %v2068
      %v2200 = vadd.f32 %v2001, %v2070
      %v2201 = vadd.f32 %v2002, %v2072
      %v2202 = vadd.f32 %v2003, %v2074
      %v2203 = vadd.f32 %v2004, %v2076
      %v2204 = vadd.f32 %v2005, %v2078
      %v2205 = vadd.f32 %v2006, %v2080
      %v2206 = vadd.f32 %v2007, %v2082
      %v2207 = vadd.f32 %v2008, %v2084
      %v2208 = vadd.f32 %v2009, %v2086
      %v2209 = vadd.f32 %v2010, %v2088
      %v2210 = vadd.f32 %v2011, %v2090
      %v2211 = vadd.f32 %v2012, %v2092
      %v2212 = vadd.f32 %v2013, %v2094
      %v2213 = vadd.f32 %v2014, %v2096
      %v2214 = vadd.f32 %v2015, %v2098
      %v2215 = vadd.f32 %v2016, %v2100
      %v2216 = vadd.f32 %v2017, %v2102
      %v2217 = vadd.f32 %v2018, %v2104
      %v2218 = vadd.f32 %v2019, %v2106
      %v2219 = vadd.f32 %v2020, %v2108
      %v2220 = vadd.f32 %v2021, %v2110
      %v2221 = vadd.f32 %v2022, %v2112
      %v2222 = vadd.f32 %v2023, %v2114
      %v2223 = vadd.f32 %v2024, %v2116
      %v2224 = vadd.f32 %v2025, %v2118
      %v2225 = vadd.f32 %v2026, %v2120
      %v2226 = vadd.f32 %v2027, %v2122
      %v2227 = vadd.f32 %v2028, %v2124
      %v2228 = vadd.f32 %v2029, %v2126
      %v2229 = vadd.f32 %v2030, %v2128
      %v2230 = vadd.f32 %v2031, %v2130
      %v2231 = vadd.f32 %v2032, %v2132
      %v2232 = vadd.f32 %v2033, %v2134
      %v2233 = vadd.f32 %v2034, %v2136
      %v2234 = vadd.f32 %v2035, %v2138
      %2237 = vrot.lane.b32.xlu0 %v876, 104
      %v2238 = vpop.permute.xlu0 %2237
      %2239 = vrot.lane.b32.xlu0 %v879, 104
      %v2240 = vpop.permute.xlu0 %2239
      %2241 = vrot.lane.b32.xlu0 %v882, 104
      %v2242 = vpop.permute.xlu0 %2241
      %2243 = vrot.lane.b32.xlu0 %v885, 104
      %v2244 = vpop.permute.xlu0 %2243
      %2245 = vrot.lane.b32.xlu0 %v888, 104
      %v2246 = vpop.permute.xlu0 %2245
      %2247 = vrot.lane.b32.xlu0 %v891, 104
      %v2248 = vpop.permute.xlu0 %2247
      %2249 = vrot.lane.b32.xlu0 %v894, 104
      %v2250 = vpop.permute.xlu0 %2249
      %2251 = vrot.lane.b32.xlu0 %v897, 104
      %v2252 = vpop.permute.xlu0 %2251
      %2253 = vrot.lane.b32.xlu0 %v900, 104
      %v2254 = vpop.permute.xlu0 %2253
      %2255 = vrot.lane.b32.xlu0 %v903, 104
      %v2256 = vpop.permute.xlu0 %2255
      %2257 = vrot.lane.b32.xlu0 %v906, 104
      %v2258 = vpop.permute.xlu0 %2257
      %2259 = vrot.lane.b32.xlu0 %v909, 104
      %v2260 = vpop.permute.xlu0 %2259
      %2261 = vrot.lane.b32.xlu0 %v912, 104
      %v2262 = vpop.permute.xlu0 %2261
      %2263 = vrot.lane.b32.xlu0 %v915, 104
      %v2264 = vpop.permute.xlu0 %2263
      %2265 = vrot.lane.b32.xlu0 %v918, 104
      %v2266 = vpop.permute.xlu0 %2265
      %2267 = vrot.lane.b32.xlu0 %v921, 104
      %v2268 = vpop.permute.xlu0 %2267
      %2269 = vrot.lane.b32.xlu0 %v924, 104
      %v2270 = vpop.permute.xlu0 %2269
      %2271 = vrot.lane.b32.xlu0 %v927, 104
      %v2272 = vpop.permute.xlu0 %2271
      %2273 = vrot.lane.b32.xlu0 %v930, 104
      %v2274 = vpop.permute.xlu0 %2273
      %2275 = vrot.lane.b32.xlu0 %v933, 104
      %v2276 = vpop.permute.xlu0 %2275
      %2277 = vrot.lane.b32.xlu0 %v936, 104
      %v2278 = vpop.permute.xlu0 %2277
      %2279 = vrot.lane.b32.xlu0 %v939, 104
      %v2280 = vpop.permute.xlu0 %2279
      %2281 = vrot.lane.b32.xlu0 %v942, 104
      %v2282 = vpop.permute.xlu0 %2281
      %2283 = vrot.lane.b32.xlu0 %v945, 104
      %v2284 = vpop.permute.xlu0 %2283
      %2285 = vrot.lane.b32.xlu0 %v948, 104
      %v2286 = vpop.permute.xlu0 %2285
      %2287 = vrot.lane.b32.xlu0 %v951, 104
      %v2288 = vpop.permute.xlu0 %2287
      %2289 = vrot.lane.b32.xlu0 %v954, 104
      %v2290 = vpop.permute.xlu0 %2289
      %2291 = vrot.lane.b32.xlu0 %v957, 104
      %v2292 = vpop.permute.xlu0 %2291
      %2293 = vrot.lane.b32.xlu0 %v960, 104
      %v2294 = vpop.permute.xlu0 %2293
      %2295 = vrot.lane.b32.xlu0 %v963, 104
      %v2296 = vpop.permute.xlu0 %2295
      %2297 = vrot.lane.b32.xlu0 %v966, 104
      %v2298 = vpop.permute.xlu0 %2297
      %2299 = vrot.lane.b32.xlu0 %v969, 104
      %v2300 = vpop.permute.xlu0 %2299
      %2301 = vrot.lane.b32.xlu0 %v972, 104
      %v2302 = vpop.permute.xlu0 %2301
      %2303 = vrot.lane.b32.xlu0 %v975, 104
      %v2304 = vpop.permute.xlu0 %2303
      %2305 = vrot.lane.b32.xlu0 %v978, 104
      %v2306 = vpop.permute.xlu0 %2305
      %2307 = vrot.lane.b32.xlu0 %v981, 104
      %v2308 = vpop.permute.xlu0 %2307
      %2309 = vrot.lane.b32.xlu0 %v984, 104
      %v2310 = vpop.permute.xlu0 %2309
      %2311 = vrot.lane.b32.xlu0 %v987, 104
      %v2312 = vpop.permute.xlu0 %2311
      %2313 = vrot.lane.b32.xlu0 %v990, 104
      %v2314 = vpop.permute.xlu0 %2313
      %2315 = vrot.lane.b32.xlu0 %v993, 104
      %v2316 = vpop.permute.xlu0 %2315
      %2317 = vrot.lane.b32.xlu0 %v996, 104
      %v2318 = vpop.permute.xlu0 %2317
      %2319 = vrot.lane.b32.xlu0 %v999, 104
      %v2320 = vpop.permute.xlu0 %2319
      %2321 = vrot.lane.b32.xlu0 %v1002, 104
      %v2322 = vpop.permute.xlu0 %2321
      %2323 = vrot.lane.b32.xlu0 %v1005, 104
      %v2324 = vpop.permute.xlu0 %2323
      %2325 = vrot.lane.b32.xlu0 %v1008, 104
      %v2326 = vpop.permute.xlu0 %2325
      %2327 = vrot.lane.b32.xlu0 %v1011, 104
      %v2328 = vpop.permute.xlu0 %2327
      %2329 = vrot.lane.b32.xlu0 %v1014, 104
      %v2330 = vpop.permute.xlu0 %2329
      %2331 = vrot.lane.b32.xlu0 %v1017, 104
      %v2332 = vpop.permute.xlu0 %2331
      %v2381 = vadd.f32 %v2187, %v2238
      %v2382 = vadd.f32 %v2188, %v2240
      %v2383 = vadd.f32 %v2189, %v2242
      %v2384 = vadd.f32 %v2190, %v2244
      %v2385 = vadd.f32 %v2191, %v2246
      %v2386 = vadd.f32 %v2192, %v2248
      %v2387 = vadd.f32 %v2193, %v2250
      %v2388 = vadd.f32 %v2194, %v2252
      %v2389 = vadd.f32 %v2195, %v2254
      %v2390 = vadd.f32 %v2196, %v2256
      %v2391 = vadd.f32 %v2197, %v2258
      %v2392 = vadd.f32 %v2198, %v2260
      %v2393 = vadd.f32 %v2199, %v2262
      %v2394 = vadd.f32 %v2200, %v2264
      %v2395 = vadd.f32 %v2201, %v2266
      %v2396 = vadd.f32 %v2202, %v2268
      %v2397 = vadd.f32 %v2203, %v2270
      %v2398 = vadd.f32 %v2204, %v2272
      %v2399 = vadd.f32 %v2205, %v2274
      %v2400 = vadd.f32 %v2206, %v2276
      %v2401 = vadd.f32 %v2207, %v2278
      %v2402 = vadd.f32 %v2208, %v2280
      %v2403 = vadd.f32 %v2209, %v2282
      %v2404 = vadd.f32 %v2210, %v2284
      %v2405 = vadd.f32 %v2211, %v2286
      %v2406 = vadd.f32 %v2212, %v2288
      %v2407 = vadd.f32 %v2213, %v2290
      %v2408 = vadd.f32 %v2214, %v2292
      %v2409 = vadd.f32 %v2215, %v2294
      %v2410 = vadd.f32 %v2216, %v2296
      %v2411 = vadd.f32 %v2217, %v2298
      %v2412 = vadd.f32 %v2218, %v2300
      %v2413 = vadd.f32 %v2219, %v2302
      %v2414 = vadd.f32 %v2220, %v2304
      %v2415 = vadd.f32 %v2221, %v2306
      %v2416 = vadd.f32 %v2222, %v2308
      %v2417 = vadd.f32 %v2223, %v2310
      %v2418 = vadd.f32 %v2224, %v2312
      %v2419 = vadd.f32 %v2225, %v2314
      %v2420 = vadd.f32 %v2226, %v2316
      %v2421 = vadd.f32 %v2227, %v2318
      %v2422 = vadd.f32 %v2228, %v2320
      %v2423 = vadd.f32 %v2229, %v2322
      %v2424 = vadd.f32 %v2230, %v2324
      %v2425 = vadd.f32 %v2231, %v2326
      %v2426 = vadd.f32 %v2232, %v2328
      %v2427 = vadd.f32 %v2233, %v2330
      %v2428 = vadd.f32 %v2234, %v2332
      %v2429 = vrot.slane %v1011, 1
      %v2430 = vsel %vm1069, %v1842, %v2429
      %v2431 = vrot.slane %v1014, 1
      %v2432 = vsel %vm1069, %v2429, %v2431
      %v2433 = vrot.slane %v1017, 1
      %v2434 = vsel %vm1069, %v2431, %v2433
      %2435 = vrot.lane.b32.xlu0 %v1081, 100
      %v2436 = vpop.permute.xlu0 %2435
      %2437 = vrot.lane.b32.xlu0 %v1084, 100
      %v2438 = vpop.permute.xlu0 %2437
      %2439 = vrot.lane.b32.xlu0 %v1086, 100
      %v2440 = vpop.permute.xlu0 %2439
      %2441 = vrot.lane.b32.xlu0 %v1088, 100
      %v2442 = vpop.permute.xlu0 %2441
      %2443 = vrot.lane.b32.xlu0 %v1090, 100
      %v2444 = vpop.permute.xlu0 %2443
      %2445 = vrot.lane.b32.xlu0 %v1092, 100
      %v2446 = vpop.permute.xlu0 %2445
      %2447 = vrot.lane.b32.xlu0 %v1094, 100
      %v2448 = vpop.permute.xlu0 %2447
      %2449 = vrot.lane.b32.xlu0 %v1096, 100
      %v2450 = vpop.permute.xlu0 %2449
      %2451 = vrot.lane.b32.xlu0 %v1098, 100
      %v2452 = vpop.permute.xlu0 %2451
      %2453 = vrot.lane.b32.xlu0 %v1100, 100
      %v2454 = vpop.permute.xlu0 %2453
      %2455 = vrot.lane.b32.xlu0 %v1102, 100
      %v2456 = vpop.permute.xlu0 %2455
      %2457 = vrot.lane.b32.xlu0 %v1104, 100
      %v2458 = vpop.permute.xlu0 %2457
      %2459 = vrot.lane.b32.xlu0 %v1106, 100
      %v2460 = vpop.permute.xlu0 %2459
      %2461 = vrot.lane.b32.xlu0 %v1108, 100
      %v2462 = vpop.permute.xlu0 %2461
      %2463 = vrot.lane.b32.xlu0 %v1110, 100
      %v2464 = vpop.permute.xlu0 %2463
      %2465 = vrot.lane.b32.xlu0 %v1112, 100
      %v2466 = vpop.permute.xlu0 %2465
      %2467 = vrot.lane.b32.xlu0 %v1114, 100
      %v2468 = vpop.permute.xlu0 %2467
      %2469 = vrot.lane.b32.xlu0 %v1116, 100
      %v2470 = vpop.permute.xlu0 %2469
      %2471 = vrot.lane.b32.xlu0 %v1118, 100
      %v2472 = vpop.permute.xlu0 %2471
      %2473 = vrot.lane.b32.xlu0 %v1120, 100
      %v2474 = vpop.permute.xlu0 %2473
      %2475 = vrot.lane.b32.xlu0 %v1122, 100
      %v2476 = vpop.permute.xlu0 %2475
      %2477 = vrot.lane.b32.xlu0 %v1124, 100
      %v2478 = vpop.permute.xlu0 %2477
      %2479 = vrot.lane.b32.xlu0 %v1126, 100
      %v2480 = vpop.permute.xlu0 %2479
      %2481 = vrot.lane.b32.xlu0 %v1128, 100
      %v2482 = vpop.permute.xlu0 %2481
      %2483 = vrot.lane.b32.xlu0 %v1130, 100
      %v2484 = vpop.permute.xlu0 %2483
      %2485 = vrot.lane.b32.xlu0 %v1132, 100
      %v2486 = vpop.permute.xlu0 %2485
      %2487 = vrot.lane.b32.xlu0 %v1134, 100
      %v2488 = vpop.permute.xlu0 %2487
      %2489 = vrot.lane.b32.xlu0 %v1136, 100
      %v2490 = vpop.permute.xlu0 %2489
      %2491 = vrot.lane.b32.xlu0 %v1138, 100
      %v2492 = vpop.permute.xlu0 %2491
      %2493 = vrot.lane.b32.xlu0 %v1140, 100
      %v2494 = vpop.permute.xlu0 %2493
      %2495 = vrot.lane.b32.xlu0 %v1142, 100
      %v2496 = vpop.permute.xlu0 %2495
      %2497 = vrot.lane.b32.xlu0 %v1144, 100
      %v2498 = vpop.permute.xlu0 %2497
      %2499 = vrot.lane.b32.xlu0 %v1146, 100
      %v2500 = vpop.permute.xlu0 %2499
      %2501 = vrot.lane.b32.xlu0 %v1148, 100
      %v2502 = vpop.permute.xlu0 %2501
      %2503 = vrot.lane.b32.xlu0 %v1150, 100
      %v2504 = vpop.permute.xlu0 %2503
      %2505 = vrot.lane.b32.xlu0 %v1152, 100
      %v2506 = vpop.permute.xlu0 %2505
      %2507 = vrot.lane.b32.xlu0 %v1154, 100
      %v2508 = vpop.permute.xlu0 %2507
      %2509 = vrot.lane.b32.xlu0 %v1156, 100
      %v2510 = vpop.permute.xlu0 %2509
      %2511 = vrot.lane.b32.xlu0 %v1158, 100
      %v2512 = vpop.permute.xlu0 %2511
      %2513 = vrot.lane.b32.xlu0 %v1160, 100
      %v2514 = vpop.permute.xlu0 %2513
      %2515 = vrot.lane.b32.xlu0 %v1162, 100
      %v2516 = vpop.permute.xlu0 %2515
      %2517 = vrot.lane.b32.xlu0 %v1839, 100
      %v2518 = vpop.permute.xlu0 %2517
      %2519 = vrot.lane.b32.xlu0 %v1841, 100
      %v2520 = vpop.permute.xlu0 %2519
      %2521 = vrot.lane.b32.xlu0 %v1843, 100
      %v2522 = vpop.permute.xlu0 %2521
      %2523 = vrot.lane.b32.xlu0 %v2430, 100
      %v2524 = vpop.permute.xlu0 %2523
      %2525 = vrot.lane.b32.xlu0 %v2432, 100
      %v2526 = vpop.permute.xlu0 %2525
      %2527 = vrot.lane.b32.xlu0 %v2434, 100
      %v2528 = vpop.permute.xlu0 %2527
      %2529 = vrot.lane.b32.xlu0 %v2433, 100
      %v2530 = vpop.permute.xlu0 %2529
      %v2579 = vadd.f32 %v2381, %v2436
      %v2580 = vadd.f32 %v2382, %v2438
      %v2581 = vadd.f32 %v2383, %v2440
      %v2582 = vadd.f32 %v2384, %v2442
      %v2583 = vadd.f32 %v2385, %v2444
      %v2584 = vadd.f32 %v2386, %v2446
      %v2585 = vadd.f32 %v2387, %v2448
      %v2586 = vadd.f32 %v2388, %v2450
      %v2587 = vadd.f32 %v2389, %v2452
      %v2588 = vadd.f32 %v2390, %v2454
      %v2589 = vadd.f32 %v2391, %v2456
      %v2590 = vadd.f32 %v2392, %v2458
      %v2591 = vadd.f32 %v2393, %v2460
      %v2592 = vadd.f32 %v2394, %v2462
      %v2593 = vadd.f32 %v2395, %v2464
      %v2594 = vadd.f32 %v2396, %v2466
      %v2595 = vadd.f32 %v2397, %v2468
      %v2596 = vadd.f32 %v2398, %v2470
      %v2597 = vadd.f32 %v2399, %v2472
      %v2598 = vadd.f32 %v2400, %v2474
      %v2599 = vadd.f32 %v2401, %v2476
      %v2600 = vadd.f32 %v2402, %v2478
      %v2601 = vadd.f32 %v2403, %v2480
      %v2602 = vadd.f32 %v2404, %v2482
      %v2603 = vadd.f32 %v2405, %v2484
      %v2604 = vadd.f32 %v2406, %v2486
      %v2605 = vadd.f32 %v2407, %v2488
      %v2606 = vadd.f32 %v2408, %v2490
      %v2607 = vadd.f32 %v2409, %v2492
      %v2608 = vadd.f32 %v2410, %v2494
      %v2609 = vadd.f32 %v2411, %v2496
      %v2610 = vadd.f32 %v2412, %v2498
      %v2611 = vadd.f32 %v2413, %v2500
      %v2612 = vadd.f32 %v2414, %v2502
      %v2613 = vadd.f32 %v2415, %v2504
      %v2614 = vadd.f32 %v2416, %v2506
      %v2615 = vadd.f32 %v2417, %v2508
      %v2616 = vadd.f32 %v2418, %v2510
      %v2617 = vadd.f32 %v2419, %v2512
      %v2618 = vadd.f32 %v2420, %v2514
      %v2619 = vadd.f32 %v2421, %v2516
      %v2620 = vadd.f32 %v2422, %v2518
      %v2621 = vadd.f32 %v2423, %v2520
      %v2622 = vadd.f32 %v2424, %v2522
      %v2623 = vadd.f32 %v2425, %v2524
      %v2624 = vadd.f32 %v2426, %v2526
      %v2625 = vadd.f32 %v2427, %v2528
      %v2626 = vadd.f32 %v2428, %v2530
      %v2628 = vrot.slane %v1014, 2
      %v2629 = vsel %vm1356, %v2041, %v2628
      %v2630 = vrot.slane %v1017, 2
      %v2631 = vsel %vm1356, %v2628, %v2630
      %v2632 = vrot.slane %v1020, 2
      %v2633 = vsel %vm1356, %v2630, %v2632
      %2634 = vrot.lane.b32.xlu0 %v1368, 96
      %v2635 = vpop.permute.xlu0 %2634
      %2636 = vrot.lane.b32.xlu0 %v1371, 96
      %v2637 = vpop.permute.xlu0 %2636
      %2638 = vrot.lane.b32.xlu0 %v1373, 96
      %v2639 = vpop.permute.xlu0 %2638
      %2640 = vrot.lane.b32.xlu0 %v1375, 96
      %v2641 = vpop.permute.xlu0 %2640
      %2642 = vrot.lane.b32.xlu0 %v1377, 96
      %v2643 = vpop.permute.xlu0 %2642
      %2644 = vrot.lane.b32.xlu0 %v1379, 96
      %v2645 = vpop.permute.xlu0 %2644
      %2646 = vrot.lane.b32.xlu0 %v1381, 96
      %v2647 = vpop.permute.xlu0 %2646
      %2648 = vrot.lane.b32.xlu0 %v1383, 96
      %v2649 = vpop.permute.xlu0 %2648
      %2650 = vrot.lane.b32.xlu0 %v1385, 96
      %v2651 = vpop.permute.xlu0 %2650
      %2652 = vrot.lane.b32.xlu0 %v1387, 96
      %v2653 = vpop.permute.xlu0 %2652
      %2654 = vrot.lane.b32.xlu0 %v1389, 96
      %v2655 = vpop.permute.xlu0 %2654
      %2656 = vrot.lane.b32.xlu0 %v1391, 96
      %v2657 = vpop.permute.xlu0 %2656
      %2658 = vrot.lane.b32.xlu0 %v1393, 96
      %v2659 = vpop.permute.xlu0 %2658
      %2660 = vrot.lane.b32.xlu0 %v1395, 96
      %v2661 = vpop.permute.xlu0 %2660
      %2662 = vrot.lane.b32.xlu0 %v1397, 96
      %v2663 = vpop.permute.xlu0 %2662
      %2664 = vrot.lane.b32.xlu0 %v1399, 96
      %v2665 = vpop.permute.xlu0 %2664
      %2666 = vrot.lane.b32.xlu0 %v1401, 96
      %v2667 = vpop.permute.xlu0 %2666
      %2668 = vrot.lane.b32.xlu0 %v1403, 96
      %v2669 = vpop.permute.xlu0 %2668
      %2670 = vrot.lane.b32.xlu0 %v1405, 96
      %v2671 = vpop.permute.xlu0 %2670
      %2672 = vrot.lane.b32.xlu0 %v1407, 96
      %v2673 = vpop.permute.xlu0 %2672
      %2674 = vrot.lane.b32.xlu0 %v1409, 96
      %v2675 = vpop.permute.xlu0 %2674
      %2676 = vrot.lane.b32.xlu0 %v1411, 96
      %v2677 = vpop.permute.xlu0 %2676
      %2678 = vrot.lane.b32.xlu0 %v1413, 96
      %v2679 = vpop.permute.xlu0 %2678
      %2680 = vrot.lane.b32.xlu0 %v1415, 96
      %v2681 = vpop.permute.xlu0 %2680
      %2682 = vrot.lane.b32.xlu0 %v1417, 96
      %v2683 = vpop.permute.xlu0 %2682
      %2684 = vrot.lane.b32.xlu0 %v1419, 96
      %v2685 = vpop.permute.xlu0 %2684
      %2686 = vrot.lane.b32.xlu0 %v1421, 96
      %v2687 = vpop.permute.xlu0 %2686
      %2688 = vrot.lane.b32.xlu0 %v1423, 96
      %v2689 = vpop.permute.xlu0 %2688
      %2690 = vrot.lane.b32.xlu0 %v1425, 96
      %v2691 = vpop.permute.xlu0 %2690
      %2692 = vrot.lane.b32.xlu0 %v1427, 96
      %v2693 = vpop.permute.xlu0 %2692
      %2694 = vrot.lane.b32.xlu0 %v1429, 96
      %v2695 = vpop.permute.xlu0 %2694
      %2696 = vrot.lane.b32.xlu0 %v1431, 96
      %v2697 = vpop.permute.xlu0 %2696
      %2698 = vrot.lane.b32.xlu0 %v1433, 96
      %v2699 = vpop.permute.xlu0 %2698
      %2700 = vrot.lane.b32.xlu0 %v1435, 96
      %v2701 = vpop.permute.xlu0 %2700
      %2702 = vrot.lane.b32.xlu0 %v1437, 96
      %v2703 = vpop.permute.xlu0 %2702
      %2704 = vrot.lane.b32.xlu0 %v1439, 96
      %v2705 = vpop.permute.xlu0 %2704
      %2706 = vrot.lane.b32.xlu0 %v1441, 96
      %v2707 = vpop.permute.xlu0 %2706
      %2708 = vrot.lane.b32.xlu0 %v1443, 96
      %v2709 = vpop.permute.xlu0 %2708
      %2710 = vrot.lane.b32.xlu0 %v1445, 96
      %v2711 = vpop.permute.xlu0 %2710
      %2712 = vrot.lane.b32.xlu0 %v1447, 96
      %v2713 = vpop.permute.xlu0 %2712
      %2714 = vrot.lane.b32.xlu0 %v1449, 96
      %v2715 = vpop.permute.xlu0 %2714
      %2716 = vrot.lane.b32.xlu0 %v1451, 96
      %v2717 = vpop.permute.xlu0 %2716
      %2718 = vrot.lane.b32.xlu0 %v2038, 96
      %v2719 = vpop.permute.xlu0 %2718
      %2720 = vrot.lane.b32.xlu0 %v2040, 96
      %v2721 = vpop.permute.xlu0 %2720
      %2722 = vrot.lane.b32.xlu0 %v2042, 96
      %v2723 = vpop.permute.xlu0 %2722
      %2724 = vrot.lane.b32.xlu0 %v2629, 96
      %v2725 = vpop.permute.xlu0 %2724
      %2726 = vrot.lane.b32.xlu0 %v2631, 96
      %v2727 = vpop.permute.xlu0 %2726
      %2728 = vrot.lane.b32.xlu0 %v2633, 96
      %v2729 = vpop.permute.xlu0 %2728
      %v2778 = vadd.f32 %v2579, %v2635
      %v2779 = vadd.f32 %v2580, %v2637
      %v2780 = vadd.f32 %v2581, %v2639
      %v2781 = vadd.f32 %v2582, %v2641
      %v2782 = vadd.f32 %v2583, %v2643
      %v2783 = vadd.f32 %v2584, %v2645
      %v2784 = vadd.f32 %v2585, %v2647
      %v2785 = vadd.f32 %v2586, %v2649
      %v2786 = vadd.f32 %v2587, %v2651
      %v2787 = vadd.f32 %v2588, %v2653
      %v2788 = vadd.f32 %v2589, %v2655
      %v2789 = vadd.f32 %v2590, %v2657
      %v2790 = vadd.f32 %v2591, %v2659
      %v2791 = vadd.f32 %v2592, %v2661
      %v2792 = vadd.f32 %v2593, %v2663
      %v2793 = vadd.f32 %v2594, %v2665
      %v2794 = vadd.f32 %v2595, %v2667
      %v2795 = vadd.f32 %v2596, %v2669
      %v2796 = vadd.f32 %v2597, %v2671
      %v2797 = vadd.f32 %v2598, %v2673
      %v2798 = vadd.f32 %v2599, %v2675
      %v2799 = vadd.f32 %v2600, %v2677
      %v2800 = vadd.f32 %v2601, %v2679
      %v2801 = vadd.f32 %v2602, %v2681
      %v2802 = vadd.f32 %v2603, %v2683
      %v2803 = vadd.f32 %v2604, %v2685
      %v2804 = vadd.f32 %v2605, %v2687
      %v2805 = vadd.f32 %v2606, %v2689
      %v2806 = vadd.f32 %v2607, %v2691
      %v2807 = vadd.f32 %v2608, %v2693
      %v2808 = vadd.f32 %v2609, %v2695
      %v2809 = vadd.f32 %v2610, %v2697
      %v2810 = vadd.f32 %v2611, %v2699
      %v2811 = vadd.f32 %v2612, %v2701
      %v2812 = vadd.f32 %v2613, %v2703
      %v2813 = vadd.f32 %v2614, %v2705
      %v2814 = vadd.f32 %v2615, %v2707
      %v2815 = vadd.f32 %v2616, %v2709
      %v2816 = vadd.f32 %v2617, %v2711
      %v2817 = vadd.f32 %v2618, %v2713
      %v2818 = vadd.f32 %v2619, %v2715
      %v2819 = vadd.f32 %v2620, %v2717
      %v2820 = vadd.f32 %v2621, %v2719
      %v2821 = vadd.f32 %v2622, %v2721
      %v2822 = vadd.f32 %v2623, %v2723
      %v2823 = vadd.f32 %v2624, %v2725
      %v2824 = vadd.f32 %v2625, %v2727
      %v2825 = vadd.f32 %v2626, %v2729
      %v2826 = vld [vmem:[%s4] sm:$0x1]
      %v2828 = vperm.slane %v2826, 0
      %v2830 = vadd.f32 %v2778, %v2828
      %v2831 = vadd.f32 %v2779, %v2828
      %v2832 = vadd.f32 %v2780, %v2828
      %v2833 = vadd.f32 %v2781, %v2828
      %v2834 = vadd.f32 %v2782, %v2828
      %v2835 = vadd.f32 %v2783, %v2828
      %v2836 = vadd.f32 %v2784, %v2828
      %v2837 = vadd.f32 %v2785, %v2828
      %v2838 = vadd.f32 %v2786, %v2828
      %v2839 = vadd.f32 %v2787, %v2828
      %v2840 = vadd.f32 %v2788, %v2828
      %v2841 = vadd.f32 %v2789, %v2828
      %v2842 = vadd.f32 %v2790, %v2828
      %v2843 = vadd.f32 %v2791, %v2828
      %v2844 = vadd.f32 %v2792, %v2828
      %v2845 = vadd.f32 %v2793, %v2828
      %v2846 = vadd.f32 %v2794, %v2828
      %v2847 = vadd.f32 %v2795, %v2828
      %v2848 = vadd.f32 %v2796, %v2828
      %v2849 = vadd.f32 %v2797, %v2828
      %v2850 = vadd.f32 %v2798, %v2828
      %v2851 = vadd.f32 %v2799, %v2828
      %v2852 = vadd.f32 %v2800, %v2828
      %v2853 = vadd.f32 %v2801, %v2828
      %v2854 = vadd.f32 %v2802, %v2828
      %v2855 = vadd.f32 %v2803, %v2828
      %v2856 = vadd.f32 %v2804, %v2828
      %v2857 = vadd.f32 %v2805, %v2828
      %v2858 = vadd.f32 %v2806, %v2828
      %v2859 = vadd.f32 %v2807, %v2828
      %v2860 = vadd.f32 %v2808, %v2828
      %v2861 = vadd.f32 %v2809, %v2828
      %v2862 = vadd.f32 %v2810, %v2828
      %v2863 = vadd.f32 %v2811, %v2828
      %v2864 = vadd.f32 %v2812, %v2828
      %v2865 = vadd.f32 %v2813, %v2828
      %v2866 = vadd.f32 %v2814, %v2828
      %v2867 = vadd.f32 %v2815, %v2828
      %v2868 = vadd.f32 %v2816, %v2828
      %v2869 = vadd.f32 %v2817, %v2828
      %v2870 = vadd.f32 %v2818, %v2828
      %v2871 = vadd.f32 %v2819, %v2828
      %v2872 = vadd.f32 %v2820, %v2828
      %v2873 = vadd.f32 %v2821, %v2828
      %v2874 = vadd.f32 %v2822, %v2828
      %v2875 = vadd.f32 %v2823, %v2828
      %v2876 = vadd.f32 %v2824, %v2828
      %v2877 = vadd.f32 %v2825, %v2828
      %v2878 = vmax.f32 %v2830, 0.0
      %v2879 = vmax.f32 %v2831, 0.0
      %v2880 = vmax.f32 %v2832, 0.0
      %v2881 = vmax.f32 %v2833, 0.0
      %v2882 = vmax.f32 %v2834, 0.0
      %v2883 = vmax.f32 %v2835, 0.0
      %v2884 = vmax.f32 %v2836, 0.0
      %v2885 = vmax.f32 %v2837, 0.0
      %v2886 = vmax.f32 %v2838, 0.0
      %v2887 = vmax.f32 %v2839, 0.0
      %v2888 = vmax.f32 %v2840, 0.0
      %v2889 = vmax.f32 %v2841, 0.0
      %v2890 = vmax.f32 %v2842, 0.0
      %v2891 = vmax.f32 %v2843, 0.0
      %v2892 = vmax.f32 %v2844, 0.0
      %v2893 = vmax.f32 %v2845, 0.0
      %v2894 = vmax.f32 %v2846, 0.0
      %v2895 = vmax.f32 %v2847, 0.0
      %v2896 = vmax.f32 %v2848, 0.0
      %v2897 = vmax.f32 %v2849, 0.0
      %v2898 = vmax.f32 %v2850, 0.0
      %v2899 = vmax.f32 %v2851, 0.0
      %v2900 = vmax.f32 %v2852, 0.0
      %v2901 = vmax.f32 %v2853, 0.0
      %v2902 = vmax.f32 %v2854, 0.0
      %v2903 = vmax.f32 %v2855, 0.0
      %v2904 = vmax.f32 %v2856, 0.0
      %v2905 = vmax.f32 %v2857, 0.0
      %v2906 = vmax.f32 %v2858, 0.0
      %v2907 = vmax.f32 %v2859, 0.0
      %v2908 = vmax.f32 %v2860, 0.0
      %v2909 = vmax.f32 %v2861, 0.0
      %v2910 = vmax.f32 %v2862, 0.0
      %v2911 = vmax.f32 %v2863, 0.0
      %v2912 = vmax.f32 %v2864, 0.0
      %v2913 = vmax.f32 %v2865, 0.0
      %v2914 = vmax.f32 %v2866, 0.0
      %v2915 = vmax.f32 %v2867, 0.0
      %v2916 = vmax.f32 %v2868, 0.0
      %v2917 = vmax.f32 %v2869, 0.0
      %v2918 = vmax.f32 %v2870, 0.0
      %v2919 = vmax.f32 %v2871, 0.0
      %v2920 = vmax.f32 %v2872, 0.0
      %v2921 = vmax.f32 %v2873, 0.0
      %v2922 = vmax.f32 %v2874, 0.0
      %v2923 = vmax.f32 %v2875, 0.0
      %v2924 = vmax.f32 %v2876, 0.0
      %v2925 = vmax.f32 %v2877, 0.0
      %v2926 = vld [vmem:[%s5] sm:$0xf]
      %vm2975 = vcmask 1040384
      %v2976 = vrot.slane %v2878, 7
      %v2977 = vrot.slane %v2879, 7
      %v2978 = vsel %vm2975, %v2976, %v2977
      %v2979 = vrot.slane %v2880, 7
      %v2980 = vsel %vm2975, %v2977, %v2979
      %v2981 = vrot.slane %v2881, 7
      %v2982 = vsel %vm2975, %v2979, %v2981
      %v2983 = vrot.slane %v2882, 7
      %v2984 = vsel %vm2975, %v2981, %v2983
      %v2985 = vrot.slane %v2883, 7
      %v2986 = vsel %vm2975, %v2983, %v2985
      %v2987 = vrot.slane %v2884, 7
      %v2988 = vsel %vm2975, %v2985, %v2987
      %v2989 = vrot.slane %v2885, 7
      %v2990 = vsel %vm2975, %v2987, %v2989
      %v2991 = vrot.slane %v2886, 7
      %v2992 = vsel %vm2975, %v2989, %v2991
      %v2993 = vrot.slane %v2887, 7
      %v2994 = vsel %vm2975, %v2991, %v2993
      %v2995 = vrot.slane %v2888, 7
      %v2996 = vsel %vm2975, %v2993, %v2995
      %v2997 = vrot.slane %v2889, 7
      %v2998 = vsel %vm2975, %v2995, %v2997
      %v2999 = vrot.slane %v2890, 7
      %v3000 = vsel %vm2975, %v2997, %v2999
      %v3001 = vrot.slane %v2891, 7
      %v3002 = vsel %vm2975, %v2999, %v3001
      %v3003 = vrot.slane %v2892, 7
      %v3004 = vsel %vm2975, %v3001, %v3003
      %v3005 = vrot.slane %v2893, 7
      %v3006 = vsel %vm2975, %v3003, %v3005
      %v3007 = vrot.slane %v2894, 7
      %v3008 = vsel %vm2975, %v3005, %v3007
      %v3009 = vrot.slane %v2895, 7
      %v3010 = vsel %vm2975, %v3007, %v3009
      %v3011 = vrot.slane %v2896, 7
      %v3012 = vsel %vm2975, %v3009, %v3011
      %v3013 = vrot.slane %v2897, 7
      %v3014 = vsel %vm2975, %v3011, %v3013
      %v3015 = vrot.slane %v2898, 7
      %v3016 = vsel %vm2975, %v3013, %v3015
      %v3017 = vrot.slane %v2899, 7
      %v3018 = vsel %vm2975, %v3015, %v3017
      %v3019 = vrot.slane %v2900, 7
      %v3020 = vsel %vm2975, %v3017, %v3019
      %v3021 = vrot.slane %v2901, 7
      %v3022 = vsel %vm2975, %v3019, %v3021
      %v3023 = vrot.slane %v2902, 7
      %v3024 = vsel %vm2975, %v3021, %v3023
      %v3025 = vrot.slane %v2903, 7
      %v3026 = vsel %vm2975, %v3023, %v3025
      %v3027 = vrot.slane %v2904, 7
      %v3028 = vsel %vm2975, %v3025, %v3027
      %v3029 = vrot.slane %v2905, 7
      %v3030 = vsel %vm2975, %v3027, %v3029
      %v3031 = vrot.slane %v2906, 7
      %v3032 = vsel %vm2975, %v3029, %v3031
      %v3033 = vrot.slane %v2907, 7
      %v3034 = vsel %vm2975, %v3031, %v3033
      %v3035 = vrot.slane %v2908, 7
      %v3036 = vsel %vm2975, %v3033, %v3035
      %v3037 = vrot.slane %v2909, 7
      %v3038 = vsel %vm2975, %v3035, %v3037
      %v3039 = vrot.slane %v2910, 7
      %v3040 = vsel %vm2975, %v3037, %v3039
      %v3041 = vrot.slane %v2911, 7
      %v3042 = vsel %vm2975, %v3039, %v3041
      %v3043 = vrot.slane %v2912, 7
      %v3044 = vsel %vm2975, %v3041, %v3043
      %v3045 = vrot.slane %v2913, 7
      %v3046 = vsel %vm2975, %v3043, %v3045
      %v3047 = vrot.slane %v2914, 7
      %v3048 = vsel %vm2975, %v3045, %v3047
      %v3049 = vrot.slane %v2915, 7
      %v3050 = vsel %vm2975, %v3047, %v3049
      %v3051 = vrot.slane %v2916, 7
      %v3052 = vsel %vm2975, %v3049, %v3051
      %v3053 = vrot.slane %v2917, 7
      %v3054 = vsel %vm2975, %v3051, %v3053
      %v3055 = vrot.slane %v2918, 7
      %v3056 = vsel %vm2975, %v3053, %v3055
      %v3057 = vrot.slane %v2919, 7
      %v3058 = vsel %vm2975, %v3055, %v3057
      %v3059 = vrot.slane %v2920, 7
      %v3060 = vsel %vm2975, %v3057, %v3059
      %v3061 = vrot.slane %v2921, 7
      %v3062 = vsel %vm2975, %v3059, %v3061
      %v3063 = vrot.slane %v2922, 7
      %v3064 = vsel %vm2975, %v3061, %v3063
      %v3065 = vrot.slane %v2923, 7
      %v3066 = vsel %vm2975, %v3063, %v3065
      %v3067 = vrot.slane %v2924, 7
      %v3068 = vsel %vm2975, %v3065, %v3067
      %v3069 = vrot.slane %v2925, 7
      %v3070 = vsel %vm2975, %v3067, %v3069
      %v3071 = vsel %vm559, %v2978, 0
      %v3073 = vsel %vm559, %v2980, 0
      %v3075 = vsel %vm559, %v2982, 0
      %v3077 = vsel %vm559, %v2984, 0
      %v3079 = vsel %vm559, %v2986, 0
      %v3081 = vsel %vm559, %v2988, 0
      %v3083 = vsel %vm559, %v2990, 0
      %v3085 = vsel %vm559, %v2992, 0
      %v3087 = vsel %vm559, %v2994, 0
      %v3089 = vsel %vm559, %v2996, 0
      %v3091 = vsel %vm559, %v2998, 0
      %v3093 = vsel %vm559, %v3000, 0
      %v3095 = vsel %vm559, %v3002, 0
      %v3097 = vsel %vm559, %v3004, 0
      %v3099 = vsel %vm559, %v3006, 0
      %v3101 = vsel %vm559, %v3008, 0
      %v3103 = vsel %vm559, %v3010, 0
      %v3105 = vsel %vm559, %v3012, 0
      %v3107 = vsel %vm559, %v3014, 0
      %v3109 = vsel %vm559, %v3016, 0
      %v3111 = vsel %vm559, %v3018, 0
      %v3113 = vsel %vm559, %v3020, 0
      %v3115 = vsel %vm559, %v3022, 0
      %v3117 = vsel %vm559, %v3024, 0
      %v3119 = vsel %vm559, %v3026, 0
      %v3121 = vsel %vm559, %v3028, 0
      %v3123 = vsel %vm559, %v3030, 0
      %v3125 = vsel %vm559, %v3032, 0
      %v3127 = vsel %vm559, %v3034, 0
      %v3129 = vsel %vm559, %v3036, 0
      %v3131 = vsel %vm559, %v3038, 0
      %v3133 = vsel %vm559, %v3040, 0
      %v3135 = vsel %vm559, %v3042, 0
      %v3137 = vsel %vm559, %v3044, 0
      %v3139 = vsel %vm559, %v3046, 0
      %v3141 = vsel %vm559, %v3048, 0
      %v3143 = vsel %vm559, %v3050, 0
      %v3145 = vsel %vm559, %v3052, 0
      %v3147 = vsel %vm559, %v3054, 0
      %v3149 = vsel %vm559, %v3056, 0
      %v3151 = vsel %vm559, %v3058, 0
      %v3153 = vsel %vm559, %v3060, 0
      %v3155 = vsel %vm559, %v3062, 0
      %v3157 = vsel %vm559, %v3064, 0
      %v3159 = vsel %vm559, %v3066, 0
      %v3161 = vsel %vm559, %v3068, 0
      %v3163 = vsel %vm559, %v3070, 0
      %v3166 = vsel %vm836, %v2926, 0
      %3168 = vmatpush.msra.mxu0 0.0
      %3169 = vmatpush.msra.mxu0 0.0
      %3170 = vmatpush.msra.mxu0 0.0
      %3171 = vmatpush.msra.mxu0 0.0
      %3172 = vmatpush.msra.mxu0 0.0
      %3173 = vmatpush.msra.mxu0 0.0
      %3174 = vmatpush.msra.mxu0 0.0
      %3175 = vmatpush.msra.mxu0 0.0
      %3176 = vmatpush.msra.mxu0 0.0
      %3177 = vmatpush.msra.mxu0 0.0
      %3178 = vmatpush.msra.mxu0 0.0
      %3179 = vmatpush.msra.mxu0 0.0
      %3180 = vmatpush.msra.mxu0 0.0
      %3181 = vmatpush.msra.mxu0 0.0
      %3182 = vmatpush.msra.mxu0 0.0
      %3183 = vmatpush.msra.mxu0 %v3166
      %3184 = vmatmul.f32.gmra.mxu0 %v3071
      %v3185 = vpop.f32.mrf.mxu0
      %v3186 = vadd.f32 0.0, %v3185
      %3187 = vmatmul.f32.gmra.mxu0 %v3073
      %v3188 = vpop.f32.mrf.mxu0
      %v3189 = vadd.f32 0.0, %v3188
      %3190 = vmatmul.f32.gmra.mxu0 %v3075
      %v3191 = vpop.f32.mrf.mxu0
      %3192 = vmatmul.f32.gmra.mxu0 %v3077
      %v3193 = vpop.f32.mrf.mxu0
      %v3194 = vadd.f32 0.0, %v3193
      %3195 = vmatmul.f32.gmra.mxu0 %v3079
      %v3196 = vpop.f32.mrf.mxu0
      %v3197 = vadd.f32 0.0, %v3196
      %3198 = vmatmul.f32.gmra.mxu0 %v3081
      %v3199 = vpop.f32.mrf.mxu0
      %3200 = vmatmul.f32.gmra.mxu0 %v3083
      %v3201 = vpop.f32.mrf.mxu0
      %v3202 = vadd.f32 0.0, %v3201
      %3203 = vmatmul.f32.gmra.mxu0 %v3085
      %v3204 = vpop.f32.mrf.mxu0
      %v3205 = vadd.f32 0.0, %v3204
      %3206 = vmatmul.f32.gmra.mxu0 %v3087
      %v3207 = vpop.f32.mrf.mxu0
      %3208 = vmatmul.f32.gmra.mxu0 %v3089
      %v3209 = vpop.f32.mrf.mxu0
      %v3210 = vadd.f32 0.0, %v3209
      %3211 = vmatmul.f32.gmra.mxu0 %v3091
      %v3212 = vpop.f32.mrf.mxu0
      %v3213 = vadd.f32 0.0, %v3212
      %3214 = vmatmul.f32.gmra.mxu0 %v3093
      %v3215 = vpop.f32.mrf.mxu0
      %3216 = vmatmul.f32.gmra.mxu0 %v3095
      %v3217 = vpop.f32.mrf.mxu0
      %v3218 = vadd.f32 0.0, %v3217
      %3219 = vmatmul.f32.gmra.mxu0 %v3097
      %v3220 = vpop.f32.mrf.mxu0
      %v3221 = vadd.f32 0.0, %v3220
      %3222 = vmatmul.f32.gmra.mxu0 %v3099
      %v3223 = vpop.f32.mrf.mxu0
      %3224 = vmatmul.f32.gmra.mxu0 %v3101
      %v3225 = vpop.f32.mrf.mxu0
      %v3226 = vadd.f32 0.0, %v3225
      %3227 = vmatmul.f32.gmra.mxu0 %v3103
      %v3228 = vpop.f32.mrf.mxu0
      %v3229 = vadd.f32 0.0, %v3228
      %3230 = vmatmul.f32.gmra.mxu0 %v3105
      %v3231 = vpop.f32.mrf.mxu0
      %3232 = vmatmul.f32.gmra.mxu0 %v3107
      %v3233 = vpop.f32.mrf.mxu0
      %v3234 = vadd.f32 0.0, %v3233
      %3235 = vmatmul.f32.gmra.mxu0 %v3109
      %v3236 = vpop.f32.mrf.mxu0
      %v3237 = vadd.f32 0.0, %v3236
      %3238 = vmatmul.f32.gmra.mxu0 %v3111
      %v3239 = vpop.f32.mrf.mxu0
      %3240 = vmatmul.f32.gmra.mxu0 %v3113
      %v3241 = vpop.f32.mrf.mxu0
      %v3242 = vadd.f32 0.0, %v3241
      %3243 = vmatmul.f32.gmra.mxu0 %v3115
      %v3244 = vpop.f32.mrf.mxu0
      %v3245 = vadd.f32 0.0, %v3244
      %3246 = vmatmul.f32.gmra.mxu0 %v3117
      %v3247 = vpop.f32.mrf.mxu0
      %3248 = vmatmul.f32.gmra.mxu0 %v3119
      %v3249 = vpop.f32.mrf.mxu0
      %v3250 = vadd.f32 0.0, %v3249
      %3251 = vmatmul.f32.gmra.mxu0 %v3121
      %v3252 = vpop.f32.mrf.mxu0
      %v3253 = vadd.f32 0.0, %v3252
      %3254 = vmatmul.f32.gmra.mxu0 %v3123
      %v3255 = vpop.f32.mrf.mxu0
      %3256 = vmatmul.f32.gmra.mxu0 %v3125
      %v3257 = vpop.f32.mrf.mxu0
      %v3258 = vadd.f32 0.0, %v3257
      %3259 = vmatmul.f32.gmra.mxu0 %v3127
      %v3260 = vpop.f32.mrf.mxu0
      %v3261 = vadd.f32 0.0, %v3260
      %3262 = vmatmul.f32.gmra.mxu0 %v3129
      %v3263 = vpop.f32.mrf.mxu0
      %3264 = vmatmul.f32.gmra.mxu0 %v3131
      %v3265 = vpop.f32.mrf.mxu0
      %v3266 = vadd.f32 0.0, %v3265
      %3267 = vmatmul.f32.gmra.mxu0 %v3133
      %v3268 = vpop.f32.mrf.mxu0
      %v3269 = vadd.f32 0.0, %v3268
      %3270 = vmatmul.f32.gmra.mxu0 %v3135
      %v3271 = vpop.f32.mrf.mxu0
      %3272 = vmatmul.f32.gmra.mxu0 %v3137
      %v3273 = vpop.f32.mrf.mxu0
      %v3274 = vadd.f32 0.0, %v3273
      %3275 = vmatmul.f32.gmra.mxu0 %v3139
      %v3276 = vpop.f32.mrf.mxu0
      %v3277 = vadd.f32 0.0, %v3276
      %3278 = vmatmul.f32.gmra.mxu0 %v3141
      %v3279 = vpop.f32.mrf.mxu0
      %3280 = vmatmul.f32.gmra.mxu0 %v3143
      %v3281 = vpop.f32.mrf.mxu0
      %v3282 = vadd.f32 0.0, %v3281
      %3283 = vmatmul.f32.gmra.mxu0 %v3145
      %v3284 = vpop.f32.mrf.mxu0
      %v3285 = vadd.f32 0.0, %v3284
      %3286 = vmatmul.f32.gmra.mxu0 %v3147
      %v3287 = vpop.f32.mrf.mxu0
      %3288 = vmatmul.f32.gmra.mxu0 %v3149
      %v3289 = vpop.f32.mrf.mxu0
      %v3290 = vadd.f32 0.0, %v3289
      %3291 = vmatmul.f32.gmra.mxu0 %v3151
      %v3292 = vpop.f32.mrf.mxu0
      %v3293 = vadd.f32 0.0, %v3292
      %3294 = vmatmul.f32.gmra.mxu0 %v3153
      %v3295 = vpop.f32.mrf.mxu0
      %3296 = vmatmul.f32.gmra.mxu0 %v3155
      %v3297 = vpop.f32.mrf.mxu0
      %v3298 = vadd.f32 0.0, %v3297
      %3299 = vmatmul.f32.gmra.mxu0 %v3157
      %v3300 = vpop.f32.mrf.mxu0
      %v3301 = vadd.f32 0.0, %v3300
      %3302 = vmatmul.f32.gmra.mxu0 %v3159
      %v3303 = vpop.f32.mrf.mxu0
      %3304 = vmatmul.f32.gmra.mxu0 %v3161
      %v3305 = vpop.f32.mrf.mxu0
      %v3306 = vadd.f32 0.0, %v3305
      %3307 = vmatmul.f32.gmra.mxu0 %v3163
      %v3308 = vpop.f32.mrf.mxu0
      %v3309 = vadd.f32 0.0, %v3308
      %3310 = vdwg.mxu0
      %v3311 = vld [vmem:[%s6] sm:$0x1]
      %v3312 = vld [vmem:[%s273] sm:$0xff]
      %v3313 = vld [vmem:[%s273 + $0x8] sm:$0xff]
      %v3315 = vperm.slane %v3311, 0
      %v3317 = vadd.f32 %v3186, %v3315
      %v3318 = vadd.f32 %v3189, %v3315
      %v3319 = vadd.f32 %v3317, %v3312
      %v3320 = vadd.f32 %v3318, %v3313
      %v3321 = vmax.f32 %v3319, 0.0
      %v3322 = vmax.f32 %v3320, 0.0
      %3323 = vst.msk [vmem:[%s278] sm:$0xff] %vm317, %v3321
      %3324 = vst.msk [vmem:[%s278 + $0x8] sm:$0xff] %vm317, %v3322
      %v3325 = vld [vmem:[%s273 + $0x10] sm:$0xff]
      %v3326 = vld [vmem:[%s273 + $0x18] sm:$0xff]
      %v3327 = vadd.f32 %v3194, %v3315
      %v3328 = vadd.f32 %v3197, %v3315
      %v3329 = vadd.f32 %v3327, %v3325
      %v3330 = vadd.f32 %v3328, %v3326
      %v3331 = vmax.f32 %v3329, 0.0
      %v3332 = vmax.f32 %v3330, 0.0
      %3333 = vst.msk [vmem:[%s278 + $0x10] sm:$0xff] %vm317, %v3331
      %3334 = vst.msk [vmem:[%s278 + $0x18] sm:$0xff] %vm317, %v3332
      %v3335 = vld [vmem:[%s273 + $0x20] sm:$0xff]
      %v3336 = vld [vmem:[%s273 + $0x28] sm:$0xff]
      %v3337 = vadd.f32 %v3202, %v3315
      %v3338 = vadd.f32 %v3205, %v3315
      %v3339 = vadd.f32 %v3337, %v3335
      %v3340 = vadd.f32 %v3338, %v3336
      %v3341 = vmax.f32 %v3339, 0.0
      %v3342 = vmax.f32 %v3340, 0.0
      %3343 = vst.msk [vmem:[%s278 + $0x20] sm:$0xff] %vm317, %v3341
      %3344 = vst.msk [vmem:[%s278 + $0x28] sm:$0xff] %vm317, %v3342
      %v3345 = vld [vmem:[%s273 + $0x30] sm:$0xff]
      %v3346 = vld [vmem:[%s273 + $0x38] sm:$0xff]
      %v3347 = vadd.f32 %v3210, %v3315
      %v3348 = vadd.f32 %v3213, %v3315
      %v3349 = vadd.f32 %v3347, %v3345
      %v3350 = vadd.f32 %v3348, %v3346
      %v3351 = vmax.f32 %v3349, 0.0
      %v3352 = vmax.f32 %v3350, 0.0
      %3353 = vst.msk [vmem:[%s278 + $0x30] sm:$0xff] %vm317, %v3351
      %3354 = vst.msk [vmem:[%s278 + $0x38] sm:$0xff] %vm317, %v3352
      %v3355 = vld [vmem:[%s273 + $0x40] sm:$0xff]
      %v3356 = vld [vmem:[%s273 + $0x48] sm:$0xff]
      %v3357 = vadd.f32 %v3218, %v3315
      %v3358 = vadd.f32 %v3221, %v3315
      %v3359 = vadd.f32 %v3357, %v3355
      %v3360 = vadd.f32 %v3358, %v3356
      %v3361 = vmax.f32 %v3359, 0.0
      %v3362 = vmax.f32 %v3360, 0.0
      %3363 = vst.msk [vmem:[%s278 + $0x40] sm:$0xff] %vm317, %v3361
      %3364 = vst.msk [vmem:[%s278 + $0x48] sm:$0xff] %vm317, %v3362
      %v3365 = vld [vmem:[%s273 + $0x50] sm:$0xff]
      %v3366 = vld [vmem:[%s273 + $0x58] sm:$0xff]
      %v3367 = vadd.f32 %v3226, %v3315
      %v3368 = vadd.f32 %v3229, %v3315
      %v3369 = vadd.f32 %v3367, %v3365
      %v3370 = vadd.f32 %v3368, %v3366
      %v3371 = vmax.f32 %v3369, 0.0
      %v3372 = vmax.f32 %v3370, 0.0
      %3373 = vst.msk [vmem:[%s278 + $0x50] sm:$0xff] %vm317, %v3371
      %3374 = vst.msk [vmem:[%s278 + $0x58] sm:$0xff] %vm317, %v3372
      %v3375 = vld [vmem:[%s273 + $0x60] sm:$0xff]
      %v3376 = vld [vmem:[%s273 + $0x68] sm:$0xff]
      %v3377 = vadd.f32 %v3234, %v3315
      %v3378 = vadd.f32 %v3237, %v3315
      %v3379 = vadd.f32 %v3377, %v3375
      %v3380 = vadd.f32 %v3378, %v3376
      %v3381 = vmax.f32 %v3379, 0.0
      %v3382 = vmax.f32 %v3380, 0.0
      %3383 = vst.msk [vmem:[%s278 + $0x60] sm:$0xff] %vm317, %v3381
      %3384 = vst.msk [vmem:[%s278 + $0x68] sm:$0xff] %vm317, %v3382
      %v3385 = vld [vmem:[%s273 + $0x70] sm:$0xff]
      %v3386 = vld [vmem:[%s273 + $0x78] sm:$0xff]
      %v3387 = vadd.f32 %v3242, %v3315
      %v3388 = vadd.f32 %v3245, %v3315
      %v3389 = vadd.f32 %v3387, %v3385
      %v3390 = vadd.f32 %v3388, %v3386
      %v3391 = vmax.f32 %v3389, 0.0
      %v3392 = vmax.f32 %v3390, 0.0
      %3393 = vst.msk [vmem:[%s278 + $0x70] sm:$0xff] %vm317, %v3391
      %3394 = vst.msk [vmem:[%s278 + $0x78] sm:$0xff] %vm317, %v3392
      %v3395 = vld [vmem:[%s273 + $0x80] sm:$0xff]
      %v3396 = vld [vmem:[%s273 + $0x88] sm:$0xff]
      %v3397 = vadd.f32 %v3250, %v3315
      %v3398 = vadd.f32 %v3253, %v3315
      %v3399 = vadd.f32 %v3397, %v3395
      %v3400 = vadd.f32 %v3398, %v3396
      %v3401 = vmax.f32 %v3399, 0.0
      %v3402 = vmax.f32 %v3400, 0.0
      %3403 = vst.msk [vmem:[%s278 + $0x80] sm:$0xff] %vm317, %v3401
      %3404 = vst.msk [vmem:[%s278 + $0x88] sm:$0xff] %vm317, %v3402
      %v3405 = vld [vmem:[%s273 + $0x90] sm:$0xff]
      %v3406 = vld [vmem:[%s273 + $0x98] sm:$0xff]
      %v3407 = vadd.f32 %v3258, %v3315
      %v3408 = vadd.f32 %v3261, %v3315
      %v3409 = vadd.f32 %v3407, %v3405
      %v3410 = vadd.f32 %v3408, %v3406
      %v3411 = vmax.f32 %v3409, 0.0
      %v3412 = vmax.f32 %v3410, 0.0
      %3413 = vst.msk [vmem:[%s278 + $0x90] sm:$0xff] %vm317, %v3411
      %3414 = vst.msk [vmem:[%s278 + $0x98] sm:$0xff] %vm317, %v3412
      %v3415 = vld [vmem:[%s273 + $0xa0] sm:$0xff]
      %v3416 = vld [vmem:[%s273 + $0xa8] sm:$0xff]
      %v3417 = vadd.f32 %v3266, %v3315
      %v3418 = vadd.f32 %v3269, %v3315
      %v3419 = vadd.f32 %v3417, %v3415
      %v3420 = vadd.f32 %v3418, %v3416
      %v3421 = vmax.f32 %v3419, 0.0
      %v3422 = vmax.f32 %v3420, 0.0
      %3423 = vst.msk [vmem:[%s278 + $0xa0] sm:$0xff] %vm317, %v3421
      %3424 = vst.msk [vmem:[%s278 + $0xa8] sm:$0xff] %vm317, %v3422
      %v3425 = vld [vmem:[%s273 + $0xb0] sm:$0xff]
      %v3426 = vld [vmem:[%s273 + $0xb8] sm:$0xff]
      %v3427 = vadd.f32 %v3274, %v3315
      %v3428 = vadd.f32 %v3277, %v3315
      %v3429 = vadd.f32 %v3427, %v3425
      %v3430 = vadd.f32 %v3428, %v3426
      %v3431 = vmax.f32 %v3429, 0.0
      %v3432 = vmax.f32 %v3430, 0.0
      %3433 = vst.msk [vmem:[%s278 + $0xb0] sm:$0xff] %vm317, %v3431
      %3434 = vst.msk [vmem:[%s278 + $0xb8] sm:$0xff] %vm317, %v3432
      %v3435 = vld [vmem:[%s273 + $0xc0] sm:$0xff]
      %v3436 = vld [vmem:[%s273 + $0xc8] sm:$0xff]
      %v3437 = vadd.f32 %v3282, %v3315
      %v3438 = vadd.f32 %v3285, %v3315
      %v3439 = vadd.f32 %v3437, %v3435
      %v3440 = vadd.f32 %v3438, %v3436
      %v3441 = vmax.f32 %v3439, 0.0
      %v3442 = vmax.f32 %v3440, 0.0
      %3443 = vst.msk [vmem:[%s278 + $0xc0] sm:$0xff] %vm317, %v3441
      %3444 = vst.msk [vmem:[%s278 + $0xc8] sm:$0xff] %vm317, %v3442
      %v3445 = vld [vmem:[%s273 + $0xd0] sm:$0xff]
      %v3446 = vld [vmem:[%s273 + $0xd8] sm:$0xff]
      %v3447 = vadd.f32 %v3290, %v3315
      %v3448 = vadd.f32 %v3293, %v3315
      %v3449 = vadd.f32 %v3447, %v3445
      %v3450 = vadd.f32 %v3448, %v3446
      %v3451 = vmax.f32 %v3449, 0.0
      %v3452 = vmax.f32 %v3450, 0.0
      %3453 = vst.msk [vmem:[%s278 + $0xd0] sm:$0xff] %vm317, %v3451
      %3454 = vst.msk [vmem:[%s278 + $0xd8] sm:$0xff] %vm317, %v3452
      %v3455 = vld [vmem:[%s273 + $0xe0] sm:$0xff]
      %v3456 = vld [vmem:[%s273 + $0xe8] sm:$0xff]
      %v3457 = vadd.f32 %v3298, %v3315
      %v3458 = vadd.f32 %v3301, %v3315
      %v3459 = vadd.f32 %v3457, %v3455
      %v3460 = vadd.f32 %v3458, %v3456
      %v3461 = vmax.f32 %v3459, 0.0
      %v3462 = vmax.f32 %v3460, 0.0
      %3463 = vst.msk [vmem:[%s278 + $0xe0] sm:$0xff] %vm317, %v3461
      %3464 = vst.msk [vmem:[%s278 + $0xe8] sm:$0xff] %vm317, %v3462
      %v3465 = vld [vmem:[%s273 + $0xf0] sm:$0xff]
      %v3466 = vld [vmem:[%s273 + $0xf8] sm:$0xff]
      %v3467 = vadd.f32 %v3306, %v3315
      %v3468 = vadd.f32 %v3309, %v3315
      %v3469 = vadd.f32 %v3467, %v3465
      %v3470 = vadd.f32 %v3468, %v3466
      %v3471 = vmax.f32 %v3469, 0.0
      %v3472 = vmax.f32 %v3470, 0.0
      %3473 = vst.msk [vmem:[%s278 + $0xf0] sm:$0xff] %vm317, %v3471
      %3474 = vst.msk [vmem:[%s278 + $0xf8] sm:$0xff] %vm317, %v3472
      %p3475 = scmp.lt.s32.totalorder %s18, 1
      %s3476 = scalar_select %p3475, %s18, 1
      %s3477 = smul.addr %s3476, 32
      %s3478 = smul.addr %s3477, 8
      %s3479 = scalar_lea.vmem %s7, %s3478
      // Predicated region
      $region49: #{tpu_custom_call.1} parent=47 // pred_check
        %p3480 = pneg %p188
      $region50: #{tpu_custom_call.1} parent=47 // pred_check_branch
        %3482 = sbr.rel (%p3480) target = $region52
      $region51: #{tpu_custom_call.1} parent=47 // pred_region
        _
      $region52: #{tpu_custom_call.1} parent=47 // pred_fallthru
        _
    $region48: #{tpu_custom_call.1} parent=5 // pred_fallthru
      _
    %p3483 = scmp.le.s32.totalorder 2, %s13
    // Predicated region
    $region53: #{tpu_custom_call.1} parent=5 // pred_check
      %p3484 = pneg %p3483
    $region54: #{tpu_custom_call.1} parent=5 // pred_check_branch
      %3486 = sbr.rel (%p3484) target = $region56
    $region55: #{tpu_custom_call.1} parent=5 // pred_region
      %s3487 = ssub.s32 %s13, 2
      // Predicated region
      $region57: #{tpu_custom_call.1} parent=55 // pred_check
        %p3488 = pneg %p194
      $region58: #{tpu_custom_call.1} parent=55 // pred_check_branch
        %3490 = sbr.rel (%p3488) target = $region60
      $region59: #{tpu_custom_call.1} parent=55 // pred_region
        %p3491 = scmp.lt.s32.totalorder %s19, 1
        %s3492 = scalar_select %p3491, %s19, 1
        %s3493 = smul.addr %s3492, 32
        %s3494 = smul.addr %s3493, 8
        %s3495 = scalar_lea.vmem %s7, %s3494
      $region60: #{tpu_custom_call.1} parent=55 // pred_fallthru
        _
    $region56: #{tpu_custom_call.1} parent=5 // pred_fallthru
      _
  $region6: #{tpu_custom_call.1} parent=0 // loop_footer
    %s17 = sadd.s32 1, %s13
  $region7: #{tpu_custom_call.1} parent=0 // loop_footer_branch
    %12 = sbr.rel target = $region3
  $region8: #{tpu_custom_call.1} parent=0 // loop_exit
    _

</llo_original>
